<compile_context>
chip_gen: v7x
topology: tpu7x:2x2x1
jax: 0.10.0
libtpu: 0.0.40
codegen_flags: <defaults>
</compile_context>

<pallas_src>
import functools

import numpy as np
import jax
import jax.numpy as jnp
from jax.experimental import pallas as pl
from jax.experimental.pallas import tpu as pltpu

# ----------------------------- configuration --------------------------------
PATCH = 4            # patch-embed stride (like swin patch4)
WIN = 4              # window size (small analog of window7)
C0 = 16              # stage-0 channels  == low_level_channels
C1 = 32              # stage-1 channels  == high_level_channels
HEADS0 = 2
HEADS1 = 4
AUX_DIM_KEEP = 8     # small analog of aux_dim_keep=64
HIGH_OUT = 32        # small analog of the hardcoded 256 in high_level_proj
MLP_RATIO = 2
LANE = 128           # kernel outputs are padded to this lane width (dense vst)
MXU_DT = jnp.bfloat16  # MXU operand dtype (f32 accumulation); elementwise stays f32

BLOCK_PARAM_NAMES = (
    "ln1_g", "ln1_b", "qkv_w", "qkv_b", "rel_bias", "proj_w3", "proj_b",
    "ln2_g", "ln2_b", "fc1_w", "fc1_b", "fc2_w", "fc2_b",
)


# ------------------------- in-kernel building blocks -------------------------
def _ln(x, g, b, eps=1e-5):
    """LayerNorm on (M, C) f32 values; g/b are (1, C)."""
    mu = jnp.mean(x, axis=-1, keepdims=True)
    var = jnp.mean(jnp.square(x - mu), axis=-1, keepdims=True)
    return (x - mu) * jax.lax.rsqrt(var + eps) * g + b


def _mm(a, b):
    """MXU matmul: bf16 operands, f32 accumulation."""
    return jnp.dot(a.astype(MXU_DT), b.astype(MXU_DT),
                   preferred_element_type=jnp.float32)


def _window_attention(qkv, rel_bias, proj_w3, proj_b, *, nw, L, C, heads):
    """qkv: (nw*L, 3C) f32, window-contiguous tokens; rel_bias: (heads, L, L).

    Heads are stacked into the batch dim so scores / PV / output-proj are each
    ONE batched einsum over all windows & heads (no per-head matmuls, no
    cross-lane concat of head outputs).  Attention scale is folded into qkv_w.
    """
    dh = C // heads
    qkv3 = qkv.reshape(nw, L, 3 * C)

    def heads_to_batch(sec):          # sec: 0=q, 1=k, 2=v -> (heads*nw, L, dh)
        parts = [qkv3[:, :, sec * C + h * dh: sec * C + (h + 1) * dh]
                 for h in range(heads)]
        return jnp.concatenate(parts, axis=0)

    q = heads_to_batch(0)
    k = heads_to_batch(1)
    v = heads_to_batch(2)

    s = jnp.einsum("bld,bmd->blm", q.astype(MXU_DT), k.astype(MXU_DT),
                   preferred_element_type=jnp.float32)            # (heads*nw, L, L)
    bias = jnp.broadcast_to(rel_bias[:, None, :, :], (heads, nw, L, L))
    s = s + bias.reshape(heads * nw, L, L)
    s = s - jnp.max(s, axis=-1, keepdims=True)
    e = jnp.exp(s)
    p = e * pl.reciprocal(jnp.sum(e, axis=-1, keepdims=True), approx=True)
    o = jnp.einsum("blm,bmd->bld", p.astype(MXU_DT), v.astype(MXU_DT),
                   preferred_element_type=jnp.float32)            # (heads*nw, L, dh)

    # Output projection folded per head (proj_w3[h] = proj_w[h*dh:(h+1)*dh, :])
    # as one batched matmul + a sum over heads (avoids lane concatenation).
    o = o.reshape(heads, nw * L, dh)
    t = jnp.einsum("hmd,hdc->hmc", o.astype(MXU_DT), proj_w3,
                   preferred_element_type=jnp.float32)            # (heads, M, C)
    return jnp.sum(t, axis=0) + proj_b


def _swin_block(x, w, *, nw, L, heads):
    """One (non-shifted) swin block on window-ordered tokens x: (M, C) f32."""
    C = x.shape[-1]
    shortcut = x
    y = _ln(x, w["ln1_g"], w["ln1_b"])
    qkv = _mm(y, w["qkv_w"]) + w["qkv_b"]
    a = _window_attention(qkv, w["rel_bias"], w["proj_w3"], w["proj_b"],
                          nw=nw, L=L, C=C, heads=heads)
    x = shortcut + a
    y = _ln(x, w["ln2_g"], w["ln2_b"])
    # TODO(synk): timm Swin uses exact-erf GELU; tanh approximation kept here.
    h = jax.nn.gelu(_mm(y, w["fc1_w"]) + w["fc1_b"])
    h = _mm(h, w["fc2_w"]) + w["fc2_b"]
    return x + h


# ------------------------------- fused kernel --------------------------------
def _encoder_kernel(*refs, nw0, nw1, L, heads0, heads1):
    """Whole SwinEncoder forward for one image (grid axis = batch)."""
    it = iter(refs)
    patches_ref = next(it)
    pe_w = next(it)[...]
    pe_b = next(it)[...]
    pe_g = next(it)[...]
    pe_beta = next(it)[...]
    blk0 = {name: next(it)[...] for name in BLOCK_PARAM_NAMES}
    lp_w = next(it)[...]
    lp_b = next(it)[...]
    sel = next(it)[...]
    pm_g = next(it)[...]
    pm_b = next(it)[...]
    pm_w = next(it)[...]
    blk1 = {name: next(it)[...] for name in BLOCK_PARAM_NAMES}
    hp_w = next(it)[...]
    hp_b = next(it)[...]
    low_out_ref = next(it)
    high_out_ref = next(it)

    # --- stage 0: patch embed (4x4 conv as matmul) + LN + swin block 0 -------
    t = _mm(patches_ref[...], pe_w) + pe_b
    t = _ln(t, pe_g, pe_beta)
    t = _swin_block(t, blk0, nw=nw0, L=L, heads=heads0)         # (M0, C0) f32

    # low-level 1x1 proj: weight pre-padded to 128 output lanes -> dense store;
    # wrapper slices the first AUX_DIM_KEEP lanes.
    low_out_ref[...] = (_mm(t, lp_w) + lp_b).astype(low_out_ref.dtype)

    # --- patch merging on the VMEM-resident tokens ---------------------------
    # `sel` is a static 0/1 permutation: one MXU push gathers the 2x2
    # neighborhood members (row blocks ordered x0|x1|x2|x3), then a lane concat
    # rebuilds the (M1, 4*C0) merged tokens (Swin concat order).
    g = _mm(sel, t)                                             # (4*M1, C0)
    m1 = g.shape[0] // 4
    merged = jnp.concatenate([g[j * m1:(j + 1) * m1, :] for j in range(4)],
                             axis=-1)                           # (M1, 4*C0)

    y = _ln(merged, pm_g, pm_b)
    t1 = _mm(y, pm_w)                                           # Swin reduction: no bias
    t1 = _swin_block(t1, blk1, nw=nw1, L=L, heads=heads1)       # (M1, C1) f32

    # high-level 1x1 proj, also lane-padded to 128 for a dense store.
    high_out_ref[...] = (_mm(t1, hp_w) + hp_b).astype(high_out_ref.dtype)


def _encoder_fused(patches, params, sel, *, N, m0, m1, nw0, nw1):
    b0, b1 = params["block0"], params["block1"]
    inputs = ([patches,
               params["pe_w"], params["pe_b"], params["pe_ln_g"], params["pe_ln_b"]]
              + [b0[n] for n in BLOCK_PARAM_NAMES]
              + [params["lp_w"], params["lp_b"], sel,
                 params["pm_ln_g"], params["pm_ln_b"], params["pm_w"]]
              + [b1[n] for n in BLOCK_PARAM_NAMES]
              + [params["hp_w"], params["hp_b"]])

    def full_spec(p):                  # whole parameter resident in VMEM
        return pl.BlockSpec(p.shape, lambda n, _nd=p.ndim: (0,) * _nd)

    in_specs = ([pl.BlockSpec((m0, patches.shape[1]), lambda n: (n, 0))]
                + [full_spec(p) for p in inputs[1:]])
    out_specs = (pl.BlockSpec((m0, LANE), lambda n: (n, 0)),
                 pl.BlockSpec((m1, LANE), lambda n: (n, 0)))
    out_shape = (jax.ShapeDtypeStruct((N * m0, LANE), jnp.float32),
                 jax.ShapeDtypeStruct((N * m1, LANE), jnp.float32))

    kernel = functools.partial(_encoder_kernel, nw0=nw0, nw1=nw1,
                               L=WIN * WIN, heads0=HEADS0, heads1=HEADS1)
    return pl.pallas_call(
        kernel,
        grid=(N,),
        out_shape=out_shape,
        in_specs=in_specs,
        out_specs=out_specs,
        compiler_params=pltpu.CompilerParams(dimension_semantics=("parallel",)),
    )(*inputs)


# --------------------------- XLA-level layout glue ---------------------------
def _extract_patches(x_nhwc):
    """(N,H,W,Cin) -> (N, H/P, W/P, P*P*Cin) patch tokens (one-time, tiny)."""
    # TODO(synk): flattening order is (ph, pw, Cin); a torch Conv2d checkpoint
    # (Cout, Cin, kh, kw) would need a permutation when loading real weights.
    N, H, W, Cin = x_nhwc.shape
    ph, pw = H // PATCH, W // PATCH
    p = x_nhwc.reshape(N, ph, PATCH, pw, PATCH, Cin)
    p = p.transpose(0, 1, 3, 2, 4, 5)
    return p.reshape(N, ph, pw, PATCH * PATCH * Cin)


def _window(tokens):
    """(N,Hp,Wp,C) spatial -> (N*Hp*Wp, C) in window-partitioned token order."""
    N, Hp, Wp, C = tokens.shape
    t = tokens.reshape(N, Hp // WIN, WIN, Wp // WIN, WIN, C)
    t = t.transpose(0, 1, 3, 2, 4, 5)
    return t.reshape(N * Hp * Wp, C)


def _unwindow(tokens, N, Hp, Wp, C):
    """(N*Hp*Wp, C) window order -> (N,Hp,Wp,C) spatial (inverse of _window)."""
    t = tokens.reshape(N, Hp // WIN, Wp // WIN, WIN, WIN, C)
    t = t.transpose(0, 1, 3, 2, 4, 5)
    return t.reshape(N, Hp, Wp, C)


def _merge_select_matrix(ph, pw):
    """Static (4*M1, M0) 0/1 gather for Swin patch merging of ONE image:
    row j*M1 + m selects member j (order x0,x1,x2,x3) of merged token m from
    the window-ordered stage-0 tokens."""
    h2, w2 = ph // 2, pw // 2
    m0, m1 = ph * pw, h2 * w2
    wcols = pw // WIN
    sel = np.zeros((4 * m1, m0), np.float32)
    for j, (dy, dx) in enumerate(((0, 0), (1, 0), (0, 1), (1, 1))):
        for mi in range(h2):
            for mj in range(w2):
                y, x = 2 * mi + dy, 2 * mj + dx
                wr, r = divmod(y, WIN)
                wc, c = divmod(x, WIN)
                src = ((wr * wcols + wc) * WIN + r) * WIN + c
                sel[j * m1 + mi * w2 + mj, src] = 1.0
    return sel


# ----------------------------- SwinEncoder forward ---------------------------
def swin_encoder_forward(x, params, low_level=False):
    """x: NCHW float32; returns NCHW features like the PyTorch module."""
    if x.shape[1] == 1:                       # x.repeat(1, 3, 1, 1)
        x = jnp.tile(x, (1, 3, 1, 1))
    x_nhwc = jnp.transpose(x, (0, 2, 3, 1))
    N, H, W, _ = x_nhwc.shape
    ph, pw = H // PATCH, W // PATCH
    h2, w2 = ph // 2, pw // 2
    # One 4x4 window per image after merging -> raster order == window order.
    # TODO(synk): general h2 > WIN needs a stage-1 window reorder (and a
    # per-window sel matrix) here.
    assert ph % WIN == 0 and pw % WIN == 0 and h2 == WIN and w2 == WIN

    # One-time patch unfold + window ordering (tiny layout plumbing).
    # TODO(synk): at real 224x224 inputs fold this into the kernel BlockSpec.
    patches = _window(_extract_patches(x_nhwc))            # (N*ph*pw, 48)
    sel = jnp.asarray(_merge_select_matrix(ph, pw), dtype=MXU_DT)

    low_pad, high_pad = _encoder_fused(
        patches, params, sel, N=N, m0=ph * pw, m1=h2 * w2,
        nw0=(ph * pw) // (WIN * WIN), nw1=(h2 * w2) // (WIN * WIN))

    high = high_pad[:, :HIGH_OUT].reshape(N, h2, w2, HIGH_OUT)
    high = jnp.transpose(high, (0, 3, 1, 2))               # NCHW
    if low_level:
        low = _unwindow(low_pad[:, :AUX_DIM_KEEP], N, ph, pw, AUX_DIM_KEEP)
        low = jnp.transpose(low, (0, 3, 1, 2))              # NCHW
        return high, low
    return high


# ----------------------------- parameter init --------------------------------
def _dense(key, fan_in, fan_out):
    return jax.random.normal(key, (fan_in, fan_out), jnp.float32) * 0.02


def _init_block(key, dim, heads, win):
    ks = jax.random.split(key, 5)
    hid = dim * MLP_RATIO
    L = win * win
    dh = dim // heads
    scale = float(dh) ** -0.5
    qkv_w = _dense(ks[0], dim, 3 * dim)
    # Fold the attention scale into the q projection (removes per-element q*scale).
    qkv_w = qkv_w.at[:, :dim].multiply(scale)
    proj_w = _dense(ks[2], dim, dim)
    return dict(
        ln1_g=jnp.ones((1, dim), jnp.float32), ln1_b=jnp.zeros((1, dim), jnp.float32),
        qkv_w=qkv_w.astype(MXU_DT), qkv_b=jnp.zeros((1, 3 * dim), jnp.float32),
        rel_bias=jax.random.normal(ks[1], (heads, L, L), jnp.float32) * 0.02,
        # proj weight pre-split per head: proj_w3[h] = proj_w[h*dh:(h+1)*dh, :]
        proj_w3=proj_w.reshape(heads, dh, dim).astype(MXU_DT),
        proj_b=jnp.zeros((1, dim), jnp.float32),
        ln2_g=jnp.ones((1, dim), jnp.float32), ln2_b=jnp.zeros((1, dim), jnp.float32),
        fc1_w=_dense(ks[3], dim, hid).astype(MXU_DT), fc1_b=jnp.zeros((1, hid), jnp.float32),
        fc2_w=_dense(ks[4], hid, dim).astype(MXU_DT), fc2_b=jnp.zeros((1, dim), jnp.float32),
    )


def _pad_lanes(w):
    """Pad a (Cin, Cout) 1x1-conv weight to 128 output columns (dense stores)."""
    cin, cout = w.shape
    return jnp.pad(w, ((0, 0), (0, LANE - cout)))


def init_params(key):
    ks = jax.random.split(key, 6)
    hp_w = _dense(ks[4], C1, HIGH_OUT)
    lp_w = _dense(ks[5], C0, AUX_DIM_KEEP)
    return dict(
        pe_w=_dense(ks[0], 3 * PATCH * PATCH, C0).astype(MXU_DT),
        pe_b=jnp.zeros((1, C0), jnp.float32),
        pe_ln_g=jnp.ones((1, C0), jnp.float32),
        pe_ln_b=jnp.zeros((1, C0), jnp.float32),
        block0=_init_block(ks[1], C0, HEADS0, WIN),
        pm_ln_g=jnp.ones((1, 4 * C0), jnp.float32),
        pm_ln_b=jnp.zeros((1, 4 * C0), jnp.float32),
        pm_w=_dense(ks[2], 4 * C0, C1).astype(MXU_DT),   # Swin reduction is bias-free
        block1=_init_block(ks[3], C1, HEADS1, WIN),
        # the module's own 1x1 convs, output-padded to 128 lanes:
        hp_w=_pad_lanes(hp_w).astype(MXU_DT), hp_b=jnp.zeros((1, LANE), jnp.float32),
        lp_w=_pad_lanes(lp_w).astype(MXU_DT), lp_b=jnp.zeros((1, LANE), jnp.float32),
    )


# ----------------------------------- main ------------------------------------
if __name__ == "__main__":
    key = jax.random.PRNGKey(0)
    kx, kp = jax.random.split(key)
    x = jax.random.normal(kx, (2, 3, 32, 32), jnp.float32)   # NCHW like PyTorch
    params = init_params(kp)

    fwd_low = jax.jit(functools.partial(swin_encoder_forward, low_level=True))
    fwd = jax.jit(swin_encoder_forward)

    high, low = fwd_low(x, params)
    high_only = fwd(x[:, :1], params)            # 1-channel branch (repeat to 3)
    jax.block_until_ready((high, low, high_only))

    assert high.shape == (2, HIGH_OUT, 4, 4)
    assert low.shape == (2, AUX_DIM_KEEP, 8, 8)
    assert high_only.shape == (2, HIGH_OUT, 4, 4)
    assert bool(jnp.all(jnp.isfinite(high))) and bool(jnp.all(jnp.isfinite(low)))
    print("KERNEL_OK")
</pallas_src>

<mosaic_0001>
module attributes {stable_mosaic.version = 11 : i64} {
  func.func @_encoder_kernel(%arg0: i32, %arg1: memref<64x48xf32, #tpu.memory_space<vmem>>, %arg2: memref<48x16xbf16, #tpu.memory_space<vmem>>, %arg3: memref<1x16xf32, #tpu.memory_space<vmem>>, %arg4: memref<1x16xf32, #tpu.memory_space<vmem>>, %arg5: memref<1x16xf32, #tpu.memory_space<vmem>>, %arg6: memref<1x16xf32, #tpu.memory_space<vmem>>, %arg7: memref<1x16xf32, #tpu.memory_space<vmem>>, %arg8: memref<16x48xbf16, #tpu.memory_space<vmem>>, %arg9: memref<1x48xf32, #tpu.memory_space<vmem>>, %arg10: memref<2x16x16xf32, #tpu.memory_space<vmem>>, %arg11: memref<2x8x16xbf16, #tpu.memory_space<vmem>>, %arg12: memref<1x16xf32, #tpu.memory_space<vmem>>, %arg13: memref<1x16xf32, #tpu.memory_space<vmem>>, %arg14: memref<1x16xf32, #tpu.memory_space<vmem>>, %arg15: memref<16x32xbf16, #tpu.memory_space<vmem>>, %arg16: memref<1x32xf32, #tpu.memory_space<vmem>>, %arg17: memref<32x16xbf16, #tpu.memory_space<vmem>>, %arg18: memref<1x16xf32, #tpu.memory_space<vmem>>, %arg19: memref<16x128xbf16, #tpu.memory_space<vmem>>, %arg20: memref<1x128xf32, #tpu.memory_space<vmem>>, %arg21: memref<64x64xbf16, #tpu.memory_space<vmem>>, %arg22: memref<1x64xf32, #tpu.memory_space<vmem>>, %arg23: memref<1x64xf32, #tpu.memory_space<vmem>>, %arg24: memref<64x32xbf16, #tpu.memory_space<vmem>>, %arg25: memref<1x32xf32, #tpu.memory_space<vmem>>, %arg26: memref<1x32xf32, #tpu.memory_space<vmem>>, %arg27: memref<32x96xbf16, #tpu.memory_space<vmem>>, %arg28: memref<1x96xf32, #tpu.memory_space<vmem>>, %arg29: memref<4x16x16xf32, #tpu.memory_space<vmem>>, %arg30: memref<4x8x32xbf16, #tpu.memory_space<vmem>>, %arg31: memref<1x32xf32, #tpu.memory_space<vmem>>, %arg32: memref<1x32xf32, #tpu.memory_space<vmem>>, %arg33: memref<1x32xf32, #tpu.memory_space<vmem>>, %arg34: memref<32x64xbf16, #tpu.memory_space<vmem>>, %arg35: memref<1x64xf32, #tpu.memory_space<vmem>>, %arg36: memref<64x32xbf16, #tpu.memory_space<vmem>>, %arg37: memref<1x32xf32, #tpu.memory_space<vmem>>, %arg38: memref<32x128xbf16, #tpu.memory_space<vmem>>, %arg39: memref<1x128xf32, #tpu.memory_space<vmem>>, %arg40: memref<64x128xf32, #tpu.memory_space<vmem>>, %arg41: memref<16x128xf32, #tpu.memory_space<vmem>>) attributes {dimension_semantics = [#tpu.dimension_semantics<parallel>], iteration_bounds = array<i64: 2>, scalar_prefetch = 0 : i64, scratch_operands = 0 : i64, tpu.core_type = #tpu.core_type<tc>, window_params = [{transform_indices = @transform_0, window_bounds = array<i64: 64, 48>}, {pipeline_mode = #tpu.pipeline_mode<synchronous>, transform_indices = @transform_1, window_bounds = array<i64: 48, 16>}, {pipeline_mode = #tpu.pipeline_mode<synchronous>, transform_indices = @transform_2, window_bounds = array<i64: 1, 16>}, {pipeline_mode = #tpu.pipeline_mode<synchronous>, transform_indices = @transform_3, window_bounds = array<i64: 1, 16>}, {pipeline_mode = #tpu.pipeline_mode<synchronous>, transform_indices = @transform_4, window_bounds = array<i64: 1, 16>}, {pipeline_mode = #tpu.pipeline_mode<synchronous>, transform_indices = @transform_5, window_bounds = array<i64: 1, 16>}, {pipeline_mode = #tpu.pipeline_mode<synchronous>, transform_indices = @transform_6, window_bounds = array<i64: 1, 16>}, {pipeline_mode = #tpu.pipeline_mode<synchronous>, transform_indices = @transform_7, window_bounds = array<i64: 16, 48>}, {pipeline_mode = #tpu.pipeline_mode<synchronous>, transform_indices = @transform_8, window_bounds = array<i64: 1, 48>}, {pipeline_mode = #tpu.pipeline_mode<synchronous>, transform_indices = @transform_9, window_bounds = array<i64: 2, 16, 16>}, {pipeline_mode = #tpu.pipeline_mode<synchronous>, transform_indices = @transform_10, window_bounds = array<i64: 2, 8, 16>}, {pipeline_mode = #tpu.pipeline_mode<synchronous>, transform_indices = @transform_11, window_bounds = array<i64: 1, 16>}, {pipeline_mode = #tpu.pipeline_mode<synchronous>, transform_indices = @transform_12, window_bounds = array<i64: 1, 16>}, {pipeline_mode = #tpu.pipeline_mode<synchronous>, transform_indices = @transform_13, window_bounds = array<i64: 1, 16>}, {pipeline_mode = #tpu.pipeline_mode<synchronous>, transform_indices = @transform_14, window_bounds = array<i64: 16, 32>}, {pipeline_mode = #tpu.pipeline_mode<synchronous>, transform_indices = @transform_15, window_bounds = array<i64: 1, 32>}, {pipeline_mode = #tpu.pipeline_mode<synchronous>, transform_indices = @transform_16, window_bounds = array<i64: 32, 16>}, {pipeline_mode = #tpu.pipeline_mode<synchronous>, transform_indices = @transform_17, window_bounds = array<i64: 1, 16>}, {pipeline_mode = #tpu.pipeline_mode<synchronous>, transform_indices = @transform_18, window_bounds = array<i64: 16, 128>}, {pipeline_mode = #tpu.pipeline_mode<synchronous>, transform_indices = @transform_19, window_bounds = array<i64: 1, 128>}, {pipeline_mode = #tpu.pipeline_mode<synchronous>, transform_indices = @transform_20, window_bounds = array<i64: 64, 64>}, {pipeline_mode = #tpu.pipeline_mode<synchronous>, transform_indices = @transform_21, window_bounds = array<i64: 1, 64>}, {pipeline_mode = #tpu.pipeline_mode<synchronous>, transform_indices = @transform_22, window_bounds = array<i64: 1, 64>}, {pipeline_mode = #tpu.pipeline_mode<synchronous>, transform_indices = @transform_23, window_bounds = array<i64: 64, 32>}, {pipeline_mode = #tpu.pipeline_mode<synchronous>, transform_indices = @transform_24, window_bounds = array<i64: 1, 32>}, {pipeline_mode = #tpu.pipeline_mode<synchronous>, transform_indices = @transform_25, window_bounds = array<i64: 1, 32>}, {pipeline_mode = #tpu.pipeline_mode<synchronous>, transform_indices = @transform_26, window_bounds = array<i64: 32, 96>}, {pipeline_mode = #tpu.pipeline_mode<synchronous>, transform_indices = @transform_27, window_bounds = array<i64: 1, 96>}, {pipeline_mode = #tpu.pipeline_mode<synchronous>, transform_indices = @transform_28, window_bounds = array<i64: 4, 16, 16>}, {pipeline_mode = #tpu.pipeline_mode<synchronous>, transform_indices = @transform_29, window_bounds = array<i64: 4, 8, 32>}, {pipeline_mode = #tpu.pipeline_mode<synchronous>, transform_indices = @transform_30, window_bounds = array<i64: 1, 32>}, {pipeline_mode = #tpu.pipeline_mode<synchronous>, transform_indices = @transform_31, window_bounds = array<i64: 1, 32>}, {pipeline_mode = #tpu.pipeline_mode<synchronous>, transform_indices = @transform_32, window_bounds = array<i64: 1, 32>}, {pipeline_mode = #tpu.pipeline_mode<synchronous>, transform_indices = @transform_33, window_bounds = array<i64: 32, 64>}, {pipeline_mode = #tpu.pipeline_mode<synchronous>, transform_indices = @transform_34, window_bounds = array<i64: 1, 64>}, {pipeline_mode = #tpu.pipeline_mode<synchronous>, transform_indices = @transform_35, window_bounds = array<i64: 64, 32>}, {pipeline_mode = #tpu.pipeline_mode<synchronous>, transform_indices = @transform_36, window_bounds = array<i64: 1, 32>}, {pipeline_mode = #tpu.pipeline_mode<synchronous>, transform_indices = @transform_37, window_bounds = array<i64: 32, 128>}, {pipeline_mode = #tpu.pipeline_mode<synchronous>, transform_indices = @transform_38, window_bounds = array<i64: 1, 128>}, {transform_indices = @transform_39, window_bounds = array<i64: 64, 128>}, {transform_indices = @transform_40, window_bounds = array<i64: 16, 128>}]} {
    %c0 = arith.constant 0 : index
    %c0_0 = arith.constant 0 : index
    %0 = vector.load %arg2[%c0, %c0_0] : memref<48x16xbf16, #tpu.memory_space<vmem>>, vector<48x16xbf16>
    %c0_1 = arith.constant 0 : index
    %c0_2 = arith.constant 0 : index
    %1 = vector.load %arg3[%c0_1, %c0_2] : memref<1x16xf32, #tpu.memory_space<vmem>>, vector<1x16xf32>
    %c0_3 = arith.constant 0 : index
    %c0_4 = arith.constant 0 : index
    %2 = vector.load %arg4[%c0_3, %c0_4] : memref<1x16xf32, #tpu.memory_space<vmem>>, vector<1x16xf32>
    %c0_5 = arith.constant 0 : index
    %c0_6 = arith.constant 0 : index
    %3 = vector.load %arg5[%c0_5, %c0_6] : memref<1x16xf32, #tpu.memory_space<vmem>>, vector<1x16xf32>
    %c0_7 = arith.constant 0 : index
    %c0_8 = arith.constant 0 : index
    %4 = vector.load %arg6[%c0_7, %c0_8] : memref<1x16xf32, #tpu.memory_space<vmem>>, vector<1x16xf32>
    %c0_9 = arith.constant 0 : index
    %c0_10 = arith.constant 0 : index
    %5 = vector.load %arg7[%c0_9, %c0_10] : memref<1x16xf32, #tpu.memory_space<vmem>>, vector<1x16xf32>
    %c0_11 = arith.constant 0 : index
    %c0_12 = arith.constant 0 : index
    %6 = vector.load %arg8[%c0_11, %c0_12] : memref<16x48xbf16, #tpu.memory_space<vmem>>, vector<16x48xbf16>
    %c0_13 = arith.constant 0 : index
    %c0_14 = arith.constant 0 : index
    %7 = vector.load %arg9[%c0_13, %c0_14] : memref<1x48xf32, #tpu.memory_space<vmem>>, vector<1x48xf32>
    %c0_15 = arith.constant 0 : index
    %c0_16 = arith.constant 0 : index
    %c0_17 = arith.constant 0 : index
    %8 = vector.load %arg10[%c0_15, %c0_16, %c0_17] : memref<2x16x16xf32, #tpu.memory_space<vmem>>, vector<2x16x16xf32>
    %c0_18 = arith.constant 0 : index
    %c0_19 = arith.constant 0 : index
    %c0_20 = arith.constant 0 : index
    %9 = vector.load %arg11[%c0_18, %c0_19, %c0_20] : memref<2x8x16xbf16, #tpu.memory_space<vmem>>, vector<2x8x16xbf16>
    %c0_21 = arith.constant 0 : index
    %c0_22 = arith.constant 0 : index
    %10 = vector.load %arg12[%c0_21, %c0_22] : memref<1x16xf32, #tpu.memory_space<vmem>>, vector<1x16xf32>
    %c0_23 = arith.constant 0 : index
    %c0_24 = arith.constant 0 : index
    %11 = vector.load %arg13[%c0_23, %c0_24] : memref<1x16xf32, #tpu.memory_space<vmem>>, vector<1x16xf32>
    %c0_25 = arith.constant 0 : index
    %c0_26 = arith.constant 0 : index
    %12 = vector.load %arg14[%c0_25, %c0_26] : memref<1x16xf32, #tpu.memory_space<vmem>>, vector<1x16xf32>
    %c0_27 = arith.constant 0 : index
    %c0_28 = arith.constant 0 : index
    %13 = vector.load %arg15[%c0_27, %c0_28] : memref<16x32xbf16, #tpu.memory_space<vmem>>, vector<16x32xbf16>
    %c0_29 = arith.constant 0 : index
    %c0_30 = arith.constant 0 : index
    %14 = vector.load %arg16[%c0_29, %c0_30] : memref<1x32xf32, #tpu.memory_space<vmem>>, vector<1x32xf32>
    %c0_31 = arith.constant 0 : index
    %c0_32 = arith.constant 0 : index
    %15 = vector.load %arg17[%c0_31, %c0_32] : memref<32x16xbf16, #tpu.memory_space<vmem>>, vector<32x16xbf16>
    %c0_33 = arith.constant 0 : index
    %c0_34 = arith.constant 0 : index
    %16 = vector.load %arg18[%c0_33, %c0_34] : memref<1x16xf32, #tpu.memory_space<vmem>>, vector<1x16xf32>
    %c0_35 = arith.constant 0 : index
    %c0_36 = arith.constant 0 : index
    %17 = vector.load %arg19[%c0_35, %c0_36] : memref<16x128xbf16, #tpu.memory_space<vmem>>, vector<16x128xbf16>
    %c0_37 = arith.constant 0 : index
    %c0_38 = arith.constant 0 : index
    %18 = vector.load %arg20[%c0_37, %c0_38] : memref<1x128xf32, #tpu.memory_space<vmem>>, vector<1x128xf32>
    %c0_39 = arith.constant 0 : index
    %c0_40 = arith.constant 0 : index
    %19 = vector.load %arg21[%c0_39, %c0_40] : memref<64x64xbf16, #tpu.memory_space<vmem>>, vector<64x64xbf16>
    %c0_41 = arith.constant 0 : index
    %c0_42 = arith.constant 0 : index
    %20 = vector.load %arg22[%c0_41, %c0_42] : memref<1x64xf32, #tpu.memory_space<vmem>>, vector<1x64xf32>
    %c0_43 = arith.constant 0 : index
    %c0_44 = arith.constant 0 : index
    %21 = vector.load %arg23[%c0_43, %c0_44] : memref<1x64xf32, #tpu.memory_space<vmem>>, vector<1x64xf32>
    %c0_45 = arith.constant 0 : index
    %c0_46 = arith.constant 0 : index
    %22 = vector.load %arg24[%c0_45, %c0_46] : memref<64x32xbf16, #tpu.memory_space<vmem>>, vector<64x32xbf16>
    %c0_47 = arith.constant 0 : index
    %c0_48 = arith.constant 0 : index
    %23 = vector.load %arg25[%c0_47, %c0_48] : memref<1x32xf32, #tpu.memory_space<vmem>>, vector<1x32xf32>
    %c0_49 = arith.constant 0 : index
    %c0_50 = arith.constant 0 : index
    %24 = vector.load %arg26[%c0_49, %c0_50] : memref<1x32xf32, #tpu.memory_space<vmem>>, vector<1x32xf32>
    %c0_51 = arith.constant 0 : index
    %c0_52 = arith.constant 0 : index
    %25 = vector.load %arg27[%c0_51, %c0_52] : memref<32x96xbf16, #tpu.memory_space<vmem>>, vector<32x96xbf16>
    %c0_53 = arith.constant 0 : index
    %c0_54 = arith.constant 0 : index
    %26 = vector.load %arg28[%c0_53, %c0_54] : memref<1x96xf32, #tpu.memory_space<vmem>>, vector<1x96xf32>
    %c0_55 = arith.constant 0 : index
    %c0_56 = arith.constant 0 : index
    %c0_57 = arith.constant 0 : index
    %27 = vector.load %arg29[%c0_55, %c0_56, %c0_57] : memref<4x16x16xf32, #tpu.memory_space<vmem>>, vector<4x16x16xf32>
    %c0_58 = arith.constant 0 : index
    %c0_59 = arith.constant 0 : index
    %c0_60 = arith.constant 0 : index
    %28 = vector.load %arg30[%c0_58, %c0_59, %c0_60] : memref<4x8x32xbf16, #tpu.memory_space<vmem>>, vector<4x8x32xbf16>
    %c0_61 = arith.constant 0 : index
    %c0_62 = arith.constant 0 : index
    %29 = vector.load %arg31[%c0_61, %c0_62] : memref<1x32xf32, #tpu.memory_space<vmem>>, vector<1x32xf32>
    %c0_63 = arith.constant 0 : index
    %c0_64 = arith.constant 0 : index
    %30 = vector.load %arg32[%c0_63, %c0_64] : memref<1x32xf32, #tpu.memory_space<vmem>>, vector<1x32xf32>
    %c0_65 = arith.constant 0 : index
    %c0_66 = arith.constant 0 : index
    %31 = vector.load %arg33[%c0_65, %c0_66] : memref<1x32xf32, #tpu.memory_space<vmem>>, vector<1x32xf32>
    %c0_67 = arith.constant 0 : index
    %c0_68 = arith.constant 0 : index
    %32 = vector.load %arg34[%c0_67, %c0_68] : memref<32x64xbf16, #tpu.memory_space<vmem>>, vector<32x64xbf16>
    %c0_69 = arith.constant 0 : index
    %c0_70 = arith.constant 0 : index
    %33 = vector.load %arg35[%c0_69, %c0_70] : memref<1x64xf32, #tpu.memory_space<vmem>>, vector<1x64xf32>
    %c0_71 = arith.constant 0 : index
    %c0_72 = arith.constant 0 : index
    %34 = vector.load %arg36[%c0_71, %c0_72] : memref<64x32xbf16, #tpu.memory_space<vmem>>, vector<64x32xbf16>
    %c0_73 = arith.constant 0 : index
    %c0_74 = arith.constant 0 : index
    %35 = vector.load %arg37[%c0_73, %c0_74] : memref<1x32xf32, #tpu.memory_space<vmem>>, vector<1x32xf32>
    %c0_75 = arith.constant 0 : index
    %c0_76 = arith.constant 0 : index
    %36 = vector.load %arg38[%c0_75, %c0_76] : memref<32x128xbf16, #tpu.memory_space<vmem>>, vector<32x128xbf16>
    %c0_77 = arith.constant 0 : index
    %c0_78 = arith.constant 0 : index
    %37 = vector.load %arg39[%c0_77, %c0_78] : memref<1x128xf32, #tpu.memory_space<vmem>>, vector<1x128xf32>
    %c0_79 = arith.constant 0 : index
    %c0_80 = arith.constant 0 : index
    %38 = vector.load %arg1[%c0_79, %c0_80] : memref<64x48xf32, #tpu.memory_space<vmem>>, vector<64x48xf32>
    %39 = arith.truncf %38 : vector<64x48xf32> to vector<64x48xbf16>
    %cst = arith.constant dense<0.000000e+00> : vector<64x16xf32>
    %40 = tpu.matmul %39, %0, %cst {dimension_numbers = #tpu.dot_dimension_numbers<[1], [0], [0], [1], [0, 0, 1, 1], [], []>} : vector<64x48xbf16>, vector<48x16xbf16>, vector<64x16xf32> -> vector<64x16xf32>
    %41 = vector.broadcast %1 : vector<1x16xf32> to vector<64x16xf32>
    %42 = arith.addf %40, %41 : vector<64x16xf32>
    %cst_81 = arith.constant dense<0.000000e+00> : vector<64xf32>
    %43 = vector.multi_reduction <add>, %42, %cst_81 [1] : vector<64x16xf32> to vector<64xf32>
    %44 = vector.shape_cast %43 : vector<64xf32> to vector<64x1xf32>
    %cst_82 = arith.constant 1.600000e+01 : f32
    %45 = vector.broadcast %cst_82 : f32 to vector<64x1xf32>
    %46 = arith.divf %44, %45 : vector<64x1xf32>
    %47 = vector.broadcast %46 : vector<64x1xf32> to vector<64x16xf32>
    %48 = arith.subf %42, %47 : vector<64x16xf32>
    %49 = arith.mulf %48, %48 : vector<64x16xf32>
    %cst_83 = arith.constant dense<0.000000e+00> : vector<64xf32>
    %50 = vector.multi_reduction <add>, %49, %cst_83 [1] : vector<64x16xf32> to vector<64xf32>
    %51 = vector.shape_cast %50 : vector<64xf32> to vector<64x1xf32>
    %cst_84 = arith.constant 1.600000e+01 : f32
    %52 = vector.broadcast %cst_84 : f32 to vector<64x1xf32>
    %53 = arith.divf %51, %52 : vector<64x1xf32>
    %54 = vector.broadcast %46 : vector<64x1xf32> to vector<64x16xf32>
    %55 = arith.subf %42, %54 : vector<64x16xf32>
    %cst_85 = arith.constant 9.99999974E-6 : f32
    %56 = vector.broadcast %cst_85 : f32 to vector<64x1xf32>
    %57 = arith.addf %53, %56 : vector<64x1xf32>
    %58 = math.rsqrt %57 : vector<64x1xf32>
    %59 = vector.broadcast %58 : vector<64x1xf32> to vector<64x16xf32>
    %60 = arith.mulf %55, %59 : vector<64x16xf32>
    %61 = vector.broadcast %2 : vector<1x16xf32> to vector<64x16xf32>
    %62 = arith.mulf %60, %61 : vector<64x16xf32>
    %63 = vector.broadcast %3 : vector<1x16xf32> to vector<64x16xf32>
    %64 = arith.addf %62, %63 : vector<64x16xf32>
    %cst_86 = arith.constant dense<0.000000e+00> : vector<64xf32>
    %65 = vector.multi_reduction <add>, %64, %cst_86 [1] : vector<64x16xf32> to vector<64xf32>
    %66 = vector.shape_cast %65 : vector<64xf32> to vector<64x1xf32>
    %cst_87 = arith.constant 1.600000e+01 : f32
    %67 = vector.broadcast %cst_87 : f32 to vector<64x1xf32>
    %68 = arith.divf %66, %67 : vector<64x1xf32>
    %69 = vector.broadcast %68 : vector<64x1xf32> to vector<64x16xf32>
    %70 = arith.subf %64, %69 : vector<64x16xf32>
    %71 = arith.mulf %70, %70 : vector<64x16xf32>
    %cst_88 = arith.constant dense<0.000000e+00> : vector<64xf32>
    %72 = vector.multi_reduction <add>, %71, %cst_88 [1] : vector<64x16xf32> to vector<64xf32>
    %73 = vector.shape_cast %72 : vector<64xf32> to vector<64x1xf32>
    %cst_89 = arith.constant 1.600000e+01 : f32
    %74 = vector.broadcast %cst_89 : f32 to vector<64x1xf32>
    %75 = arith.divf %73, %74 : vector<64x1xf32>
    %76 = vector.broadcast %68 : vector<64x1xf32> to vector<64x16xf32>
    %77 = arith.subf %64, %76 : vector<64x16xf32>
    %cst_90 = arith.constant 9.99999974E-6 : f32
    %78 = vector.broadcast %cst_90 : f32 to vector<64x1xf32>
    %79 = arith.addf %75, %78 : vector<64x1xf32>
    %80 = math.rsqrt %79 : vector<64x1xf32>
    %81 = vector.broadcast %80 : vector<64x1xf32> to vector<64x16xf32>
    %82 = arith.mulf %77, %81 : vector<64x16xf32>
    %83 = vector.broadcast %4 : vector<1x16xf32> to vector<64x16xf32>
    %84 = arith.mulf %82, %83 : vector<64x16xf32>
    %85 = vector.broadcast %5 : vector<1x16xf32> to vector<64x16xf32>
    %86 = arith.addf %84, %85 : vector<64x16xf32>
    %87 = arith.truncf %86 : vector<64x16xf32> to vector<64x16xbf16>
    %cst_91 = arith.constant dense<0.000000e+00> : vector<64x48xf32>
    %88 = tpu.matmul %87, %6, %cst_91 {dimension_numbers = #tpu.dot_dimension_numbers<[1], [0], [0], [1], [0, 0, 1, 1], [], []>} : vector<64x16xbf16>, vector<16x48xbf16>, vector<64x48xf32> -> vector<64x48xf32>
    %89 = vector.broadcast %7 : vector<1x48xf32> to vector<64x48xf32>
    %90 = arith.addf %88, %89 : vector<64x48xf32>
    %91 = vector.shape_cast %90 : vector<64x48xf32> to vector<4x16x48xf32>
    %92 = vector.extract_strided_slice %91 {offsets = [0, 0, 0], sizes = [4, 16, 8], strides = [1, 1, 1]} : vector<4x16x48xf32> to vector<4x16x8xf32>
    %93 = vector.extract_strided_slice %91 {offsets = [0, 0, 8], sizes = [4, 16, 8], strides = [1, 1, 1]} : vector<4x16x48xf32> to vector<4x16x8xf32>
    %94 = tpu.concatenate %92, %93 in 0 : vector<4x16x8xf32>, vector<4x16x8xf32> -> vector<8x16x8xf32>
    %95 = vector.extract_strided_slice %91 {offsets = [0, 0, 16], sizes = [4, 16, 8], strides = [1, 1, 1]} : vector<4x16x48xf32> to vector<4x16x8xf32>
    %96 = vector.extract_strided_slice %91 {offsets = [0, 0, 24], sizes = [4, 16, 8], strides = [1, 1, 1]} : vector<4x16x48xf32> to vector<4x16x8xf32>
    %97 = tpu.concatenate %95, %96 in 0 : vector<4x16x8xf32>, vector<4x16x8xf32> -> vector<8x16x8xf32>
    %98 = vector.extract_strided_slice %91 {offsets = [0, 0, 32], sizes = [4, 16, 8], strides = [1, 1, 1]} : vector<4x16x48xf32> to vector<4x16x8xf32>
    %99 = vector.extract_strided_slice %91 {offsets = [0, 0, 40], sizes = [4, 16, 8], strides = [1, 1, 1]} : vector<4x16x48xf32> to vector<4x16x8xf32>
    %100 = tpu.concatenate %98, %99 in 0 : vector<4x16x8xf32>, vector<4x16x8xf32> -> vector<8x16x8xf32>
    %101 = arith.truncf %94 : vector<8x16x8xf32> to vector<8x16x8xbf16>
    %102 = arith.truncf %97 : vector<8x16x8xf32> to vector<8x16x8xbf16>
    "tpu.trace_start"() <{level = 10 : i32, message = "bld,bmd->blm"}> : () -> ()
    %cst_92 = arith.constant dense<0.000000e+00> : vector<8x16x16xf32>
    %103 = tpu.matmul %101, %102, %cst_92 {dimension_numbers = #tpu.dot_dimension_numbers<[2], [2], [1], [1], [0, 0, 0, 1, 1, 1], [0], [0]>} : vector<8x16x8xbf16>, vector<8x16x8xbf16>, vector<8x16x16xf32> -> vector<8x16x16xf32>
    "tpu.trace_stop"() : () -> ()
    %104 = vector.shape_cast %8 : vector<2x16x16xf32> to vector<2x1x16x16xf32>
    %105 = vector.shape_cast %104 : vector<2x1x16x16xf32> to vector<2x1x16x16xf32>
    %106 = vector.broadcast %105 : vector<2x1x16x16xf32> to vector<2x4x16x16xf32>
    %107 = vector.shape_cast %106 : vector<2x4x16x16xf32> to vector<8x16x16xf32>
    %108 = arith.addf %103, %107 : vector<8x16x16xf32>
    %cst_93 = arith.constant dense<0xFF800000> : vector<8x16xf32>
    %109 = vector.multi_reduction <maximumf>, %108, %cst_93 [2] : vector<8x16x16xf32> to vector<8x16xf32>
    %110 = vector.shape_cast %109 : vector<8x16xf32> to vector<8x16x1xf32>
    %111 = vector.broadcast %110 : vector<8x16x1xf32> to vector<8x16x16xf32>
    %112 = arith.subf %108, %111 : vector<8x16x16xf32>
    %113 = math.exp %112 : vector<8x16x16xf32>
    %cst_94 = arith.constant dense<0.000000e+00> : vector<8x16xf32>
    %114 = vector.multi_reduction <add>, %113, %cst_94 [2] : vector<8x16x16xf32> to vector<8x16xf32>
    %115 = vector.shape_cast %114 : vector<8x16xf32> to vector<8x16x1xf32>
    %116 = tpu.reciprocal %115 {approx = true} : vector<8x16x1xf32> -> vector<8x16x1xf32>
    %117 = vector.broadcast %116 : vector<8x16x1xf32> to vector<8x16x16xf32>
    %118 = arith.mulf %113, %117 : vector<8x16x16xf32>
    %119 = arith.truncf %118 : vector<8x16x16xf32> to vector<8x16x16xbf16>
    %120 = arith.truncf %100 : vector<8x16x8xf32> to vector<8x16x8xbf16>
    "tpu.trace_start"() <{level = 10 : i32, message = "blm,bmd->bld"}> : () -> ()
    %cst_95 = arith.constant dense<0.000000e+00> : vector<8x16x8xf32>
    %121 = tpu.matmul %119, %120, %cst_95 {dimension_numbers = #tpu.dot_dimension_numbers<[2], [1], [1], [2], [0, 0, 0, 1, 1, 2], [0], [0]>} : vector<8x16x16xbf16>, vector<8x16x8xbf16>, vector<8x16x8xf32> -> vector<8x16x8xf32>
    "tpu.trace_stop"() : () -> ()
    %122 = vector.shape_cast %121 : vector<8x16x8xf32> to vector<2x64x8xf32>
    %123 = arith.truncf %122 : vector<2x64x8xf32> to vector<2x64x8xbf16>
    "tpu.trace_start"() <{level = 10 : i32, message = "hmd,hdc->hmc"}> : () -> ()
    %cst_96 = arith.constant dense<0.000000e+00> : vector<2x64x16xf32>
    %124 = tpu.matmul %123, %9, %cst_96 {dimension_numbers = #tpu.dot_dimension_numbers<[2], [1], [1], [2], [0, 0, 0, 1, 1, 2], [0], [0]>} : vector<2x64x8xbf16>, vector<2x8x16xbf16>, vector<2x64x16xf32> -> vector<2x64x16xf32>
    "tpu.trace_stop"() : () -> ()
    %cst_97 = arith.constant dense<0.000000e+00> : vector<64x16xf32>
    %125 = vector.multi_reduction <add>, %124, %cst_97 [0] : vector<2x64x16xf32> to vector<64x16xf32>
    %126 = vector.broadcast %10 : vector<1x16xf32> to vector<64x16xf32>
    %127 = arith.addf %125, %126 : vector<64x16xf32>
    %128 = arith.addf %64, %127 : vector<64x16xf32>
    %cst_98 = arith.constant dense<0.000000e+00> : vector<64xf32>
    %129 = vector.multi_reduction <add>, %128, %cst_98 [1] : vector<64x16xf32> to vector<64xf32>
    %130 = vector.shape_cast %129 : vector<64xf32> to vector<64x1xf32>
    %cst_99 = arith.constant 1.600000e+01 : f32
    %131 = vector.broadcast %cst_99 : f32 to vector<64x1xf32>
    %132 = arith.divf %130, %131 : vector<64x1xf32>
    %133 = vector.broadcast %132 : vector<64x1xf32> to vector<64x16xf32>
    %134 = arith.subf %128, %133 : vector<64x16xf32>
    %135 = arith.mulf %134, %134 : vector<64x16xf32>
    %cst_100 = arith.constant dense<0.000000e+00> : vector<64xf32>
    %136 = vector.multi_reduction <add>, %135, %cst_100 [1] : vector<64x16xf32> to vector<64xf32>
    %137 = vector.shape_cast %136 : vector<64xf32> to vector<64x1xf32>
    %cst_101 = arith.constant 1.600000e+01 : f32
    %138 = vector.broadcast %cst_101 : f32 to vector<64x1xf32>
    %139 = arith.divf %137, %138 : vector<64x1xf32>
    %140 = vector.broadcast %132 : vector<64x1xf32> to vector<64x16xf32>
    %141 = arith.subf %128, %140 : vector<64x16xf32>
    %cst_102 = arith.constant 9.99999974E-6 : f32
    %142 = vector.broadcast %cst_102 : f32 to vector<64x1xf32>
    %143 = arith.addf %139, %142 : vector<64x1xf32>
    %144 = math.rsqrt %143 : vector<64x1xf32>
    %145 = vector.broadcast %144 : vector<64x1xf32> to vector<64x16xf32>
    %146 = arith.mulf %141, %145 : vector<64x16xf32>
    %147 = vector.broadcast %11 : vector<1x16xf32> to vector<64x16xf32>
    %148 = arith.mulf %146, %147 : vector<64x16xf32>
    %149 = vector.broadcast %12 : vector<1x16xf32> to vector<64x16xf32>
    %150 = arith.addf %148, %149 : vector<64x16xf32>
    %151 = arith.truncf %150 : vector<64x16xf32> to vector<64x16xbf16>
    %cst_103 = arith.constant dense<0.000000e+00> : vector<64x32xf32>
    %152 = tpu.matmul %151, %13, %cst_103 {dimension_numbers = #tpu.dot_dimension_numbers<[1], [0], [0], [1], [0, 0, 1, 1], [], []>} : vector<64x16xbf16>, vector<16x32xbf16>, vector<64x32xf32> -> vector<64x32xf32>
    %153 = vector.broadcast %14 : vector<1x32xf32> to vector<64x32xf32>
    %154 = arith.addf %152, %153 : vector<64x32xf32>
    %155 = arith.mulf %154, %154 : vector<64x32xf32>
    %156 = arith.mulf %154, %155 : vector<64x32xf32>
    %cst_104 = arith.constant 4.471500e-02 : f32
    %157 = vector.broadcast %cst_104 : f32 to vector<64x32xf32>
    %158 = arith.mulf %157, %156 : vector<64x32xf32>
    %159 = arith.addf %154, %158 : vector<64x32xf32>
    %cst_105 = arith.constant 0.797884583 : f32
    %160 = vector.broadcast %cst_105 : f32 to vector<64x32xf32>
    %161 = arith.mulf %160, %159 : vector<64x32xf32>
    %162 = math.tanh %161 : vector<64x32xf32>
    %cst_106 = arith.constant 1.000000e+00 : f32
    %163 = vector.broadcast %cst_106 : f32 to vector<64x32xf32>
    %164 = arith.addf %163, %162 : vector<64x32xf32>
    %cst_107 = arith.constant 5.000000e-01 : f32
    %165 = vector.broadcast %cst_107 : f32 to vector<64x32xf32>
    %166 = arith.mulf %165, %164 : vector<64x32xf32>
    %167 = arith.mulf %154, %166 : vector<64x32xf32>
    %168 = arith.truncf %167 : vector<64x32xf32> to vector<64x32xbf16>
    %cst_108 = arith.constant dense<0.000000e+00> : vector<64x16xf32>
    %169 = tpu.matmul %168, %15, %cst_108 {dimension_numbers = #tpu.dot_dimension_numbers<[1], [0], [0], [1], [0, 0, 1, 1], [], []>} : vector<64x32xbf16>, vector<32x16xbf16>, vector<64x16xf32> -> vector<64x16xf32>
    %170 = vector.broadcast %16 : vector<1x16xf32> to vector<64x16xf32>
    %171 = arith.addf %169, %170 : vector<64x16xf32>
    %172 = arith.addf %128, %171 : vector<64x16xf32>
    %173 = arith.truncf %172 : vector<64x16xf32> to vector<64x16xbf16>
    %cst_109 = arith.constant dense<0.000000e+00> : vector<64x128xf32>
    %174 = tpu.matmul %173, %17, %cst_109 {dimension_numbers = #tpu.dot_dimension_numbers<[1], [0], [0], [1], [0, 0, 1, 1], [], []>} : vector<64x16xbf16>, vector<16x128xbf16>, vector<64x128xf32> -> vector<64x128xf32>
    %175 = vector.broadcast %18 : vector<1x128xf32> to vector<64x128xf32>
    %176 = arith.addf %174, %175 : vector<64x128xf32>
    %c0_110 = arith.constant 0 : index
    %c0_111 = arith.constant 0 : index
    %177 = vector.load %arg40[%c0_110, %c0_111] : memref<64x128xf32, #tpu.memory_space<vmem>>, vector<64x128xf32>
    tpu.vector_store %arg40[%c0_110, %c0_111], %176 {strides = array<i32>} : memref<64x128xf32, #tpu.memory_space<vmem>>, vector<64x128xf32>,
    %178 = arith.truncf %172 : vector<64x16xf32> to vector<64x16xbf16>
    %cst_112 = arith.constant dense<0.000000e+00> : vector<64x16xf32>
    %179 = tpu.matmul %19, %178, %cst_112 {dimension_numbers = #tpu.dot_dimension_numbers<[1], [0], [0], [1], [0, 0, 1, 1], [], []>} : vector<64x64xbf16>, vector<64x16xbf16>, vector<64x16xf32> -> vector<64x16xf32>
    %180 = vector.extract_strided_slice %179 {offsets = [0, 0], sizes = [16, 16], strides = [1, 1]} : vector<64x16xf32> to vector<16x16xf32>
    %181 = vector.extract_strided_slice %179 {offsets = [16, 0], sizes = [16, 16], strides = [1, 1]} : vector<64x16xf32> to vector<16x16xf32>
    %182 = vector.extract_strided_slice %179 {offsets = [32, 0], sizes = [16, 16], strides = [1, 1]} : vector<64x16xf32> to vector<16x16xf32>
    %183 = vector.extract_strided_slice %179 {offsets = [48, 0], sizes = [16, 16], strides = [1, 1]} : vector<64x16xf32> to vector<16x16xf32>
    %184 = tpu.concatenate %180, %181, %182, %183 in 1 : vector<16x16xf32>, vector<16x16xf32>, vector<16x16xf32>, vector<16x16xf32> -> vector<16x64xf32>
    %cst_113 = arith.constant dense<0.000000e+00> : vector<16xf32>
    %185 = vector.multi_reduction <add>, %184, %cst_113 [1] : vector<16x64xf32> to vector<16xf32>
    %186 = vector.shape_cast %185 : vector<16xf32> to vector<16x1xf32>
    %cst_114 = arith.constant 6.400000e+01 : f32
    %187 = vector.broadcast %cst_114 : f32 to vector<16x1xf32>
    %188 = arith.divf %186, %187 : vector<16x1xf32>
    %189 = vector.broadcast %188 : vector<16x1xf32> to vector<16x64xf32>
    %190 = arith.subf %184, %189 : vector<16x64xf32>
    %191 = arith.mulf %190, %190 : vector<16x64xf32>
    %cst_115 = arith.constant dense<0.000000e+00> : vector<16xf32>
    %192 = vector.multi_reduction <add>, %191, %cst_115 [1] : vector<16x64xf32> to vector<16xf32>
    %193 = vector.shape_cast %192 : vector<16xf32> to vector<16x1xf32>
    %cst_116 = arith.constant 6.400000e+01 : f32
    %194 = vector.broadcast %cst_116 : f32 to vector<16x1xf32>
    %195 = arith.divf %193, %194 : vector<16x1xf32>
    %196 = vector.broadcast %188 : vector<16x1xf32> to vector<16x64xf32>
    %197 = arith.subf %184, %196 : vector<16x64xf32>
    %cst_117 = arith.constant 9.99999974E-6 : f32
    %198 = vector.broadcast %cst_117 : f32 to vector<16x1xf32>
    %199 = arith.addf %195, %198 : vector<16x1xf32>
    %200 = math.rsqrt %199 : vector<16x1xf32>
    %201 = vector.broadcast %200 : vector<16x1xf32> to vector<16x64xf32>
    %202 = arith.mulf %197, %201 : vector<16x64xf32>
    %203 = vector.broadcast %20 : vector<1x64xf32> to vector<16x64xf32>
    %204 = arith.mulf %202, %203 : vector<16x64xf32>
    %205 = vector.broadcast %21 : vector<1x64xf32> to vector<16x64xf32>
    %206 = arith.addf %204, %205 : vector<16x64xf32>
    %207 = arith.truncf %206 : vector<16x64xf32> to vector<16x64xbf16>
    %cst_118 = arith.constant dense<0.000000e+00> : vector<16x32xf32>
    %208 = tpu.matmul %207, %22, %cst_118 {dimension_numbers = #tpu.dot_dimension_numbers<[1], [0], [0], [1], [0, 0, 1, 1], [], []>} : vector<16x64xbf16>, vector<64x32xbf16>, vector<16x32xf32> -> vector<16x32xf32>
    %cst_119 = arith.constant dense<0.000000e+00> : vector<16xf32>
    %209 = vector.multi_reduction <add>, %208, %cst_119 [1] : vector<16x32xf32> to vector<16xf32>
    %210 = vector.shape_cast %209 : vector<16xf32> to vector<16x1xf32>
    %cst_120 = arith.constant 3.200000e+01 : f32
    %211 = vector.broadcast %cst_120 : f32 to vector<16x1xf32>
    %212 = arith.divf %210, %211 : vector<16x1xf32>
    %213 = vector.broadcast %212 : vector<16x1xf32> to vector<16x32xf32>
    %214 = arith.subf %208, %213 : vector<16x32xf32>
    %215 = arith.mulf %214, %214 : vector<16x32xf32>
    %cst_121 = arith.constant dense<0.000000e+00> : vector<16xf32>
    %216 = vector.multi_reduction <add>, %215, %cst_121 [1] : vector<16x32xf32> to vector<16xf32>
    %217 = vector.shape_cast %216 : vector<16xf32> to vector<16x1xf32>
    %cst_122 = arith.constant 3.200000e+01 : f32
    %218 = vector.broadcast %cst_122 : f32 to vector<16x1xf32>
    %219 = arith.divf %217, %218 : vector<16x1xf32>
    %220 = vector.broadcast %212 : vector<16x1xf32> to vector<16x32xf32>
    %221 = arith.subf %208, %220 : vector<16x32xf32>
    %cst_123 = arith.constant 9.99999974E-6 : f32
    %222 = vector.broadcast %cst_123 : f32 to vector<16x1xf32>
    %223 = arith.addf %219, %222 : vector<16x1xf32>
    %224 = math.rsqrt %223 : vector<16x1xf32>
    %225 = vector.broadcast %224 : vector<16x1xf32> to vector<16x32xf32>
    %226 = arith.mulf %221, %225 : vector<16x32xf32>
    %227 = vector.broadcast %23 : vector<1x32xf32> to vector<16x32xf32>
    %228 = arith.mulf %226, %227 : vector<16x32xf32>
    %229 = vector.broadcast %24 : vector<1x32xf32> to vector<16x32xf32>
    %230 = arith.addf %228, %229 : vector<16x32xf32>
    %231 = arith.truncf %230 : vector<16x32xf32> to vector<16x32xbf16>
    %cst_124 = arith.constant dense<0.000000e+00> : vector<16x96xf32>
    %232 = tpu.matmul %231, %25, %cst_124 {dimension_numbers = #tpu.dot_dimension_numbers<[1], [0], [0], [1], [0, 0, 1, 1], [], []>} : vector<16x32xbf16>, vector<32x96xbf16>, vector<16x96xf32> -> vector<16x96xf32>
    %233 = vector.broadcast %26 : vector<1x96xf32> to vector<16x96xf32>
    %234 = arith.addf %232, %233 : vector<16x96xf32>
    %235 = vector.shape_cast %234 : vector<16x96xf32> to vector<1x16x96xf32>
    %236 = vector.extract_strided_slice %235 {offsets = [0, 0, 0], sizes = [1, 16, 8], strides = [1, 1, 1]} : vector<1x16x96xf32> to vector<1x16x8xf32>
    %237 = vector.extract_strided_slice %235 {offsets = [0, 0, 8], sizes = [1, 16, 8], strides = [1, 1, 1]} : vector<1x16x96xf32> to vector<1x16x8xf32>
    %238 = vector.extract_strided_slice %235 {offsets = [0, 0, 16], sizes = [1, 16, 8], strides = [1, 1, 1]} : vector<1x16x96xf32> to vector<1x16x8xf32>
    %239 = vector.extract_strided_slice %235 {offsets = [0, 0, 24], sizes = [1, 16, 8], strides = [1, 1, 1]} : vector<1x16x96xf32> to vector<1x16x8xf32>
    %240 = tpu.concatenate %236, %237, %238, %239 in 0 : vector<1x16x8xf32>, vector<1x16x8xf32>, vector<1x16x8xf32>, vector<1x16x8xf32> -> vector<4x16x8xf32>
    %241 = vector.extract_strided_slice %235 {offsets = [0, 0, 32], sizes = [1, 16, 8], strides = [1, 1, 1]} : vector<1x16x96xf32> to vector<1x16x8xf32>
    %242 = vector.extract_strided_slice %235 {offsets = [0, 0, 40], sizes = [1, 16, 8], strides = [1, 1, 1]} : vector<1x16x96xf32> to vector<1x16x8xf32>
    %243 = vector.extract_strided_slice %235 {offsets = [0, 0, 48], sizes = [1, 16, 8], strides = [1, 1, 1]} : vector<1x16x96xf32> to vector<1x16x8xf32>
    %244 = vector.extract_strided_slice %235 {offsets = [0, 0, 56], sizes = [1, 16, 8], strides = [1, 1, 1]} : vector<1x16x96xf32> to vector<1x16x8xf32>
    %245 = tpu.concatenate %241, %242, %243, %244 in 0 : vector<1x16x8xf32>, vector<1x16x8xf32>, vector<1x16x8xf32>, vector<1x16x8xf32> -> vector<4x16x8xf32>
    %246 = vector.extract_strided_slice %235 {offsets = [0, 0, 64], sizes = [1, 16, 8], strides = [1, 1, 1]} : vector<1x16x96xf32> to vector<1x16x8xf32>
    %247 = vector.extract_strided_slice %235 {offsets = [0, 0, 72], sizes = [1, 16, 8], strides = [1, 1, 1]} : vector<1x16x96xf32> to vector<1x16x8xf32>
    %248 = vector.extract_strided_slice %235 {offsets = [0, 0, 80], sizes = [1, 16, 8], strides = [1, 1, 1]} : vector<1x16x96xf32> to vector<1x16x8xf32>
    %249 = vector.extract_strided_slice %235 {offsets = [0, 0, 88], sizes = [1, 16, 8], strides = [1, 1, 1]} : vector<1x16x96xf32> to vector<1x16x8xf32>
    %250 = tpu.concatenate %246, %247, %248, %249 in 0 : vector<1x16x8xf32>, vector<1x16x8xf32>, vector<1x16x8xf32>, vector<1x16x8xf32> -> vector<4x16x8xf32>
    %251 = arith.truncf %240 : vector<4x16x8xf32> to vector<4x16x8xbf16>
    %252 = arith.truncf %245 : vector<4x16x8xf32> to vector<4x16x8xbf16>
    "tpu.trace_start"() <{level = 10 : i32, message = "bld,bmd->blm"}> : () -> ()
    %cst_125 = arith.constant dense<0.000000e+00> : vector<4x16x16xf32>
    %253 = tpu.matmul %251, %252, %cst_125 {dimension_numbers = #tpu.dot_dimension_numbers<[2], [2], [1], [1], [0, 0, 0, 1, 1, 1], [0], [0]>} : vector<4x16x8xbf16>, vector<4x16x8xbf16>, vector<4x16x16xf32> -> vector<4x16x16xf32>
    "tpu.trace_stop"() : () -> ()
    %254 = vector.shape_cast %27 : vector<4x16x16xf32> to vector<4x1x16x16xf32>
    %255 = vector.shape_cast %254 : vector<4x1x16x16xf32> to vector<4x16x16xf32>
    %256 = arith.addf %253, %255 : vector<4x16x16xf32>
    %cst_126 = arith.constant dense<0xFF800000> : vector<4x16xf32>
    %257 = vector.multi_reduction <maximumf>, %256, %cst_126 [2] : vector<4x16x16xf32> to vector<4x16xf32>
    %258 = vector.shape_cast %257 : vector<4x16xf32> to vector<4x16x1xf32>
    %259 = vector.broadcast %258 : vector<4x16x1xf32> to vector<4x16x16xf32>
    %260 = arith.subf %256, %259 : vector<4x16x16xf32>
    %261 = math.exp %260 : vector<4x16x16xf32>
    %cst_127 = arith.constant dense<0.000000e+00> : vector<4x16xf32>
    %262 = vector.multi_reduction <add>, %261, %cst_127 [2] : vector<4x16x16xf32> to vector<4x16xf32>
    %263 = vector.shape_cast %262 : vector<4x16xf32> to vector<4x16x1xf32>
    %264 = tpu.reciprocal %263 {approx = true} : vector<4x16x1xf32> -> vector<4x16x1xf32>
    %265 = vector.broadcast %264 : vector<4x16x1xf32> to vector<4x16x16xf32>
    %266 = arith.mulf %261, %265 : vector<4x16x16xf32>
    %267 = arith.truncf %266 : vector<4x16x16xf32> to vector<4x16x16xbf16>
    %268 = arith.truncf %250 : vector<4x16x8xf32> to vector<4x16x8xbf16>
    "tpu.trace_start"() <{level = 10 : i32, message = "blm,bmd->bld"}> : () -> ()
    %cst_128 = arith.constant dense<0.000000e+00> : vector<4x16x8xf32>
    %269 = tpu.matmul %267, %268, %cst_128 {dimension_numbers = #tpu.dot_dimension_numbers<[2], [1], [1], [2], [0, 0, 0, 1, 1, 2], [0], [0]>} : vector<4x16x16xbf16>, vector<4x16x8xbf16>, vector<4x16x8xf32> -> vector<4x16x8xf32>
    "tpu.trace_stop"() : () -> ()
    %270 = arith.truncf %269 : vector<4x16x8xf32> to vector<4x16x8xbf16>
    "tpu.trace_start"() <{level = 10 : i32, message = "hmd,hdc->hmc"}> : () -> ()
    %cst_129 = arith.constant dense<0.000000e+00> : vector<4x16x32xf32>
    %271 = tpu.matmul %270, %28, %cst_129 {dimension_numbers = #tpu.dot_dimension_numbers<[2], [1], [1], [2], [0, 0, 0, 1, 1, 2], [0], [0]>} : vector<4x16x8xbf16>, vector<4x8x32xbf16>, vector<4x16x32xf32> -> vector<4x16x32xf32>
    "tpu.trace_stop"() : () -> ()
    %cst_130 = arith.constant dense<0.000000e+00> : vector<16x32xf32>
    %272 = vector.multi_reduction <add>, %271, %cst_130 [0] : vector<4x16x32xf32> to vector<16x32xf32>
    %273 = vector.broadcast %29 : vector<1x32xf32> to vector<16x32xf32>
    %274 = arith.addf %272, %273 : vector<16x32xf32>
    %275 = arith.addf %208, %274 : vector<16x32xf32>
    %cst_131 = arith.constant dense<0.000000e+00> : vector<16xf32>
    %276 = vector.multi_reduction <add>, %275, %cst_131 [1] : vector<16x32xf32> to vector<16xf32>
    %277 = vector.shape_cast %276 : vector<16xf32> to vector<16x1xf32>
    %cst_132 = arith.constant 3.200000e+01 : f32
    %278 = vector.broadcast %cst_132 : f32 to vector<16x1xf32>
    %279 = arith.divf %277, %278 : vector<16x1xf32>
    %280 = vector.broadcast %279 : vector<16x1xf32> to vector<16x32xf32>
    %281 = arith.subf %275, %280 : vector<16x32xf32>
    %282 = arith.mulf %281, %281 : vector<16x32xf32>
    %cst_133 = arith.constant dense<0.000000e+00> : vector<16xf32>
    %283 = vector.multi_reduction <add>, %282, %cst_133 [1] : vector<16x32xf32> to vector<16xf32>
    %284 = vector.shape_cast %283 : vector<16xf32> to vector<16x1xf32>
    %cst_134 = arith.constant 3.200000e+01 : f32
    %285 = vector.broadcast %cst_134 : f32 to vector<16x1xf32>
    %286 = arith.divf %284, %285 : vector<16x1xf32>
    %287 = vector.broadcast %279 : vector<16x1xf32> to vector<16x32xf32>
    %288 = arith.subf %275, %287 : vector<16x32xf32>
    %cst_135 = arith.constant 9.99999974E-6 : f32
    %289 = vector.broadcast %cst_135 : f32 to vector<16x1xf32>
    %290 = arith.addf %286, %289 : vector<16x1xf32>
    %291 = math.rsqrt %290 : vector<16x1xf32>
    %292 = vector.broadcast %291 : vector<16x1xf32> to vector<16x32xf32>
    %293 = arith.mulf %288, %292 : vector<16x32xf32>
    %294 = vector.broadcast %30 : vector<1x32xf32> to vector<16x32xf32>
    %295 = arith.mulf %293, %294 : vector<16x32xf32>
    %296 = vector.broadcast %31 : vector<1x32xf32> to vector<16x32xf32>
    %297 = arith.addf %295, %296 : vector<16x32xf32>
    %298 = arith.truncf %297 : vector<16x32xf32> to vector<16x32xbf16>
    %cst_136 = arith.constant dense<0.000000e+00> : vector<16x64xf32>
    %299 = tpu.matmul %298, %32, %cst_136 {dimension_numbers = #tpu.dot_dimension_numbers<[1], [0], [0], [1], [0, 0, 1, 1], [], []>} : vector<16x32xbf16>, vector<32x64xbf16>, vector<16x64xf32> -> vector<16x64xf32>
    %300 = vector.broadcast %33 : vector<1x64xf32> to vector<16x64xf32>
    %301 = arith.addf %299, %300 : vector<16x64xf32>
    %302 = arith.mulf %301, %301 : vector<16x64xf32>
    %303 = arith.mulf %301, %302 : vector<16x64xf32>
    %cst_137 = arith.constant 4.471500e-02 : f32
    %304 = vector.broadcast %cst_137 : f32 to vector<16x64xf32>
    %305 = arith.mulf %304, %303 : vector<16x64xf32>
    %306 = arith.addf %301, %305 : vector<16x64xf32>
    %cst_138 = arith.constant 0.797884583 : f32
    %307 = vector.broadcast %cst_138 : f32 to vector<16x64xf32>
    %308 = arith.mulf %307, %306 : vector<16x64xf32>
    %309 = math.tanh %308 : vector<16x64xf32>
    %cst_139 = arith.constant 1.000000e+00 : f32
    %310 = vector.broadcast %cst_139 : f32 to vector<16x64xf32>
    %311 = arith.addf %310, %309 : vector<16x64xf32>
    %cst_140 = arith.constant 5.000000e-01 : f32
    %312 = vector.broadcast %cst_140 : f32 to vector<16x64xf32>
    %313 = arith.mulf %312, %311 : vector<16x64xf32>
    %314 = arith.mulf %301, %313 : vector<16x64xf32>
    %315 = arith.truncf %314 : vector<16x64xf32> to vector<16x64xbf16>
    %cst_141 = arith.constant dense<0.000000e+00> : vector<16x32xf32>
    %316 = tpu.matmul %315, %34, %cst_141 {dimension_numbers = #tpu.dot_dimension_numbers<[1], [0], [0], [1], [0, 0, 1, 1], [], []>} : vector<16x64xbf16>, vector<64x32xbf16>, vector<16x32xf32> -> vector<16x32xf32>
    %317 = vector.broadcast %35 : vector<1x32xf32> to vector<16x32xf32>
    %318 = arith.addf %316, %317 : vector<16x32xf32>
    %319 = arith.addf %275, %318 : vector<16x32xf32>
    %320 = arith.truncf %319 : vector<16x32xf32> to vector<16x32xbf16>
    %cst_142 = arith.constant dense<0.000000e+00> : vector<16x128xf32>
    %321 = tpu.matmul %320, %36, %cst_142 {dimension_numbers = #tpu.dot_dimension_numbers<[1], [0], [0], [1], [0, 0, 1, 1], [], []>} : vector<16x32xbf16>, vector<32x128xbf16>, vector<16x128xf32> -> vector<16x128xf32>
    %322 = vector.broadcast %37 : vector<1x128xf32> to vector<16x128xf32>
    %323 = arith.addf %321, %322 : vector<16x128xf32>
    %c0_143 = arith.constant 0 : index
    %c0_144 = arith.constant 0 : index
    %324 = vector.load %arg41[%c0_143, %c0_144] : memref<16x128xf32, #tpu.memory_space<vmem>>, vector<16x128xf32>
    tpu.vector_store %arg41[%c0_143, %c0_144], %323 {strides = array<i32>} : memref<16x128xf32, #tpu.memory_space<vmem>>, vector<16x128xf32>,
    return
  }
  func.func @transform_0(%arg0: i32) -> (i32, i32) {
    %c0_i32 = arith.constant 0 : i32
    %c0_i32_0 = arith.constant 0 : i32
    return %arg0, %c0_i32 : i32, i32
  }
  func.func @transform_1(%arg0: i32) -> (i32, i32) {
    %c0_i32 = arith.constant 0 : i32
    %c0_i32_0 = arith.constant 0 : i32
    %c0_i32_1 = arith.constant 0 : i32
    return %c0_i32, %c0_i32_0 : i32, i32
  }
  func.func @transform_2(%arg0: i32) -> (i32, i32) {
    %c0_i32 = arith.constant 0 : i32
    %c0_i32_0 = arith.constant 0 : i32
    %c0_i32_1 = arith.constant 0 : i32
    return %c0_i32, %c0_i32_0 : i32, i32
  }
  func.func @transform_3(%arg0: i32) -> (i32, i32) {
    %c0_i32 = arith.constant 0 : i32
    %c0_i32_0 = arith.constant 0 : i32
    %c0_i32_1 = arith.constant 0 : i32
    return %c0_i32, %c0_i32_0 : i32, i32
  }
  func.func @transform_4(%arg0: i32) -> (i32, i32) {
    %c0_i32 = arith.constant 0 : i32
    %c0_i32_0 = arith.constant 0 : i32
    %c0_i32_1 = arith.constant 0 : i32
    return %c0_i32, %c0_i32_0 : i32, i32
  }
  func.func @transform_5(%arg0: i32) -> (i32, i32) {
    %c0_i32 = arith.constant 0 : i32
    %c0_i32_0 = arith.constant 0 : i32
    %c0_i32_1 = arith.constant 0 : i32
    return %c0_i32, %c0_i32_0 : i32, i32
  }
  func.func @transform_6(%arg0: i32) -> (i32, i32) {
    %c0_i32 = arith.constant 0 : i32
    %c0_i32_0 = arith.constant 0 : i32
    %c0_i32_1 = arith.constant 0 : i32
    return %c0_i32, %c0_i32_0 : i32, i32
  }
  func.func @transform_7(%arg0: i32) -> (i32, i32) {
    %c0_i32 = arith.constant 0 : i32
    %c0_i32_0 = arith.constant 0 : i32
    %c0_i32_1 = arith.constant 0 : i32
    return %c0_i32, %c0_i32_0 : i32, i32
  }
  func.func @transform_8(%arg0: i32) -> (i32, i32) {
    %c0_i32 = arith.constant 0 : i32
    %c0_i32_0 = arith.constant 0 : i32
    %c0_i32_1 = arith.constant 0 : i32
    return %c0_i32, %c0_i32_0 : i32, i32
  }
  func.func @transform_9(%arg0: i32) -> (i32, i32, i32) {
    %c0_i32 = arith.constant 0 : i32
    %c0_i32_0 = arith.constant 0 : i32
    %c0_i32_1 = arith.constant 0 : i32
    %c0_i32_2 = arith.constant 0 : i32
    return %c0_i32, %c0_i32_0, %c0_i32_1 : i32, i32, i32
  }
  func.func @transform_10(%arg0: i32) -> (i32, i32, i32) {
    %c0_i32 = arith.constant 0 : i32
    %c0_i32_0 = arith.constant 0 : i32
    %c0_i32_1 = arith.constant 0 : i32
    %c0_i32_2 = arith.constant 0 : i32
    return %c0_i32, %c0_i32_0, %c0_i32_1 : i32, i32, i32
  }
  func.func @transform_11(%arg0: i32) -> (i32, i32) {
    %c0_i32 = arith.constant 0 : i32
    %c0_i32_0 = arith.constant 0 : i32
    %c0_i32_1 = arith.constant 0 : i32
    return %c0_i32, %c0_i32_0 : i32, i32
  }
  func.func @transform_12(%arg0: i32) -> (i32, i32) {
    %c0_i32 = arith.constant 0 : i32
    %c0_i32_0 = arith.constant 0 : i32
    %c0_i32_1 = arith.constant 0 : i32
    return %c0_i32, %c0_i32_0 : i32, i32
  }
  func.func @transform_13(%arg0: i32) -> (i32, i32) {
    %c0_i32 = arith.constant 0 : i32
    %c0_i32_0 = arith.constant 0 : i32
    %c0_i32_1 = arith.constant 0 : i32
    return %c0_i32, %c0_i32_0 : i32, i32
  }
  func.func @transform_14(%arg0: i32) -> (i32, i32) {
    %c0_i32 = arith.constant 0 : i32
    %c0_i32_0 = arith.constant 0 : i32
    %c0_i32_1 = arith.constant 0 : i32
    return %c0_i32, %c0_i32_0 : i32, i32
  }
  func.func @transform_15(%arg0: i32) -> (i32, i32) {
    %c0_i32 = arith.constant 0 : i32
    %c0_i32_0 = arith.constant 0 : i32
    %c0_i32_1 = arith.constant 0 : i32
    return %c0_i32, %c0_i32_0 : i32, i32
  }
  func.func @transform_16(%arg0: i32) -> (i32, i32) {
    %c0_i32 = arith.constant 0 : i32
    %c0_i32_0 = arith.constant 0 : i32
    %c0_i32_1 = arith.constant 0 : i32
    return %c0_i32, %c0_i32_0 : i32, i32
  }
  func.func @transform_17(%arg0: i32) -> (i32, i32) {
    %c0_i32 = arith.constant 0 : i32
    %c0_i32_0 = arith.constant 0 : i32
    %c0_i32_1 = arith.constant 0 : i32
    return %c0_i32, %c0_i32_0 : i32, i32
  }
  func.func @transform_18(%arg0: i32) -> (i32, i32) {
    %c0_i32 = arith.constant 0 : i32
    %c0_i32_0 = arith.constant 0 : i32
    %c0_i32_1 = arith.constant 0 : i32
    return %c0_i32, %c0_i32_0 : i32, i32
  }
  func.func @transform_19(%arg0: i32) -> (i32, i32) {
    %c0_i32 = arith.constant 0 : i32
    %c0_i32_0 = arith.constant 0 : i32
    %c0_i32_1 = arith.constant 0 : i32
    return %c0_i32, %c0_i32_0 : i32, i32
  }
  func.func @transform_20(%arg0: i32) -> (i32, i32) {
    %c0_i32 = arith.constant 0 : i32
    %c0_i32_0 = arith.constant 0 : i32
    %c0_i32_1 = arith.constant 0 : i32
    return %c0_i32, %c0_i32_0 : i32, i32
  }
  func.func @transform_21(%arg0: i32) -> (i32, i32) {
    %c0_i32 = arith.constant 0 : i32
    %c0_i32_0 = arith.constant 0 : i32
    %c0_i32_1 = arith.constant 0 : i32
    return %c0_i32, %c0_i32_0 : i32, i32
  }
  func.func @transform_22(%arg0: i32) -> (i32, i32) {
    %c0_i32 = arith.constant 0 : i32
    %c0_i32_0 = arith.constant 0 : i32
    %c0_i32_1 = arith.constant 0 : i32
    return %c0_i32, %c0_i32_0 : i32, i32
  }
  func.func @transform_23(%arg0: i32) -> (i32, i32) {
    %c0_i32 = arith.constant 0 : i32
    %c0_i32_0 = arith.constant 0 : i32
    %c0_i32_1 = arith.constant 0 : i32
    return %c0_i32, %c0_i32_0 : i32, i32
  }
  func.func @transform_24(%arg0: i32) -> (i32, i32) {
    %c0_i32 = arith.constant 0 : i32
    %c0_i32_0 = arith.constant 0 : i32
    %c0_i32_1 = arith.constant 0 : i32
    return %c0_i32, %c0_i32_0 : i32, i32
  }
  func.func @transform_25(%arg0: i32) -> (i32, i32) {
    %c0_i32 = arith.constant 0 : i32
    %c0_i32_0 = arith.constant 0 : i32
    %c0_i32_1 = arith.constant 0 : i32
    return %c0_i32, %c0_i32_0 : i32, i32
  }
  func.func @transform_26(%arg0: i32) -> (i32, i32) {
    %c0_i32 = arith.constant 0 : i32
    %c0_i32_0 = arith.constant 0 : i32
    %c0_i32_1 = arith.constant 0 : i32
    return %c0_i32, %c0_i32_0 : i32, i32
  }
  func.func @transform_27(%arg0: i32) -> (i32, i32) {
    %c0_i32 = arith.constant 0 : i32
    %c0_i32_0 = arith.constant 0 : i32
    %c0_i32_1 = arith.constant 0 : i32
    return %c0_i32, %c0_i32_0 : i32, i32
  }
  func.func @transform_28(%arg0: i32) -> (i32, i32, i32) {
    %c0_i32 = arith.constant 0 : i32
    %c0_i32_0 = arith.constant 0 : i32
    %c0_i32_1 = arith.constant 0 : i32
    %c0_i32_2 = arith.constant 0 : i32
    return %c0_i32, %c0_i32_0, %c0_i32_1 : i32, i32, i32
  }
  func.func @transform_29(%arg0: i32) -> (i32, i32, i32) {
    %c0_i32 = arith.constant 0 : i32
    %c0_i32_0 = arith.constant 0 : i32
    %c0_i32_1 = arith.constant 0 : i32
    %c0_i32_2 = arith.constant 0 : i32
    return %c0_i32, %c0_i32_0, %c0_i32_1 : i32, i32, i32
  }
  func.func @transform_30(%arg0: i32) -> (i32, i32) {
    %c0_i32 = arith.constant 0 : i32
    %c0_i32_0 = arith.constant 0 : i32
    %c0_i32_1 = arith.constant 0 : i32
    return %c0_i32, %c0_i32_0 : i32, i32
  }
  func.func @transform_31(%arg0: i32) -> (i32, i32) {
    %c0_i32 = arith.constant 0 : i32
    %c0_i32_0 = arith.constant 0 : i32
    %c0_i32_1 = arith.constant 0 : i32
    return %c0_i32, %c0_i32_0 : i32, i32
  }
  func.func @transform_32(%arg0: i32) -> (i32, i32) {
    %c0_i32 = arith.constant 0 : i32
    %c0_i32_0 = arith.constant 0 : i32
    %c0_i32_1 = arith.constant 0 : i32
    return %c0_i32, %c0_i32_0 : i32, i32
  }
  func.func @transform_33(%arg0: i32) -> (i32, i32) {
    %c0_i32 = arith.constant 0 : i32
    %c0_i32_0 = arith.constant 0 : i32
    %c0_i32_1 = arith.constant 0 : i32
    return %c0_i32, %c0_i32_0 : i32, i32
  }
  func.func @transform_34(%arg0: i32) -> (i32, i32) {
    %c0_i32 = arith.constant 0 : i32
    %c0_i32_0 = arith.constant 0 : i32
    %c0_i32_1 = arith.constant 0 : i32
    return %c0_i32, %c0_i32_0 : i32, i32
  }
  func.func @transform_35(%arg0: i32) -> (i32, i32) {
    %c0_i32 = arith.constant 0 : i32
    %c0_i32_0 = arith.constant 0 : i32
    %c0_i32_1 = arith.constant 0 : i32
    return %c0_i32, %c0_i32_0 : i32, i32
  }
  func.func @transform_36(%arg0: i32) -> (i32, i32) {
    %c0_i32 = arith.constant 0 : i32
    %c0_i32_0 = arith.constant 0 : i32
    %c0_i32_1 = arith.constant 0 : i32
    return %c0_i32, %c0_i32_0 : i32, i32
  }
  func.func @transform_37(%arg0: i32) -> (i32, i32) {
    %c0_i32 = arith.constant 0 : i32
    %c0_i32_0 = arith.constant 0 : i32
    %c0_i32_1 = arith.constant 0 : i32
    return %c0_i32, %c0_i32_0 : i32, i32
  }
  func.func @transform_38(%arg0: i32) -> (i32, i32) {
    %c0_i32 = arith.constant 0 : i32
    %c0_i32_0 = arith.constant 0 : i32
    %c0_i32_1 = arith.constant 0 : i32
    return %c0_i32, %c0_i32_0 : i32, i32
  }
  func.func @transform_39(%arg0: i32) -> (i32, i32) {
    %c0_i32 = arith.constant 0 : i32
    %c0_i32_0 = arith.constant 0 : i32
    return %arg0, %c0_i32 : i32, i32
  }
  func.func @transform_40(%arg0: i32) -> (i32, i32) {
    %c0_i32 = arith.constant 0 : i32
    %c0_i32_0 = arith.constant 0 : i32
    return %arg0, %c0_i32 : i32, i32
  }
}

</mosaic_0001>

<llo_original>
// kernel: swin_encoder_forward.1
$region0: #{swin_encoder_forward.1}
  #allocation0 [shape = 'u32[]', space=smem, size = 0x4, offset = 0x4, fixed_abs, tag = 'smem constant byte address 0x4 - core index']
  #allocation1 [shape = 'u32[144,128]{1,0:T(1,128)}', space=vmem, size = 0x12000, scoped, tag = 'internal scratch']
  %s0 = inlined_call_operand.smem [shape: u32[41], index: -1, kind: input, shape index: {}]
  %s1 = sld [smem:[%s0]]
  %s2 = scalar_lea.smem %s0, 1
  %s3 = sld [smem:[%s2]]
  %s4 = scalar_lea.smem %s0, 2
  %s5 = sld [smem:[%s4]]
  %s6 = scalar_lea.smem %s0, 3
  %s7 = sld [smem:[%s6]]
  %s8 = scalar_lea.smem %s0, 4
  %s9 = sld [smem:[%s8]]
  %s10 = scalar_lea.smem %s0, 5
  %s11 = sld [smem:[%s10]]
  %s12 = scalar_lea.smem %s0, 6
  %s13 = sld [smem:[%s12]]
  %s14 = scalar_lea.smem %s0, 7
  %s15 = sld [smem:[%s14]]
  %s16 = scalar_lea.smem %s0, 8
  %s17 = sld [smem:[%s16]]
  %s18 = scalar_lea.smem %s0, 9
  %s19 = sld [smem:[%s18]]
  %s20 = scalar_lea.smem %s0, 10
  %s21 = sld [smem:[%s20]]
  %s22 = scalar_lea.smem %s0, 11
  %s23 = sld [smem:[%s22]]
  %s24 = scalar_lea.smem %s0, 12
  %s25 = sld [smem:[%s24]]
  %s26 = scalar_lea.smem %s0, 13
  %s27 = sld [smem:[%s26]]
  %s28 = scalar_lea.smem %s0, 14
  %s29 = sld [smem:[%s28]]
  %s30 = scalar_lea.smem %s0, 15
  %s31 = sld [smem:[%s30]]
  %s32 = scalar_lea.smem %s0, 16
  %s33 = sld [smem:[%s32]]
  %s34 = scalar_lea.smem %s0, 17
  %s35 = sld [smem:[%s34]]
  %s36 = scalar_lea.smem %s0, 18
  %s37 = sld [smem:[%s36]]
  %s38 = scalar_lea.smem %s0, 19
  %s39 = sld [smem:[%s38]]
  %s40 = scalar_lea.smem %s0, 20
  %s41 = sld [smem:[%s40]]
  %s42 = scalar_lea.smem %s0, 21
  %s43 = sld [smem:[%s42]]
  %s44 = scalar_lea.smem %s0, 22
  %s45 = sld [smem:[%s44]]
  %s46 = scalar_lea.smem %s0, 23
  %s47 = sld [smem:[%s46]]
  %s48 = scalar_lea.smem %s0, 24
  %s49 = sld [smem:[%s48]]
  %s50 = scalar_lea.smem %s0, 25
  %s51 = sld [smem:[%s50]]
  %s52 = scalar_lea.smem %s0, 26
  %s53 = sld [smem:[%s52]]
  %s54 = scalar_lea.smem %s0, 27
  %s55 = sld [smem:[%s54]]
  %s56 = scalar_lea.smem %s0, 28
  %s57 = sld [smem:[%s56]]
  %s58 = scalar_lea.smem %s0, 29
  %s59 = sld [smem:[%s58]]
  %s60 = scalar_lea.smem %s0, 30
  %s61 = sld [smem:[%s60]]
  %s62 = scalar_lea.smem %s0, 31
  %s63 = sld [smem:[%s62]]
  %s64 = scalar_lea.smem %s0, 32
  %s65 = sld [smem:[%s64]]
  %s66 = scalar_lea.smem %s0, 33
  %s67 = sld [smem:[%s66]]
  %s68 = scalar_lea.smem %s0, 34
  %s69 = sld [smem:[%s68]]
  %s70 = scalar_lea.smem %s0, 35
  %s71 = sld [smem:[%s70]]
  %s72 = scalar_lea.smem %s0, 36
  %s73 = sld [smem:[%s72]]
  %s74 = scalar_lea.smem %s0, 37
  %s75 = sld [smem:[%s74]]
  %s76 = scalar_lea.smem %s0, 38
  %s77 = sld [smem:[%s76]]
  %s78 = scalar_lea.smem %s0, 39
  %s79 = sld [smem:[%s78]]
  %s80 = scalar_lea.smem %s0, 40
  %s81 = sld [smem:[%s80]]
  %82 = xla_tuple %s79, %s81
  %s83 = sld [smem:[#allocation0]]
  $region197: #{swin_encoder_forward.1} parent=0
    _
  %s85 = ssub.s32 1, %s83
  %s86 = scalar_select 0, %s85, %s83
  $region1: #{swin_encoder_forward.1} parent=0
    #allocation2 [shape = 'u8[16384]{0}', space=vmem, size = 0x4000, scoped, tag = 'output window, operand 1']
    #allocation3 [shape = 's32[2]{0}', space=sflag, size = 0x8, scoped, tag = 'scoped memory for swin_encoder_forward.1']
    %87 = vsyncpa [#allocation3], 0
    %s88 = scalar_lea.sflag [#allocation3], 1
    %89 = vsyncpa %s88, 0
    loop: start=0, step=1, limit=4
    $region2: #{swin_encoder_forward.1} parent=1 // loop_pre_header
      _
    $region3: #{swin_encoder_forward.1} parent=1 // loop_header
      %s91 = sphi 0, %s95
      %p92 = scmp.ge.s32.totalorder %s91, 4
      %s101 = sphi 0, %s103
      %s104 = sphi 0, %s101
      %s105 = sphi 0, %s104
      %s121 = sphi 0, %s105
      %s125 = sphi 0, %s125
      %s127 = sphi 0, %s125
      %s128 = sphi 0, %s127
      %s142 = sphi 0, %s128
      %s146 = sphi 0, %s146
      %s148 = sphi 0, %s146
      %s149 = sphi 0, %s148
      %s163 = sphi 0, %s149
      %s167 = sphi 0, %s167
      %s169 = sphi 0, %s167
      %s170 = sphi 0, %s169
      %s184 = sphi 0, %s170
      %s188 = sphi 0, %s188
      %s190 = sphi 0, %s188
      %s191 = sphi 0, %s190
      %s205 = sphi 0, %s191
      %s209 = sphi 0, %s209
      %s211 = sphi 0, %s209
      %s212 = sphi 0, %s211
      %s226 = sphi 0, %s212
      %s230 = sphi 0, %s230
      %s232 = sphi 0, %s230
      %s233 = sphi 0, %s232
      %s247 = sphi 0, %s233
      %s251 = sphi 0, %s251
      %s253 = sphi 0, %s251
      %s254 = sphi 0, %s253
      %s268 = sphi 0, %s254
      %s272 = sphi 0, %s272
      %s274 = sphi 0, %s272
      %s275 = sphi 0, %s274
      %s289 = sphi 0, %s275
      %s293 = sphi 0, %s293
      %s295 = sphi 0, %s293
      %s296 = sphi 0, %s295
      %s310 = sphi 0, %s296
      %s314 = sphi 0, %s314
      %s316 = sphi 0, %s314
      %s317 = sphi 0, %s316
      %s331 = sphi 0, %s317
      %s335 = sphi 0, %s335
      %s337 = sphi 0, %s335
      %s338 = sphi 0, %s337
      %s352 = sphi 0, %s338
      %s356 = sphi 0, %s356
      %s358 = sphi 0, %s356
      %s359 = sphi 0, %s358
      %s373 = sphi 0, %s359
      %s377 = sphi 0, %s377
      %s379 = sphi 0, %s377
      %s380 = sphi 0, %s379
      %s394 = sphi 0, %s380
      %s398 = sphi 0, %s398
      %s400 = sphi 0, %s398
      %s401 = sphi 0, %s400
      %s415 = sphi 0, %s401
      %s419 = sphi 0, %s419
      %s421 = sphi 0, %s419
      %s422 = sphi 0, %s421
      %s436 = sphi 0, %s422
      %s440 = sphi 0, %s440
      %s442 = sphi 0, %s440
      %s443 = sphi 0, %s442
      %s457 = sphi 0, %s443
      %s461 = sphi 0, %s461
      %s463 = sphi 0, %s461
      %s464 = sphi 0, %s463
      %s478 = sphi 0, %s464
      %s482 = sphi 0, %s482
      %s484 = sphi 0, %s482
      %s485 = sphi 0, %s484
      %s499 = sphi 0, %s485
      %s503 = sphi 0, %s503
      %s505 = sphi 0, %s503
      %s506 = sphi 0, %s505
      %s520 = sphi 0, %s506
      %s524 = sphi 0, %s524
      %s526 = sphi 0, %s524
      %s527 = sphi 0, %s526
      %s541 = sphi 0, %s527
      %s545 = sphi 0, %s545
      %s547 = sphi 0, %s545
      %s548 = sphi 0, %s547
      %s562 = sphi 0, %s548
      %s566 = sphi 0, %s566
      %s568 = sphi 0, %s566
      %s569 = sphi 0, %s568
      %s583 = sphi 0, %s569
      %s587 = sphi 0, %s587
      %s589 = sphi 0, %s587
      %s590 = sphi 0, %s589
      %s604 = sphi 0, %s590
      %s608 = sphi 0, %s608
      %s610 = sphi 0, %s608
      %s611 = sphi 0, %s610
      %s625 = sphi 0, %s611
      %s629 = sphi 0, %s629
      %s631 = sphi 0, %s629
      %s632 = sphi 0, %s631
      %s646 = sphi 0, %s632
      %s650 = sphi 0, %s650
      %s652 = sphi 0, %s650
      %s653 = sphi 0, %s652
      %s667 = sphi 0, %s653
      %s671 = sphi 0, %s671
      %s673 = sphi 0, %s671
      %s674 = sphi 0, %s673
      %s688 = sphi 0, %s674
      %s692 = sphi 0, %s692
      %s694 = sphi 0, %s692
      %s695 = sphi 0, %s694
      %s709 = sphi 0, %s695
      %s713 = sphi 0, %s713
      %s715 = sphi 0, %s713
      %s716 = sphi 0, %s715
      %s730 = sphi 0, %s716
      %s734 = sphi 0, %s734
      %s736 = sphi 0, %s734
      %s737 = sphi 0, %s736
      %s751 = sphi 0, %s737
      %s755 = sphi 0, %s755
      %s757 = sphi 0, %s755
      %s758 = sphi 0, %s757
      %s772 = sphi 0, %s758
      %s776 = sphi 0, %s776
      %s778 = sphi 0, %s776
      %s779 = sphi 0, %s778
      %s793 = sphi 0, %s779
      %s797 = sphi 0, %s797
      %s799 = sphi 0, %s797
      %s800 = sphi 0, %s799
      %s814 = sphi 0, %s800
      %s818 = sphi 0, %s818
      %s820 = sphi 0, %s818
      %s821 = sphi 0, %s820
      %s835 = sphi 0, %s821
      %s839 = sphi 0, %s839
      %s841 = sphi 0, %s839
      %s842 = sphi 0, %s841
      %s856 = sphi 0, %s842
      %s860 = sphi 0, %s860
      %s862 = sphi 0, %s860
      %s863 = sphi 0, %s862
      %s877 = sphi 0, %s863
      %s881 = sphi 0, %s881
      %s883 = sphi 0, %s881
      %s884 = sphi 0, %s883
      %s898 = sphi 0, %s884
      %s902 = sphi 0, %s902
      %s904 = sphi 0, %s902
      %s905 = sphi 0, %s904
      %s919 = sphi 0, %s905
      %s925 = sphi 0, %s927
      %s928 = sphi 0, %s925
      %s929 = sphi 0, %s928
      %s945 = sphi 0, %s929
      %s951 = sphi 0, %s953
      %s954 = sphi 0, %s951
      %s955 = sphi 0, %s954
      %s971 = sphi 0, %s955
    $region4: #{swin_encoder_forward.1} parent=1 // loop_header_branch
      %94 = sbr.rel (%p92) target = $region8
    $region5: #{swin_encoder_forward.1} parent=1 // loop_body
      %s96 = ssub.s32 %s91, 1
      %s97 = ssub.s32 %s91, 2
      %s98 = sadd.s32 %s91, 1
      %s99 = ssub.s32 %s91, %s98
      %p100 = scmp.eq.s32.totalorder %s99, 0
      %s102 = sadd.s32 %s101, 1
      %s103 = scalar_select %p100, %s101, %s102
      %p106 = pneg %p100
      %p107 = scmp.eq.s32.totalorder %s91, 1
      %p108 = por %p106, %p107
      %p109 = scmp.ne.s32.totalorder %s101, %s104
      %p110 = scmp.eq.s32.totalorder %s91, 0
      %p111 = por %p109, %p110
      %p112 = scmp.ne.s32.totalorder %s101, %s104
      %p113 = scmp.eq.s32.totalorder %s96, 1
      %p114 = por %p112, %p113
      %p115 = scmp.ne.s32.totalorder %s104, %s105
      %p116 = scmp.eq.s32.totalorder %s96, 0
      %p117 = por %p115, %p116
      %p118 = scmp.ne.s32.totalorder %s104, %s105
      %p119 = scmp.eq.s32.totalorder %s97, 1
      %p120 = por %p118, %p119
      %p122 = scmp.ne.s32.totalorder %s105, %s121
      %p123 = scmp.eq.s32.totalorder %s97, 0
      %p124 = por %p122, %p123
      %s126 = sadd.s32 %s125, 1
      %p129 = scmp.eq.s32.totalorder %s91, 1
      %p130 = scmp.ne.s32.totalorder %s125, %s127
      %p131 = scmp.eq.s32.totalorder %s91, 0
      %p132 = por %p130, %p131
      %p133 = scmp.ne.s32.totalorder %s125, %s127
      %p134 = scmp.eq.s32.totalorder %s96, 1
      %p135 = por %p133, %p134
      %p136 = scmp.ne.s32.totalorder %s127, %s128
      %p137 = scmp.eq.s32.totalorder %s96, 0
      %p138 = por %p136, %p137
      %p139 = scmp.ne.s32.totalorder %s127, %s128
      %p140 = scmp.eq.s32.totalorder %s97, 1
      %p141 = por %p139, %p140
      %p143 = scmp.ne.s32.totalorder %s128, %s142
      %p144 = scmp.eq.s32.totalorder %s97, 0
      %p145 = por %p143, %p144
      %s147 = sadd.s32 %s146, 1
      %p150 = scmp.eq.s32.totalorder %s91, 1
      %p151 = scmp.ne.s32.totalorder %s146, %s148
      %p152 = scmp.eq.s32.totalorder %s91, 0
      %p153 = por %p151, %p152
      %p154 = scmp.ne.s32.totalorder %s146, %s148
      %p155 = scmp.eq.s32.totalorder %s96, 1
      %p156 = por %p154, %p155
      %p157 = scmp.ne.s32.totalorder %s148, %s149
      %p158 = scmp.eq.s32.totalorder %s96, 0
      %p159 = por %p157, %p158
      %p160 = scmp.ne.s32.totalorder %s148, %s149
      %p161 = scmp.eq.s32.totalorder %s97, 1
      %p162 = por %p160, %p161
      %p164 = scmp.ne.s32.totalorder %s149, %s163
      %p165 = scmp.eq.s32.totalorder %s97, 0
      %p166 = por %p164, %p165
      %s168 = sadd.s32 %s167, 1
      %p171 = scmp.eq.s32.totalorder %s91, 1
      %p172 = scmp.ne.s32.totalorder %s167, %s169
      %p173 = scmp.eq.s32.totalorder %s91, 0
      %p174 = por %p172, %p173
      %p175 = scmp.ne.s32.totalorder %s167, %s169
      %p176 = scmp.eq.s32.totalorder %s96, 1
      %p177 = por %p175, %p176
      %p178 = scmp.ne.s32.totalorder %s169, %s170
      %p179 = scmp.eq.s32.totalorder %s96, 0
      %p180 = por %p178, %p179
      %p181 = scmp.ne.s32.totalorder %s169, %s170
      %p182 = scmp.eq.s32.totalorder %s97, 1
      %p183 = por %p181, %p182
      %p185 = scmp.ne.s32.totalorder %s170, %s184
      %p186 = scmp.eq.s32.totalorder %s97, 0
      %p187 = por %p185, %p186
      %s189 = sadd.s32 %s188, 1
      %p192 = scmp.eq.s32.totalorder %s91, 1
      %p193 = scmp.ne.s32.totalorder %s188, %s190
      %p194 = scmp.eq.s32.totalorder %s91, 0
      %p195 = por %p193, %p194
      %p196 = scmp.ne.s32.totalorder %s188, %s190
      %p197 = scmp.eq.s32.totalorder %s96, 1
      %p198 = por %p196, %p197
      %p199 = scmp.ne.s32.totalorder %s190, %s191
      %p200 = scmp.eq.s32.totalorder %s96, 0
      %p201 = por %p199, %p200
      %p202 = scmp.ne.s32.totalorder %s190, %s191
      %p203 = scmp.eq.s32.totalorder %s97, 1
      %p204 = por %p202, %p203
      %p206 = scmp.ne.s32.totalorder %s191, %s205
      %p207 = scmp.eq.s32.totalorder %s97, 0
      %p208 = por %p206, %p207
      %s210 = sadd.s32 %s209, 1
      %p213 = scmp.eq.s32.totalorder %s91, 1
      %p214 = scmp.ne.s32.totalorder %s209, %s211
      %p215 = scmp.eq.s32.totalorder %s91, 0
      %p216 = por %p214, %p215
      %p217 = scmp.ne.s32.totalorder %s209, %s211
      %p218 = scmp.eq.s32.totalorder %s96, 1
      %p219 = por %p217, %p218
      %p220 = scmp.ne.s32.totalorder %s211, %s212
      %p221 = scmp.eq.s32.totalorder %s96, 0
      %p222 = por %p220, %p221
      %p223 = scmp.ne.s32.totalorder %s211, %s212
      %p224 = scmp.eq.s32.totalorder %s97, 1
      %p225 = por %p223, %p224
      %p227 = scmp.ne.s32.totalorder %s212, %s226
      %p228 = scmp.eq.s32.totalorder %s97, 0
      %p229 = por %p227, %p228
      %s231 = sadd.s32 %s230, 1
      %p234 = scmp.eq.s32.totalorder %s91, 1
      %p235 = scmp.ne.s32.totalorder %s230, %s232
      %p236 = scmp.eq.s32.totalorder %s91, 0
      %p237 = por %p235, %p236
      %p238 = scmp.ne.s32.totalorder %s230, %s232
      %p239 = scmp.eq.s32.totalorder %s96, 1
      %p240 = por %p238, %p239
      %p241 = scmp.ne.s32.totalorder %s232, %s233
      %p242 = scmp.eq.s32.totalorder %s96, 0
      %p243 = por %p241, %p242
      %p244 = scmp.ne.s32.totalorder %s232, %s233
      %p245 = scmp.eq.s32.totalorder %s97, 1
      %p246 = por %p244, %p245
      %p248 = scmp.ne.s32.totalorder %s233, %s247
      %p249 = scmp.eq.s32.totalorder %s97, 0
      %p250 = por %p248, %p249
      %s252 = sadd.s32 %s251, 1
      %p255 = scmp.eq.s32.totalorder %s91, 1
      %p256 = scmp.ne.s32.totalorder %s251, %s253
      %p257 = scmp.eq.s32.totalorder %s91, 0
      %p258 = por %p256, %p257
      %p259 = scmp.ne.s32.totalorder %s251, %s253
      %p260 = scmp.eq.s32.totalorder %s96, 1
      %p261 = por %p259, %p260
      %p262 = scmp.ne.s32.totalorder %s253, %s254
      %p263 = scmp.eq.s32.totalorder %s96, 0
      %p264 = por %p262, %p263
      %p265 = scmp.ne.s32.totalorder %s253, %s254
      %p266 = scmp.eq.s32.totalorder %s97, 1
      %p267 = por %p265, %p266
      %p269 = scmp.ne.s32.totalorder %s254, %s268
      %p270 = scmp.eq.s32.totalorder %s97, 0
      %p271 = por %p269, %p270
      %s273 = sadd.s32 %s272, 1
      %p276 = scmp.eq.s32.totalorder %s91, 1
      %p277 = scmp.ne.s32.totalorder %s272, %s274
      %p278 = scmp.eq.s32.totalorder %s91, 0
      %p279 = por %p277, %p278
      %p280 = scmp.ne.s32.totalorder %s272, %s274
      %p281 = scmp.eq.s32.totalorder %s96, 1
      %p282 = por %p280, %p281
      %p283 = scmp.ne.s32.totalorder %s274, %s275
      %p284 = scmp.eq.s32.totalorder %s96, 0
      %p285 = por %p283, %p284
      %p286 = scmp.ne.s32.totalorder %s274, %s275
      %p287 = scmp.eq.s32.totalorder %s97, 1
      %p288 = por %p286, %p287
      %p290 = scmp.ne.s32.totalorder %s275, %s289
      %p291 = scmp.eq.s32.totalorder %s97, 0
      %p292 = por %p290, %p291
      %s294 = sadd.s32 %s293, 1
      %p297 = scmp.eq.s32.totalorder %s91, 1
      %p298 = scmp.ne.s32.totalorder %s293, %s295
      %p299 = scmp.eq.s32.totalorder %s91, 0
      %p300 = por %p298, %p299
      %p301 = scmp.ne.s32.totalorder %s293, %s295
      %p302 = scmp.eq.s32.totalorder %s96, 1
      %p303 = por %p301, %p302
      %p304 = scmp.ne.s32.totalorder %s295, %s296
      %p305 = scmp.eq.s32.totalorder %s96, 0
      %p306 = por %p304, %p305
      %p307 = scmp.ne.s32.totalorder %s295, %s296
      %p308 = scmp.eq.s32.totalorder %s97, 1
      %p309 = por %p307, %p308
      %p311 = scmp.ne.s32.totalorder %s296, %s310
      %p312 = scmp.eq.s32.totalorder %s97, 0
      %p313 = por %p311, %p312
      %s315 = sadd.s32 %s314, 1
      %p318 = scmp.eq.s32.totalorder %s91, 1
      %p319 = scmp.ne.s32.totalorder %s314, %s316
      %p320 = scmp.eq.s32.totalorder %s91, 0
      %p321 = por %p319, %p320
      %p322 = scmp.ne.s32.totalorder %s314, %s316
      %p323 = scmp.eq.s32.totalorder %s96, 1
      %p324 = por %p322, %p323
      %p325 = scmp.ne.s32.totalorder %s316, %s317
      %p326 = scmp.eq.s32.totalorder %s96, 0
      %p327 = por %p325, %p326
      %p328 = scmp.ne.s32.totalorder %s316, %s317
      %p329 = scmp.eq.s32.totalorder %s97, 1
      %p330 = por %p328, %p329
      %p332 = scmp.ne.s32.totalorder %s317, %s331
      %p333 = scmp.eq.s32.totalorder %s97, 0
      %p334 = por %p332, %p333
      %s336 = sadd.s32 %s335, 1
      %p339 = scmp.eq.s32.totalorder %s91, 1
      %p340 = scmp.ne.s32.totalorder %s335, %s337
      %p341 = scmp.eq.s32.totalorder %s91, 0
      %p342 = por %p340, %p341
      %p343 = scmp.ne.s32.totalorder %s335, %s337
      %p344 = scmp.eq.s32.totalorder %s96, 1
      %p345 = por %p343, %p344
      %p346 = scmp.ne.s32.totalorder %s337, %s338
      %p347 = scmp.eq.s32.totalorder %s96, 0
      %p348 = por %p346, %p347
      %p349 = scmp.ne.s32.totalorder %s337, %s338
      %p350 = scmp.eq.s32.totalorder %s97, 1
      %p351 = por %p349, %p350
      %p353 = scmp.ne.s32.totalorder %s338, %s352
      %p354 = scmp.eq.s32.totalorder %s97, 0
      %p355 = por %p353, %p354
      %s357 = sadd.s32 %s356, 1
      %p360 = scmp.eq.s32.totalorder %s91, 1
      %p361 = scmp.ne.s32.totalorder %s356, %s358
      %p362 = scmp.eq.s32.totalorder %s91, 0
      %p363 = por %p361, %p362
      %p364 = scmp.ne.s32.totalorder %s356, %s358
      %p365 = scmp.eq.s32.totalorder %s96, 1
      %p366 = por %p364, %p365
      %p367 = scmp.ne.s32.totalorder %s358, %s359
      %p368 = scmp.eq.s32.totalorder %s96, 0
      %p369 = por %p367, %p368
      %p370 = scmp.ne.s32.totalorder %s358, %s359
      %p371 = scmp.eq.s32.totalorder %s97, 1
      %p372 = por %p370, %p371
      %p374 = scmp.ne.s32.totalorder %s359, %s373
      %p375 = scmp.eq.s32.totalorder %s97, 0
      %p376 = por %p374, %p375
      %s378 = sadd.s32 %s377, 1
      %p381 = scmp.eq.s32.totalorder %s91, 1
      %p382 = scmp.ne.s32.totalorder %s377, %s379
      %p383 = scmp.eq.s32.totalorder %s91, 0
      %p384 = por %p382, %p383
      %p385 = scmp.ne.s32.totalorder %s377, %s379
      %p386 = scmp.eq.s32.totalorder %s96, 1
      %p387 = por %p385, %p386
      %p388 = scmp.ne.s32.totalorder %s379, %s380
      %p389 = scmp.eq.s32.totalorder %s96, 0
      %p390 = por %p388, %p389
      %p391 = scmp.ne.s32.totalorder %s379, %s380
      %p392 = scmp.eq.s32.totalorder %s97, 1
      %p393 = por %p391, %p392
      %p395 = scmp.ne.s32.totalorder %s380, %s394
      %p396 = scmp.eq.s32.totalorder %s97, 0
      %p397 = por %p395, %p396
      %s399 = sadd.s32 %s398, 1
      %p402 = scmp.eq.s32.totalorder %s91, 1
      %p403 = scmp.ne.s32.totalorder %s398, %s400
      %p404 = scmp.eq.s32.totalorder %s91, 0
      %p405 = por %p403, %p404
      %p406 = scmp.ne.s32.totalorder %s398, %s400
      %p407 = scmp.eq.s32.totalorder %s96, 1
      %p408 = por %p406, %p407
      %p409 = scmp.ne.s32.totalorder %s400, %s401
      %p410 = scmp.eq.s32.totalorder %s96, 0
      %p411 = por %p409, %p410
      %p412 = scmp.ne.s32.totalorder %s400, %s401
      %p413 = scmp.eq.s32.totalorder %s97, 1
      %p414 = por %p412, %p413
      %p416 = scmp.ne.s32.totalorder %s401, %s415
      %p417 = scmp.eq.s32.totalorder %s97, 0
      %p418 = por %p416, %p417
      %s420 = sadd.s32 %s419, 1
      %p423 = scmp.eq.s32.totalorder %s91, 1
      %p424 = scmp.ne.s32.totalorder %s419, %s421
      %p425 = scmp.eq.s32.totalorder %s91, 0
      %p426 = por %p424, %p425
      %p427 = scmp.ne.s32.totalorder %s419, %s421
      %p428 = scmp.eq.s32.totalorder %s96, 1
      %p429 = por %p427, %p428
      %p430 = scmp.ne.s32.totalorder %s421, %s422
      %p431 = scmp.eq.s32.totalorder %s96, 0
      %p432 = por %p430, %p431
      %p433 = scmp.ne.s32.totalorder %s421, %s422
      %p434 = scmp.eq.s32.totalorder %s97, 1
      %p435 = por %p433, %p434
      %p437 = scmp.ne.s32.totalorder %s422, %s436
      %p438 = scmp.eq.s32.totalorder %s97, 0
      %p439 = por %p437, %p438
      %s441 = sadd.s32 %s440, 1
      %p444 = scmp.eq.s32.totalorder %s91, 1
      %p445 = scmp.ne.s32.totalorder %s440, %s442
      %p446 = scmp.eq.s32.totalorder %s91, 0
      %p447 = por %p445, %p446
      %p448 = scmp.ne.s32.totalorder %s440, %s442
      %p449 = scmp.eq.s32.totalorder %s96, 1
      %p450 = por %p448, %p449
      %p451 = scmp.ne.s32.totalorder %s442, %s443
      %p452 = scmp.eq.s32.totalorder %s96, 0
      %p453 = por %p451, %p452
      %p454 = scmp.ne.s32.totalorder %s442, %s443
      %p455 = scmp.eq.s32.totalorder %s97, 1
      %p456 = por %p454, %p455
      %p458 = scmp.ne.s32.totalorder %s443, %s457
      %p459 = scmp.eq.s32.totalorder %s97, 0
      %p460 = por %p458, %p459
      %s462 = sadd.s32 %s461, 1
      %p465 = scmp.eq.s32.totalorder %s91, 1
      %p466 = scmp.ne.s32.totalorder %s461, %s463
      %p467 = scmp.eq.s32.totalorder %s91, 0
      %p468 = por %p466, %p467
      %p469 = scmp.ne.s32.totalorder %s461, %s463
      %p470 = scmp.eq.s32.totalorder %s96, 1
      %p471 = por %p469, %p470
      %p472 = scmp.ne.s32.totalorder %s463, %s464
      %p473 = scmp.eq.s32.totalorder %s96, 0
      %p474 = por %p472, %p473
      %p475 = scmp.ne.s32.totalorder %s463, %s464
      %p476 = scmp.eq.s32.totalorder %s97, 1
      %p477 = por %p475, %p476
      %p479 = scmp.ne.s32.totalorder %s464, %s478
      %p480 = scmp.eq.s32.totalorder %s97, 0
      %p481 = por %p479, %p480
      %s483 = sadd.s32 %s482, 1
      %p486 = scmp.eq.s32.totalorder %s91, 1
      %p487 = scmp.ne.s32.totalorder %s482, %s484
      %p488 = scmp.eq.s32.totalorder %s91, 0
      %p489 = por %p487, %p488
      %p490 = scmp.ne.s32.totalorder %s482, %s484
      %p491 = scmp.eq.s32.totalorder %s96, 1
      %p492 = por %p490, %p491
      %p493 = scmp.ne.s32.totalorder %s484, %s485
      %p494 = scmp.eq.s32.totalorder %s96, 0
      %p495 = por %p493, %p494
      %p496 = scmp.ne.s32.totalorder %s484, %s485
      %p497 = scmp.eq.s32.totalorder %s97, 1
      %p498 = por %p496, %p497
      %p500 = scmp.ne.s32.totalorder %s485, %s499
      %p501 = scmp.eq.s32.totalorder %s97, 0
      %p502 = por %p500, %p501
      %s504 = sadd.s32 %s503, 1
      %p507 = scmp.eq.s32.totalorder %s91, 1
      %p508 = scmp.ne.s32.totalorder %s503, %s505
      %p509 = scmp.eq.s32.totalorder %s91, 0
      %p510 = por %p508, %p509
      %p511 = scmp.ne.s32.totalorder %s503, %s505
      %p512 = scmp.eq.s32.totalorder %s96, 1
      %p513 = por %p511, %p512
      %p514 = scmp.ne.s32.totalorder %s505, %s506
      %p515 = scmp.eq.s32.totalorder %s96, 0
      %p516 = por %p514, %p515
      %p517 = scmp.ne.s32.totalorder %s505, %s506
      %p518 = scmp.eq.s32.totalorder %s97, 1
      %p519 = por %p517, %p518
      %p521 = scmp.ne.s32.totalorder %s506, %s520
      %p522 = scmp.eq.s32.totalorder %s97, 0
      %p523 = por %p521, %p522
      %s525 = sadd.s32 %s524, 1
      %p528 = scmp.eq.s32.totalorder %s91, 1
      %p529 = scmp.ne.s32.totalorder %s524, %s526
      %p530 = scmp.eq.s32.totalorder %s91, 0
      %p531 = por %p529, %p530
      %p532 = scmp.ne.s32.totalorder %s524, %s526
      %p533 = scmp.eq.s32.totalorder %s96, 1
      %p534 = por %p532, %p533
      %p535 = scmp.ne.s32.totalorder %s526, %s527
      %p536 = scmp.eq.s32.totalorder %s96, 0
      %p537 = por %p535, %p536
      %p538 = scmp.ne.s32.totalorder %s526, %s527
      %p539 = scmp.eq.s32.totalorder %s97, 1
      %p540 = por %p538, %p539
      %p542 = scmp.ne.s32.totalorder %s527, %s541
      %p543 = scmp.eq.s32.totalorder %s97, 0
      %p544 = por %p542, %p543
      %s546 = sadd.s32 %s545, 1
      %p549 = scmp.eq.s32.totalorder %s91, 1
      %p550 = scmp.ne.s32.totalorder %s545, %s547
      %p551 = scmp.eq.s32.totalorder %s91, 0
      %p552 = por %p550, %p551
      %p553 = scmp.ne.s32.totalorder %s545, %s547
      %p554 = scmp.eq.s32.totalorder %s96, 1
      %p555 = por %p553, %p554
      %p556 = scmp.ne.s32.totalorder %s547, %s548
      %p557 = scmp.eq.s32.totalorder %s96, 0
      %p558 = por %p556, %p557
      %p559 = scmp.ne.s32.totalorder %s547, %s548
      %p560 = scmp.eq.s32.totalorder %s97, 1
      %p561 = por %p559, %p560
      %p563 = scmp.ne.s32.totalorder %s548, %s562
      %p564 = scmp.eq.s32.totalorder %s97, 0
      %p565 = por %p563, %p564
      %s567 = sadd.s32 %s566, 1
      %p570 = scmp.eq.s32.totalorder %s91, 1
      %p571 = scmp.ne.s32.totalorder %s566, %s568
      %p572 = scmp.eq.s32.totalorder %s91, 0
      %p573 = por %p571, %p572
      %p574 = scmp.ne.s32.totalorder %s566, %s568
      %p575 = scmp.eq.s32.totalorder %s96, 1
      %p576 = por %p574, %p575
      %p577 = scmp.ne.s32.totalorder %s568, %s569
      %p578 = scmp.eq.s32.totalorder %s96, 0
      %p579 = por %p577, %p578
      %p580 = scmp.ne.s32.totalorder %s568, %s569
      %p581 = scmp.eq.s32.totalorder %s97, 1
      %p582 = por %p580, %p581
      %p584 = scmp.ne.s32.totalorder %s569, %s583
      %p585 = scmp.eq.s32.totalorder %s97, 0
      %p586 = por %p584, %p585
      %s588 = sadd.s32 %s587, 1
      %p591 = scmp.eq.s32.totalorder %s91, 1
      %p592 = scmp.ne.s32.totalorder %s587, %s589
      %p593 = scmp.eq.s32.totalorder %s91, 0
      %p594 = por %p592, %p593
      %p595 = scmp.ne.s32.totalorder %s587, %s589
      %p596 = scmp.eq.s32.totalorder %s96, 1
      %p597 = por %p595, %p596
      %p598 = scmp.ne.s32.totalorder %s589, %s590
      %p599 = scmp.eq.s32.totalorder %s96, 0
      %p600 = por %p598, %p599
      %p601 = scmp.ne.s32.totalorder %s589, %s590
      %p602 = scmp.eq.s32.totalorder %s97, 1
      %p603 = por %p601, %p602
      %p605 = scmp.ne.s32.totalorder %s590, %s604
      %p606 = scmp.eq.s32.totalorder %s97, 0
      %p607 = por %p605, %p606
      %s609 = sadd.s32 %s608, 1
      %p612 = scmp.eq.s32.totalorder %s91, 1
      %p613 = scmp.ne.s32.totalorder %s608, %s610
      %p614 = scmp.eq.s32.totalorder %s91, 0
      %p615 = por %p613, %p614
      %p616 = scmp.ne.s32.totalorder %s608, %s610
      %p617 = scmp.eq.s32.totalorder %s96, 1
      %p618 = por %p616, %p617
      %p619 = scmp.ne.s32.totalorder %s610, %s611
      %p620 = scmp.eq.s32.totalorder %s96, 0
      %p621 = por %p619, %p620
      %p622 = scmp.ne.s32.totalorder %s610, %s611
      %p623 = scmp.eq.s32.totalorder %s97, 1
      %p624 = por %p622, %p623
      %p626 = scmp.ne.s32.totalorder %s611, %s625
      %p627 = scmp.eq.s32.totalorder %s97, 0
      %p628 = por %p626, %p627
      %s630 = sadd.s32 %s629, 1
      %p633 = scmp.eq.s32.totalorder %s91, 1
      %p634 = scmp.ne.s32.totalorder %s629, %s631
      %p635 = scmp.eq.s32.totalorder %s91, 0
      %p636 = por %p634, %p635
      %p637 = scmp.ne.s32.totalorder %s629, %s631
      %p638 = scmp.eq.s32.totalorder %s96, 1
      %p639 = por %p637, %p638
      %p640 = scmp.ne.s32.totalorder %s631, %s632
      %p641 = scmp.eq.s32.totalorder %s96, 0
      %p642 = por %p640, %p641
      %p643 = scmp.ne.s32.totalorder %s631, %s632
      %p644 = scmp.eq.s32.totalorder %s97, 1
      %p645 = por %p643, %p644
      %p647 = scmp.ne.s32.totalorder %s632, %s646
      %p648 = scmp.eq.s32.totalorder %s97, 0
      %p649 = por %p647, %p648
      %s651 = sadd.s32 %s650, 1
      %p654 = scmp.eq.s32.totalorder %s91, 1
      %p655 = scmp.ne.s32.totalorder %s650, %s652
      %p656 = scmp.eq.s32.totalorder %s91, 0
      %p657 = por %p655, %p656
      %p658 = scmp.ne.s32.totalorder %s650, %s652
      %p659 = scmp.eq.s32.totalorder %s96, 1
      %p660 = por %p658, %p659
      %p661 = scmp.ne.s32.totalorder %s652, %s653
      %p662 = scmp.eq.s32.totalorder %s96, 0
      %p663 = por %p661, %p662
      %p664 = scmp.ne.s32.totalorder %s652, %s653
      %p665 = scmp.eq.s32.totalorder %s97, 1
      %p666 = por %p664, %p665
      %p668 = scmp.ne.s32.totalorder %s653, %s667
      %p669 = scmp.eq.s32.totalorder %s97, 0
      %p670 = por %p668, %p669
      %s672 = sadd.s32 %s671, 1
      %p675 = scmp.eq.s32.totalorder %s91, 1
      %p676 = scmp.ne.s32.totalorder %s671, %s673
      %p677 = scmp.eq.s32.totalorder %s91, 0
      %p678 = por %p676, %p677
      %p679 = scmp.ne.s32.totalorder %s671, %s673
      %p680 = scmp.eq.s32.totalorder %s96, 1
      %p681 = por %p679, %p680
      %p682 = scmp.ne.s32.totalorder %s673, %s674
      %p683 = scmp.eq.s32.totalorder %s96, 0
      %p684 = por %p682, %p683
      %p685 = scmp.ne.s32.totalorder %s673, %s674
      %p686 = scmp.eq.s32.totalorder %s97, 1
      %p687 = por %p685, %p686
      %p689 = scmp.ne.s32.totalorder %s674, %s688
      %p690 = scmp.eq.s32.totalorder %s97, 0
      %p691 = por %p689, %p690
      %s693 = sadd.s32 %s692, 1
      %p696 = scmp.eq.s32.totalorder %s91, 1
      %p697 = scmp.ne.s32.totalorder %s692, %s694
      %p698 = scmp.eq.s32.totalorder %s91, 0
      %p699 = por %p697, %p698
      %p700 = scmp.ne.s32.totalorder %s692, %s694
      %p701 = scmp.eq.s32.totalorder %s96, 1
      %p702 = por %p700, %p701
      %p703 = scmp.ne.s32.totalorder %s694, %s695
      %p704 = scmp.eq.s32.totalorder %s96, 0
      %p705 = por %p703, %p704
      %p706 = scmp.ne.s32.totalorder %s694, %s695
      %p707 = scmp.eq.s32.totalorder %s97, 1
      %p708 = por %p706, %p707
      %p710 = scmp.ne.s32.totalorder %s695, %s709
      %p711 = scmp.eq.s32.totalorder %s97, 0
      %p712 = por %p710, %p711
      %s714 = sadd.s32 %s713, 1
      %p717 = scmp.eq.s32.totalorder %s91, 1
      %p718 = scmp.ne.s32.totalorder %s713, %s715
      %p719 = scmp.eq.s32.totalorder %s91, 0
      %p720 = por %p718, %p719
      %p721 = scmp.ne.s32.totalorder %s713, %s715
      %p722 = scmp.eq.s32.totalorder %s96, 1
      %p723 = por %p721, %p722
      %p724 = scmp.ne.s32.totalorder %s715, %s716
      %p725 = scmp.eq.s32.totalorder %s96, 0
      %p726 = por %p724, %p725
      %p727 = scmp.ne.s32.totalorder %s715, %s716
      %p728 = scmp.eq.s32.totalorder %s97, 1
      %p729 = por %p727, %p728
      %p731 = scmp.ne.s32.totalorder %s716, %s730
      %p732 = scmp.eq.s32.totalorder %s97, 0
      %p733 = por %p731, %p732
      %s735 = sadd.s32 %s734, 1
      %p738 = scmp.eq.s32.totalorder %s91, 1
      %p739 = scmp.ne.s32.totalorder %s734, %s736
      %p740 = scmp.eq.s32.totalorder %s91, 0
      %p741 = por %p739, %p740
      %p742 = scmp.ne.s32.totalorder %s734, %s736
      %p743 = scmp.eq.s32.totalorder %s96, 1
      %p744 = por %p742, %p743
      %p745 = scmp.ne.s32.totalorder %s736, %s737
      %p746 = scmp.eq.s32.totalorder %s96, 0
      %p747 = por %p745, %p746
      %p748 = scmp.ne.s32.totalorder %s736, %s737
      %p749 = scmp.eq.s32.totalorder %s97, 1
      %p750 = por %p748, %p749
      %p752 = scmp.ne.s32.totalorder %s737, %s751
      %p753 = scmp.eq.s32.totalorder %s97, 0
      %p754 = por %p752, %p753
      %s756 = sadd.s32 %s755, 1
      %p759 = scmp.eq.s32.totalorder %s91, 1
      %p760 = scmp.ne.s32.totalorder %s755, %s757
      %p761 = scmp.eq.s32.totalorder %s91, 0
      %p762 = por %p760, %p761
      %p763 = scmp.ne.s32.totalorder %s755, %s757
      %p764 = scmp.eq.s32.totalorder %s96, 1
      %p765 = por %p763, %p764
      %p766 = scmp.ne.s32.totalorder %s757, %s758
      %p767 = scmp.eq.s32.totalorder %s96, 0
      %p768 = por %p766, %p767
      %p769 = scmp.ne.s32.totalorder %s757, %s758
      %p770 = scmp.eq.s32.totalorder %s97, 1
      %p771 = por %p769, %p770
      %p773 = scmp.ne.s32.totalorder %s758, %s772
      %p774 = scmp.eq.s32.totalorder %s97, 0
      %p775 = por %p773, %p774
      %s777 = sadd.s32 %s776, 1
      %p780 = scmp.eq.s32.totalorder %s91, 1
      %p781 = scmp.ne.s32.totalorder %s776, %s778
      %p782 = scmp.eq.s32.totalorder %s91, 0
      %p783 = por %p781, %p782
      %p784 = scmp.ne.s32.totalorder %s776, %s778
      %p785 = scmp.eq.s32.totalorder %s96, 1
      %p786 = por %p784, %p785
      %p787 = scmp.ne.s32.totalorder %s778, %s779
      %p788 = scmp.eq.s32.totalorder %s96, 0
      %p789 = por %p787, %p788
      %p790 = scmp.ne.s32.totalorder %s778, %s779
      %p791 = scmp.eq.s32.totalorder %s97, 1
      %p792 = por %p790, %p791
      %p794 = scmp.ne.s32.totalorder %s779, %s793
      %p795 = scmp.eq.s32.totalorder %s97, 0
      %p796 = por %p794, %p795
      %s798 = sadd.s32 %s797, 1
      %p801 = scmp.eq.s32.totalorder %s91, 1
      %p802 = scmp.ne.s32.totalorder %s797, %s799
      %p803 = scmp.eq.s32.totalorder %s91, 0
      %p804 = por %p802, %p803
      %p805 = scmp.ne.s32.totalorder %s797, %s799
      %p806 = scmp.eq.s32.totalorder %s96, 1
      %p807 = por %p805, %p806
      %p808 = scmp.ne.s32.totalorder %s799, %s800
      %p809 = scmp.eq.s32.totalorder %s96, 0
      %p810 = por %p808, %p809
      %p811 = scmp.ne.s32.totalorder %s799, %s800
      %p812 = scmp.eq.s32.totalorder %s97, 1
      %p813 = por %p811, %p812
      %p815 = scmp.ne.s32.totalorder %s800, %s814
      %p816 = scmp.eq.s32.totalorder %s97, 0
      %p817 = por %p815, %p816
      %s819 = sadd.s32 %s818, 1
      %p822 = scmp.eq.s32.totalorder %s91, 1
      %p823 = scmp.ne.s32.totalorder %s818, %s820
      %p824 = scmp.eq.s32.totalorder %s91, 0
      %p825 = por %p823, %p824
      %p826 = scmp.ne.s32.totalorder %s818, %s820
      %p827 = scmp.eq.s32.totalorder %s96, 1
      %p828 = por %p826, %p827
      %p829 = scmp.ne.s32.totalorder %s820, %s821
      %p830 = scmp.eq.s32.totalorder %s96, 0
      %p831 = por %p829, %p830
      %p832 = scmp.ne.s32.totalorder %s820, %s821
      %p833 = scmp.eq.s32.totalorder %s97, 1
      %p834 = por %p832, %p833
      %p836 = scmp.ne.s32.totalorder %s821, %s835
      %p837 = scmp.eq.s32.totalorder %s97, 0
      %p838 = por %p836, %p837
      %s840 = sadd.s32 %s839, 1
      %p843 = scmp.eq.s32.totalorder %s91, 1
      %p844 = scmp.ne.s32.totalorder %s839, %s841
      %p845 = scmp.eq.s32.totalorder %s91, 0
      %p846 = por %p844, %p845
      %p847 = scmp.ne.s32.totalorder %s839, %s841
      %p848 = scmp.eq.s32.totalorder %s96, 1
      %p849 = por %p847, %p848
      %p850 = scmp.ne.s32.totalorder %s841, %s842
      %p851 = scmp.eq.s32.totalorder %s96, 0
      %p852 = por %p850, %p851
      %p853 = scmp.ne.s32.totalorder %s841, %s842
      %p854 = scmp.eq.s32.totalorder %s97, 1
      %p855 = por %p853, %p854
      %p857 = scmp.ne.s32.totalorder %s842, %s856
      %p858 = scmp.eq.s32.totalorder %s97, 0
      %p859 = por %p857, %p858
      %s861 = sadd.s32 %s860, 1
      %p864 = scmp.eq.s32.totalorder %s91, 1
      %p865 = scmp.ne.s32.totalorder %s860, %s862
      %p866 = scmp.eq.s32.totalorder %s91, 0
      %p867 = por %p865, %p866
      %p868 = scmp.ne.s32.totalorder %s860, %s862
      %p869 = scmp.eq.s32.totalorder %s96, 1
      %p870 = por %p868, %p869
      %p871 = scmp.ne.s32.totalorder %s862, %s863
      %p872 = scmp.eq.s32.totalorder %s96, 0
      %p873 = por %p871, %p872
      %p874 = scmp.ne.s32.totalorder %s862, %s863
      %p875 = scmp.eq.s32.totalorder %s97, 1
      %p876 = por %p874, %p875
      %p878 = scmp.ne.s32.totalorder %s863, %s877
      %p879 = scmp.eq.s32.totalorder %s97, 0
      %p880 = por %p878, %p879
      %s882 = sadd.s32 %s881, 1
      %p885 = scmp.eq.s32.totalorder %s91, 1
      %p886 = scmp.ne.s32.totalorder %s881, %s883
      %p887 = scmp.eq.s32.totalorder %s91, 0
      %p888 = por %p886, %p887
      %p889 = scmp.ne.s32.totalorder %s881, %s883
      %p890 = scmp.eq.s32.totalorder %s96, 1
      %p891 = por %p889, %p890
      %p892 = scmp.ne.s32.totalorder %s883, %s884
      %p893 = scmp.eq.s32.totalorder %s96, 0
      %p894 = por %p892, %p893
      %p895 = scmp.ne.s32.totalorder %s883, %s884
      %p896 = scmp.eq.s32.totalorder %s97, 1
      %p897 = por %p895, %p896
      %p899 = scmp.ne.s32.totalorder %s884, %s898
      %p900 = scmp.eq.s32.totalorder %s97, 0
      %p901 = por %p899, %p900
      %s903 = sadd.s32 %s902, 1
      %p906 = scmp.eq.s32.totalorder %s91, 1
      %p907 = scmp.ne.s32.totalorder %s902, %s904
      %p908 = scmp.eq.s32.totalorder %s91, 0
      %p909 = por %p907, %p908
      %p910 = scmp.ne.s32.totalorder %s902, %s904
      %p911 = scmp.eq.s32.totalorder %s96, 1
      %p912 = por %p910, %p911
      %p913 = scmp.ne.s32.totalorder %s904, %s905
      %p914 = scmp.eq.s32.totalorder %s96, 0
      %p915 = por %p913, %p914
      %p916 = scmp.ne.s32.totalorder %s904, %s905
      %p917 = scmp.eq.s32.totalorder %s97, 1
      %p918 = por %p916, %p917
      %p920 = scmp.ne.s32.totalorder %s905, %s919
      %p921 = scmp.eq.s32.totalorder %s97, 0
      %p922 = por %p920, %p921
      %s923 = ssub.s32 %s91, %s98
      %p924 = scmp.eq.s32.totalorder %s923, 0
      %s926 = sadd.s32 %s925, 1
      %s927 = scalar_select %p924, %s925, %s926
      %p930 = pneg %p924
      %p931 = scmp.eq.s32.totalorder %s91, 1
      %p932 = por %p930, %p931
      %p933 = scmp.ne.s32.totalorder %s925, %s928
      %p934 = scmp.eq.s32.totalorder %s91, 0
      %p935 = por %p933, %p934
      %p936 = scmp.ne.s32.totalorder %s925, %s928
      %p937 = scmp.eq.s32.totalorder %s96, 1
      %p938 = por %p936, %p937
      %p939 = scmp.ne.s32.totalorder %s928, %s929
      %p940 = scmp.eq.s32.totalorder %s96, 0
      %p941 = por %p939, %p940
      %p942 = scmp.ne.s32.totalorder %s928, %s929
      %p943 = scmp.eq.s32.totalorder %s97, 1
      %p944 = por %p942, %p943
      %p946 = scmp.ne.s32.totalorder %s929, %s945
      %p947 = scmp.eq.s32.totalorder %s97, 0
      %p948 = por %p946, %p947
      %s949 = ssub.s32 %s91, %s98
      %p950 = scmp.eq.s32.totalorder %s949, 0
      %s952 = sadd.s32 %s951, 1
      %s953 = scalar_select %p950, %s951, %s952
      %p956 = pneg %p950
      %p957 = scmp.eq.s32.totalorder %s91, 1
      %p958 = por %p956, %p957
      %p959 = scmp.ne.s32.totalorder %s951, %s954
      %p960 = scmp.eq.s32.totalorder %s91, 0
      %p961 = por %p959, %p960
      %p962 = scmp.ne.s32.totalorder %s951, %s954
      %p963 = scmp.eq.s32.totalorder %s96, 1
      %p964 = por %p962, %p963
      %p965 = scmp.ne.s32.totalorder %s954, %s955
      %p966 = scmp.eq.s32.totalorder %s96, 0
      %p967 = por %p965, %p966
      %p968 = scmp.ne.s32.totalorder %s954, %s955
      %p969 = scmp.eq.s32.totalorder %s97, 1
      %p970 = por %p968, %p969
      %p972 = scmp.ne.s32.totalorder %s955, %s971
      %p973 = scmp.eq.s32.totalorder %s97, 0
      %p974 = por %p972, %p973
      %p975 = scmp.le.s32.totalorder 1, %s91
      %p976 = scmp.lt.s32.totalorder %s91, 3
      %p977 = pnand %p975, %p976
      %p978 = pneg %p977
      // Predicated region
      $region9: #{swin_encoder_forward.1} parent=5 // pred_check
        _
      $region10: #{swin_encoder_forward.1} parent=5 // pred_check_branch
        %980 = sbr.rel (%p977) target = $region12
      $region11: #{swin_encoder_forward.1} parent=5 // pred_region
        %s981 = ssub.s32 %s91, 1
        // Predicated region
        $region13: #{swin_encoder_forward.1} parent=11 // pred_check
          %p982 = pneg %p138
        $region14: #{swin_encoder_forward.1} parent=11 // pred_check_branch
          %984 = sbr.rel (%p982) target = $region16
        $region15: #{swin_encoder_forward.1} parent=11 // pred_region
          _
        $region16: #{swin_encoder_forward.1} parent=11 // pred_fallthru
          _
        // Predicated region
        $region17: #{swin_encoder_forward.1} parent=11 // pred_check
          %p985 = pneg %p159
        $region18: #{swin_encoder_forward.1} parent=11 // pred_check_branch
          %987 = sbr.rel (%p985) target = $region20
        $region19: #{swin_encoder_forward.1} parent=11 // pred_region
          _
        $region20: #{swin_encoder_forward.1} parent=11 // pred_fallthru
          _
        // Predicated region
        $region21: #{swin_encoder_forward.1} parent=11 // pred_check
          %p988 = pneg %p180
        $region22: #{swin_encoder_forward.1} parent=11 // pred_check_branch
          %990 = sbr.rel (%p988) target = $region24
        $region23: #{swin_encoder_forward.1} parent=11 // pred_region
          _
        $region24: #{swin_encoder_forward.1} parent=11 // pred_fallthru
          _
        // Predicated region
        $region25: #{swin_encoder_forward.1} parent=11 // pred_check
          %p991 = pneg %p201
        $region26: #{swin_encoder_forward.1} parent=11 // pred_check_branch
          %993 = sbr.rel (%p991) target = $region28
        $region27: #{swin_encoder_forward.1} parent=11 // pred_region
          _
        $region28: #{swin_encoder_forward.1} parent=11 // pred_fallthru
          _
        // Predicated region
        $region29: #{swin_encoder_forward.1} parent=11 // pred_check
          %p994 = pneg %p222
        $region30: #{swin_encoder_forward.1} parent=11 // pred_check_branch
          %996 = sbr.rel (%p994) target = $region32
        $region31: #{swin_encoder_forward.1} parent=11 // pred_region
          _
        $region32: #{swin_encoder_forward.1} parent=11 // pred_fallthru
          _
        // Predicated region
        $region33: #{swin_encoder_forward.1} parent=11 // pred_check
          %p997 = pneg %p243
        $region34: #{swin_encoder_forward.1} parent=11 // pred_check_branch
          %999 = sbr.rel (%p997) target = $region36
        $region35: #{swin_encoder_forward.1} parent=11 // pred_region
          _
        $region36: #{swin_encoder_forward.1} parent=11 // pred_fallthru
          _
        // Predicated region
        $region37: #{swin_encoder_forward.1} parent=11 // pred_check
          %p1000 = pneg %p264
        $region38: #{swin_encoder_forward.1} parent=11 // pred_check_branch
          %1002 = sbr.rel (%p1000) target = $region40
        $region39: #{swin_encoder_forward.1} parent=11 // pred_region
          _
        $region40: #{swin_encoder_forward.1} parent=11 // pred_fallthru
          _
        // Predicated region
        $region41: #{swin_encoder_forward.1} parent=11 // pred_check
          %p1003 = pneg %p285
        $region42: #{swin_encoder_forward.1} parent=11 // pred_check_branch
          %1005 = sbr.rel (%p1003) target = $region44
        $region43: #{swin_encoder_forward.1} parent=11 // pred_region
          _
        $region44: #{swin_encoder_forward.1} parent=11 // pred_fallthru
          _
        // Predicated region
        $region45: #{swin_encoder_forward.1} parent=11 // pred_check
          %p1006 = pneg %p306
        $region46: #{swin_encoder_forward.1} parent=11 // pred_check_branch
          %1008 = sbr.rel (%p1006) target = $region48
        $region47: #{swin_encoder_forward.1} parent=11 // pred_region
          _
        $region48: #{swin_encoder_forward.1} parent=11 // pred_fallthru
          _
        // Predicated region
        $region49: #{swin_encoder_forward.1} parent=11 // pred_check
          %p1009 = pneg %p327
        $region50: #{swin_encoder_forward.1} parent=11 // pred_check_branch
          %1011 = sbr.rel (%p1009) target = $region52
        $region51: #{swin_encoder_forward.1} parent=11 // pred_region
          _
        $region52: #{swin_encoder_forward.1} parent=11 // pred_fallthru
          _
        // Predicated region
        $region53: #{swin_encoder_forward.1} parent=11 // pred_check
          %p1012 = pneg %p348
        $region54: #{swin_encoder_forward.1} parent=11 // pred_check_branch
          %1014 = sbr.rel (%p1012) target = $region56
        $region55: #{swin_encoder_forward.1} parent=11 // pred_region
          _
        $region56: #{swin_encoder_forward.1} parent=11 // pred_fallthru
          _
        // Predicated region
        $region57: #{swin_encoder_forward.1} parent=11 // pred_check
          %p1015 = pneg %p369
        $region58: #{swin_encoder_forward.1} parent=11 // pred_check_branch
          %1017 = sbr.rel (%p1015) target = $region60
        $region59: #{swin_encoder_forward.1} parent=11 // pred_region
          _
        $region60: #{swin_encoder_forward.1} parent=11 // pred_fallthru
          _
        // Predicated region
        $region61: #{swin_encoder_forward.1} parent=11 // pred_check
          %p1018 = pneg %p390
        $region62: #{swin_encoder_forward.1} parent=11 // pred_check_branch
          %1020 = sbr.rel (%p1018) target = $region64
        $region63: #{swin_encoder_forward.1} parent=11 // pred_region
          _
        $region64: #{swin_encoder_forward.1} parent=11 // pred_fallthru
          _
        // Predicated region
        $region65: #{swin_encoder_forward.1} parent=11 // pred_check
          %p1021 = pneg %p411
        $region66: #{swin_encoder_forward.1} parent=11 // pred_check_branch
          %1023 = sbr.rel (%p1021) target = $region68
        $region67: #{swin_encoder_forward.1} parent=11 // pred_region
          _
        $region68: #{swin_encoder_forward.1} parent=11 // pred_fallthru
          _
        // Predicated region
        $region69: #{swin_encoder_forward.1} parent=11 // pred_check
          %p1024 = pneg %p432
        $region70: #{swin_encoder_forward.1} parent=11 // pred_check_branch
          %1026 = sbr.rel (%p1024) target = $region72
        $region71: #{swin_encoder_forward.1} parent=11 // pred_region
          _
        $region72: #{swin_encoder_forward.1} parent=11 // pred_fallthru
          _
        // Predicated region
        $region73: #{swin_encoder_forward.1} parent=11 // pred_check
          %p1027 = pneg %p453
        $region74: #{swin_encoder_forward.1} parent=11 // pred_check_branch
          %1029 = sbr.rel (%p1027) target = $region76
        $region75: #{swin_encoder_forward.1} parent=11 // pred_region
          _
        $region76: #{swin_encoder_forward.1} parent=11 // pred_fallthru
          _
        // Predicated region
        $region77: #{swin_encoder_forward.1} parent=11 // pred_check
          %p1030 = pneg %p474
        $region78: #{swin_encoder_forward.1} parent=11 // pred_check_branch
          %1032 = sbr.rel (%p1030) target = $region80
        $region79: #{swin_encoder_forward.1} parent=11 // pred_region
          _
        $region80: #{swin_encoder_forward.1} parent=11 // pred_fallthru
          _
        // Predicated region
        $region81: #{swin_encoder_forward.1} parent=11 // pred_check
          %p1033 = pneg %p495
        $region82: #{swin_encoder_forward.1} parent=11 // pred_check_branch
          %1035 = sbr.rel (%p1033) target = $region84
        $region83: #{swin_encoder_forward.1} parent=11 // pred_region
          _
        $region84: #{swin_encoder_forward.1} parent=11 // pred_fallthru
          _
        // Predicated region
        $region85: #{swin_encoder_forward.1} parent=11 // pred_check
          %p1036 = pneg %p516
        $region86: #{swin_encoder_forward.1} parent=11 // pred_check_branch
          %1038 = sbr.rel (%p1036) target = $region88
        $region87: #{swin_encoder_forward.1} parent=11 // pred_region
          _
        $region88: #{swin_encoder_forward.1} parent=11 // pred_fallthru
          _
        // Predicated region
        $region89: #{swin_encoder_forward.1} parent=11 // pred_check
          %p1039 = pneg %p537
        $region90: #{swin_encoder_forward.1} parent=11 // pred_check_branch
          %1041 = sbr.rel (%p1039) target = $region92
        $region91: #{swin_encoder_forward.1} parent=11 // pred_region
          _
        $region92: #{swin_encoder_forward.1} parent=11 // pred_fallthru
          _
        // Predicated region
        $region93: #{swin_encoder_forward.1} parent=11 // pred_check
          %p1042 = pneg %p558
        $region94: #{swin_encoder_forward.1} parent=11 // pred_check_branch
          %1044 = sbr.rel (%p1042) target = $region96
        $region95: #{swin_encoder_forward.1} parent=11 // pred_region
          _
        $region96: #{swin_encoder_forward.1} parent=11 // pred_fallthru
          _
        // Predicated region
        $region97: #{swin_encoder_forward.1} parent=11 // pred_check
          %p1045 = pneg %p579
        $region98: #{swin_encoder_forward.1} parent=11 // pred_check_branch
          %1047 = sbr.rel (%p1045) target = $region100
        $region99: #{swin_encoder_forward.1} parent=11 // pred_region
          _
        $region100: #{swin_encoder_forward.1} parent=11 // pred_fallthru
          _
        // Predicated region
        $region101: #{swin_encoder_forward.1} parent=11 // pred_check
          %p1048 = pneg %p600
        $region102: #{swin_encoder_forward.1} parent=11 // pred_check_branch
          %1050 = sbr.rel (%p1048) target = $region104
        $region103: #{swin_encoder_forward.1} parent=11 // pred_region
          _
        $region104: #{swin_encoder_forward.1} parent=11 // pred_fallthru
          _
        // Predicated region
        $region105: #{swin_encoder_forward.1} parent=11 // pred_check
          %p1051 = pneg %p621
        $region106: #{swin_encoder_forward.1} parent=11 // pred_check_branch
          %1053 = sbr.rel (%p1051) target = $region108
        $region107: #{swin_encoder_forward.1} parent=11 // pred_region
          _
        $region108: #{swin_encoder_forward.1} parent=11 // pred_fallthru
          _
        // Predicated region
        $region109: #{swin_encoder_forward.1} parent=11 // pred_check
          %p1054 = pneg %p642
        $region110: #{swin_encoder_forward.1} parent=11 // pred_check_branch
          %1056 = sbr.rel (%p1054) target = $region112
        $region111: #{swin_encoder_forward.1} parent=11 // pred_region
          _
        $region112: #{swin_encoder_forward.1} parent=11 // pred_fallthru
          _
        // Predicated region
        $region113: #{swin_encoder_forward.1} parent=11 // pred_check
          %p1057 = pneg %p663
        $region114: #{swin_encoder_forward.1} parent=11 // pred_check_branch
          %1059 = sbr.rel (%p1057) target = $region116
        $region115: #{swin_encoder_forward.1} parent=11 // pred_region
          _
        $region116: #{swin_encoder_forward.1} parent=11 // pred_fallthru
          _
        // Predicated region
        $region117: #{swin_encoder_forward.1} parent=11 // pred_check
          %p1060 = pneg %p684
        $region118: #{swin_encoder_forward.1} parent=11 // pred_check_branch
          %1062 = sbr.rel (%p1060) target = $region120
        $region119: #{swin_encoder_forward.1} parent=11 // pred_region
          _
        $region120: #{swin_encoder_forward.1} parent=11 // pred_fallthru
          _
        // Predicated region
        $region121: #{swin_encoder_forward.1} parent=11 // pred_check
          %p1063 = pneg %p705
        $region122: #{swin_encoder_forward.1} parent=11 // pred_check_branch
          %1065 = sbr.rel (%p1063) target = $region124
        $region123: #{swin_encoder_forward.1} parent=11 // pred_region
          _
        $region124: #{swin_encoder_forward.1} parent=11 // pred_fallthru
          _
        // Predicated region
        $region125: #{swin_encoder_forward.1} parent=11 // pred_check
          %p1066 = pneg %p726
        $region126: #{swin_encoder_forward.1} parent=11 // pred_check_branch
          %1068 = sbr.rel (%p1066) target = $region128
        $region127: #{swin_encoder_forward.1} parent=11 // pred_region
          _
        $region128: #{swin_encoder_forward.1} parent=11 // pred_fallthru
          _
        // Predicated region
        $region129: #{swin_encoder_forward.1} parent=11 // pred_check
          %p1069 = pneg %p747
        $region130: #{swin_encoder_forward.1} parent=11 // pred_check_branch
          %1071 = sbr.rel (%p1069) target = $region132
        $region131: #{swin_encoder_forward.1} parent=11 // pred_region
          _
        $region132: #{swin_encoder_forward.1} parent=11 // pred_fallthru
          _
        // Predicated region
        $region133: #{swin_encoder_forward.1} parent=11 // pred_check
          %p1072 = pneg %p768
        $region134: #{swin_encoder_forward.1} parent=11 // pred_check_branch
          %1074 = sbr.rel (%p1072) target = $region136
        $region135: #{swin_encoder_forward.1} parent=11 // pred_region
          _
        $region136: #{swin_encoder_forward.1} parent=11 // pred_fallthru
          _
        // Predicated region
        $region137: #{swin_encoder_forward.1} parent=11 // pred_check
          %p1075 = pneg %p789
        $region138: #{swin_encoder_forward.1} parent=11 // pred_check_branch
          %1077 = sbr.rel (%p1075) target = $region140
        $region139: #{swin_encoder_forward.1} parent=11 // pred_region
          _
        $region140: #{swin_encoder_forward.1} parent=11 // pred_fallthru
          _
        // Predicated region
        $region141: #{swin_encoder_forward.1} parent=11 // pred_check
          %p1078 = pneg %p810
        $region142: #{swin_encoder_forward.1} parent=11 // pred_check_branch
          %1080 = sbr.rel (%p1078) target = $region144
        $region143: #{swin_encoder_forward.1} parent=11 // pred_region
          _
        $region144: #{swin_encoder_forward.1} parent=11 // pred_fallthru
          _
        // Predicated region
        $region145: #{swin_encoder_forward.1} parent=11 // pred_check
          %p1081 = pneg %p831
        $region146: #{swin_encoder_forward.1} parent=11 // pred_check_branch
          %1083 = sbr.rel (%p1081) target = $region148
        $region147: #{swin_encoder_forward.1} parent=11 // pred_region
          _
        $region148: #{swin_encoder_forward.1} parent=11 // pred_fallthru
          _
        // Predicated region
        $region149: #{swin_encoder_forward.1} parent=11 // pred_check
          %p1084 = pneg %p852
        $region150: #{swin_encoder_forward.1} parent=11 // pred_check_branch
          %1086 = sbr.rel (%p1084) target = $region152
        $region151: #{swin_encoder_forward.1} parent=11 // pred_region
          _
        $region152: #{swin_encoder_forward.1} parent=11 // pred_fallthru
          _
        // Predicated region
        $region153: #{swin_encoder_forward.1} parent=11 // pred_check
          %p1087 = pneg %p873
        $region154: #{swin_encoder_forward.1} parent=11 // pred_check_branch
          %1089 = sbr.rel (%p1087) target = $region156
        $region155: #{swin_encoder_forward.1} parent=11 // pred_region
          _
        $region156: #{swin_encoder_forward.1} parent=11 // pred_fallthru
          _
        // Predicated region
        $region157: #{swin_encoder_forward.1} parent=11 // pred_check
          %p1090 = pneg %p894
        $region158: #{swin_encoder_forward.1} parent=11 // pred_check_branch
          %1092 = sbr.rel (%p1090) target = $region160
        $region159: #{swin_encoder_forward.1} parent=11 // pred_region
          _
        $region160: #{swin_encoder_forward.1} parent=11 // pred_fallthru
          _
        // Predicated region
        $region161: #{swin_encoder_forward.1} parent=11 // pred_check
          %p1093 = pneg %p915
        $region162: #{swin_encoder_forward.1} parent=11 // pred_check_branch
          %1095 = sbr.rel (%p1093) target = $region164
        $region163: #{swin_encoder_forward.1} parent=11 // pred_region
          _
        $region164: #{swin_encoder_forward.1} parent=11 // pred_fallthru
          _
      $region12: #{swin_encoder_forward.1} parent=5 // pred_fallthru
        _
      %p1096 = scmp.lt.s32.totalorder %s91, 2
      // Predicated region
      $region165: #{swin_encoder_forward.1} parent=5 // pred_check
        %p1097 = pneg %p1096
      $region166: #{swin_encoder_forward.1} parent=5 // pred_check_branch
        %1099 = sbr.rel (%p1097) target = $region168
      $region167: #{swin_encoder_forward.1} parent=5 // pred_region
        // Predicated region
        $region169: #{swin_encoder_forward.1} parent=167 // pred_check
          %p1100 = pneg %p111
        $region170: #{swin_encoder_forward.1} parent=167 // pred_check_branch
          %1102 = sbr.rel (%p1100) target = $region172
        $region171: #{swin_encoder_forward.1} parent=167 // pred_region
          %s1103 = smul.u32 8, %s91
          %p1104 = scmp.lt.s32.totalorder %s1103, 15
          %s1105 = scalar_select %p1104, %s1103, 15
          %s1106 = smul.addr %s1105, 8
          %s1107 = scalar_lea.vmem %s1, %s1106
          %s1108 = smul.u32 8, %s91
        $region172: #{swin_encoder_forward.1} parent=167 // pred_fallthru
          _
      $region168: #{swin_encoder_forward.1} parent=5 // pred_fallthru
        _
      %p1109 = scmp.le.s32.totalorder 1, %s91
      %p1110 = scmp.lt.s32.totalorder %s91, 3
      %p1111 = pnand %p1109, %p1110
      %p1112 = pneg %p1111
      // Predicated region
      $region173: #{swin_encoder_forward.1} parent=5 // pred_check
        _
      $region174: #{swin_encoder_forward.1} parent=5 // pred_check_branch
        %1114 = sbr.rel (%p1111) target = $region176
      $region175: #{swin_encoder_forward.1} parent=5 // pred_region
        %s1115 = ssub.s32 %s91, 1
        %s1116 = smul.u32 8, %s96
        %p1117 = scmp.lt.s32.totalorder %s1116, 15
        %s1118 = scalar_select %p1117, %s1116, 15
        %s1119 = smul.addr %s1118, 8
        %s1120 = scalar_lea.vmem %s1, %s1119
        %p1121 = pneg %p117
        %p1122 = pneg %p114
        %p1123 = pneg %p138
        %p1124 = pneg %p135
        %p1125 = pneg %p159
        %p1126 = pneg %p156
        %p1127 = pneg %p180
        %p1128 = pneg %p177
        %p1129 = pneg %p201
        %p1130 = pneg %p198
        %p1131 = pneg %p222
        %p1132 = pneg %p219
        %p1133 = pneg %p243
        %p1134 = pneg %p240
        %p1135 = pneg %p264
        %p1136 = pneg %p261
        %p1137 = pneg %p285
        %p1138 = pneg %p282
        %p1139 = pneg %p306
        %p1140 = pneg %p303
        %p1141 = pneg %p327
        %p1142 = pneg %p324
        %p1143 = pneg %p348
        %p1144 = pneg %p345
        %p1145 = pneg %p369
        %p1146 = pneg %p366
        %p1147 = pneg %p390
        %p1148 = pneg %p387
        %p1149 = pneg %p411
        %p1150 = pneg %p408
        %p1151 = pneg %p432
        %p1152 = pneg %p429
        %p1153 = pneg %p453
        %p1154 = pneg %p450
        %p1155 = pneg %p474
        %p1156 = pneg %p471
        %p1157 = pneg %p495
        %p1158 = pneg %p492
        %p1159 = pneg %p516
        %p1160 = pneg %p513
        %p1161 = pneg %p537
        %p1162 = pneg %p534
        %p1163 = pneg %p558
        %p1164 = pneg %p555
        %p1165 = pneg %p579
        %p1166 = pneg %p576
        %p1167 = pneg %p600
        %p1168 = pneg %p597
        %p1169 = pneg %p621
        %p1170 = pneg %p618
        %p1171 = pneg %p642
        %p1172 = pneg %p639
        %p1173 = pneg %p663
        %p1174 = pneg %p660
        %p1175 = pneg %p684
        %p1176 = pneg %p681
        %p1177 = pneg %p705
        %p1178 = pneg %p702
        %p1179 = pneg %p726
        %p1180 = pneg %p723
        %p1181 = pneg %p747
        %p1182 = pneg %p744
        %p1183 = pneg %p768
        %p1184 = pneg %p765
        %p1185 = pneg %p789
        %p1186 = pneg %p786
        %p1187 = pneg %p810
        %p1188 = pneg %p807
        %p1189 = pneg %p831
        %p1190 = pneg %p828
        %p1191 = pneg %p852
        %p1192 = pneg %p849
        %p1193 = pneg %p873
        %p1194 = pneg %p870
        %p1195 = pneg %p894
        %p1196 = pneg %p891
        %p1197 = pneg %p915
        %p1198 = pneg %p912
        %p1199 = pneg %p941
        %p1200 = pneg %p938
        %s1201 = smul.u32 8, %s96
        %p1202 = scmp.lt.s32.totalorder %s1201, 15
        %s1203 = scalar_select %p1202, %s1201, 15
        %s1204 = smul.addr %s1203, 8
        %s1205 = scalar_lea.vmem %s79, %s1204
        %p1206 = pneg %p967
        %p1207 = pneg %p964
        %s1208 = sand.u32 %s954, 1
        %s1209 = scalar_lea.sflag [#allocation3], %s1208
        %s1210 = sand.u32 %s954, 1
        %s1211 = smul.addr %s1210, 16
        %s1212 = scalar_lea.vmem [#allocation2], %s1211
        %s1213 = smul.u32 8, %s96
        %p1214 = scmp.lt.s32.totalorder %s1213, 15
        %s1215 = scalar_select %p1214, %s1213, 15
        %s1216 = smul.addr %s1215, 8
        %s1217 = scalar_lea.vmem %s1, %s1216
        %s1218 = smul.u32 8, %s96
        %s1219 = smul.u32 8, %s96
        %p1220 = scmp.lt.s32.totalorder %s1219, 15
        %s1221 = scalar_select %p1220, %s1219, 15
        %s1222 = smul.addr %s1221, 8
        %s1223 = scalar_lea.vmem %s79, %s1222
        %s1224 = smul.u32 8, %s96
        %s1225 = smul.u32 2, %s96
        %v1227 = vld [vmem:[%s3] sm:$0xf]
        %v1228 = vld [vmem:[%s3 + $0x4] sm:$0xf]
        %v1229 = vld [vmem:[%s3 + $0x8] sm:$0xf]
        %v1230 = vld [vmem:[%s3 + $0xc] sm:$0xf]
        %v1231 = vld [vmem:[%s3 + $0x10] sm:$0xf]
        %v1232 = vld [vmem:[%s3 + $0x14] sm:$0xf]
        %v1233 = vld [vmem:[%s5] sm:$0x1]
        %v1234 = vld [vmem:[%s7] sm:$0x1]
        %v1235 = vld [vmem:[%s9] sm:$0x1]
        %v1236 = vld [vmem:[%s11] sm:$0x1]
        %v1237 = vld [vmem:[%s13] sm:$0x1]
        %v1238 = vld [vmem:[%s15] sm:$0xf]
        %v1239 = vld [vmem:[%s15 + $0x4] sm:$0xf]
        %v1240 = vld [vmem:[%s17] sm:$0x1]
        %v1241 = vld [vmem:[%s19] sm:$0xff]
        %v1242 = vld [vmem:[%s19 + $0x8] sm:$0xff]
        %v1243 = vld [vmem:[%s19 + $0x10] sm:$0xff]
        %v1244 = vld [vmem:[%s19 + $0x18] sm:$0xff]
        %v1245 = vld [vmem:[%s21] sm:$0xf]
        %v1246 = vld [vmem:[%s21 + $0x4] sm:$0xf]
        %v1247 = vld [vmem:[%s23] sm:$0x1]
        %v1248 = vld [vmem:[%s25] sm:$0x1]
        %v1249 = vld [vmem:[%s27] sm:$0x1]
        %v1250 = vld [vmem:[%s29] sm:$0xf]
        %v1251 = vld [vmem:[%s29 + $0x4] sm:$0xf]
        %v1252 = vld [vmem:[%s31] sm:$0x1]
        %v1253 = vld [vmem:[%s33] sm:$0xf]
        %v1254 = vld [vmem:[%s33 + $0x4] sm:$0xf]
        %v1255 = vld [vmem:[%s33 + $0x8] sm:$0xf]
        %v1256 = vld [vmem:[%s33 + $0xc] sm:$0xf]
        %v1257 = vld [vmem:[%s35] sm:$0x1]
        %v1258 = vld [vmem:[%s37] sm:$0xf]
        %v1259 = vld [vmem:[%s37 + $0x4] sm:$0xf]
        %v1260 = vld [vmem:[%s39] sm:$0x1]
        %v1261 = vld [vmem:[%s41] sm:$0xf]
        %v1262 = vld [vmem:[%s41 + $0x4] sm:$0xf]
        %v1263 = vld [vmem:[%s41 + $0x8] sm:$0xf]
        %v1264 = vld [vmem:[%s41 + $0xc] sm:$0xf]
        %v1265 = vld [vmem:[%s41 + $0x10] sm:$0xf]
        %v1266 = vld [vmem:[%s41 + $0x14] sm:$0xf]
        %v1267 = vld [vmem:[%s41 + $0x18] sm:$0xf]
        %v1268 = vld [vmem:[%s41 + $0x1c] sm:$0xf]
        %v1269 = vld [vmem:[%s43] sm:$0x1]
        %v1270 = vld [vmem:[%s45] sm:$0x1]
        %v1271 = vld [vmem:[%s47] sm:$0xf]
        %v1272 = vld [vmem:[%s47 + $0x4] sm:$0xf]
        %v1273 = vld [vmem:[%s47 + $0x8] sm:$0xf]
        %v1274 = vld [vmem:[%s47 + $0xc] sm:$0xf]
        %v1275 = vld [vmem:[%s47 + $0x10] sm:$0xf]
        %v1276 = vld [vmem:[%s47 + $0x14] sm:$0xf]
        %v1277 = vld [vmem:[%s47 + $0x18] sm:$0xf]
        %v1278 = vld [vmem:[%s47 + $0x1c] sm:$0xf]
        %v1279 = vld [vmem:[%s49] sm:$0x1]
        %v1280 = vld [vmem:[%s51] sm:$0x1]
        %v1281 = vld [vmem:[%s53] sm:$0xf]
        %v1282 = vld [vmem:[%s53 + $0x4] sm:$0xf]
        %v1283 = vld [vmem:[%s53 + $0x8] sm:$0xf]
        %v1284 = vld [vmem:[%s53 + $0xc] sm:$0xf]
        %v1285 = vld [vmem:[%s55] sm:$0x1]
        %v1286 = vld [vmem:[%s57] sm:$0xff]
        %v1287 = vld [vmem:[%s57 + $0x8] sm:$0xff]
        %v1288 = vld [vmem:[%s57 + $0x10] sm:$0xff]
        %v1289 = vld [vmem:[%s57 + $0x18] sm:$0xff]
        %v1290 = vld [vmem:[%s57 + $0x20] sm:$0xff]
        %v1291 = vld [vmem:[%s57 + $0x28] sm:$0xff]
        %v1292 = vld [vmem:[%s57 + $0x30] sm:$0xff]
        %v1293 = vld [vmem:[%s57 + $0x38] sm:$0xff]
        %v1294 = vld [vmem:[%s59] sm:$0xf]
        %v1295 = vld [vmem:[%s59 + $0x4] sm:$0xf]
        %v1296 = vld [vmem:[%s59 + $0x8] sm:$0xf]
        %v1297 = vld [vmem:[%s59 + $0xc] sm:$0xf]
        %v1298 = vld [vmem:[%s61] sm:$0x1]
        %v1299 = vld [vmem:[%s63] sm:$0x1]
        %v1300 = vld [vmem:[%s65] sm:$0x1]
        %v1301 = vld [vmem:[%s67] sm:$0xf]
        %v1302 = vld [vmem:[%s67 + $0x4] sm:$0xf]
        %v1303 = vld [vmem:[%s67 + $0x8] sm:$0xf]
        %v1304 = vld [vmem:[%s67 + $0xc] sm:$0xf]
        %v1305 = vld [vmem:[%s69] sm:$0x1]
        %v1306 = vld [vmem:[%s71] sm:$0xf]
        %v1307 = vld [vmem:[%s71 + $0x4] sm:$0xf]
        %v1308 = vld [vmem:[%s71 + $0x8] sm:$0xf]
        %v1309 = vld [vmem:[%s71 + $0xc] sm:$0xf]
        %v1310 = vld [vmem:[%s71 + $0x10] sm:$0xf]
        %v1311 = vld [vmem:[%s71 + $0x14] sm:$0xf]
        %v1312 = vld [vmem:[%s71 + $0x18] sm:$0xf]
        %v1313 = vld [vmem:[%s71 + $0x1c] sm:$0xf]
        %v1314 = vld [vmem:[%s73] sm:$0x1]
        %v1315 = vld [vmem:[%s75] sm:$0xf]
        %v1316 = vld [vmem:[%s75 + $0x4] sm:$0xf]
        %v1317 = vld [vmem:[%s75 + $0x8] sm:$0xf]
        %v1318 = vld [vmem:[%s75 + $0xc] sm:$0xf]
        %v1319 = vld [vmem:[%s77] sm:$0x1]
        %v1320 = vld [vmem:[%s1217] sm:$0xff]
        %v1321 = vld [vmem:[%s1217 + $0x8] sm:$0xff]
        %v1322 = vld [vmem:[%s1217 + $0x10] sm:$0xff]
        %v1323 = vld [vmem:[%s1217 + $0x18] sm:$0xff]
        %v1324 = vld [vmem:[%s1217 + $0x20] sm:$0xff]
        %v1325 = vld [vmem:[%s1217 + $0x28] sm:$0xff]
        %v1326 = vld [vmem:[%s1217 + $0x30] sm:$0xff]
        %v1327 = vld [vmem:[%s1217 + $0x38] sm:$0xff]
        %v1328 = vpack.c.bf16 %v1321, %v1320
        %v1329 = vpack.c.bf16 %v1323, %v1322
        %v1330 = vpack.c.bf16 %v1325, %v1324
        %v1331 = vpack.c.bf16 %v1327, %v1326
        %v1333 = vlaneseq
        %v1334 = vshrl.u32 %v1333, 7
        %v1335 = vsub.s32 0, %v1334
        %v1336 = vrot.slane %v1233, %v1335
        %v1344 = vunpack.c.l.b16 %v1227
        %v1345 = vunpack.c.l.b16 %v1228
        %v1346 = vunpack.c.l.b16 %v1229
        %v1347 = vunpack.c.l.b16 %v1230
        %v1348 = vunpack.c.l.b16 %v1231
        %v1349 = vunpack.c.l.b16 %v1232
        %v1350 = vpack.c.b16 %v1345, %v1344
        %v1351 = vpack.c.b16 %v1347, %v1346
        %v1352 = vpack.c.b16 %v1349, %v1348
        %vm1356 = vcmask 392192
        %v1358 = vsel %vm1356, %v1328, 0
        %v1361 = vsel %vm1356, %v1329, 0
        %v1364 = vsel %vm1356, %v1330, 0
        %v1367 = vsel %vm1356, %v1331, 0
        %1369 = vmatprep.subr.bf16.mxu0 0
        %1370 = vmatpush1.bf16.msra.mxu0 %v1350
        %1371 = vmatprep.subr.bf16.mxu0 0
        %1372 = vmatpush1.bf16.msra.mxu0 %v1351
        %1373 = vmatprep.subr.bf16.mxu0 0
        %1374 = vmatpush1.bf16.msra.mxu0 %v1352
        %1375 = vmatprep.subr.bf16.mxu0 0
        %1376 = vmatpush1.bf16.msra.mxu0 0
        %1377 = vmatprep.subr.bf16.mxu0 0
        %1378 = vmatpush1.bf16.msra.mxu0 0
        %1379 = vmatprep.subr.bf16.mxu0 0
        %1380 = vmatpush1.bf16.msra.mxu0 0
        %1381 = vmatprep.subr.bf16.mxu0 0
        %1382 = vmatpush1.bf16.msra.mxu0 0
        %1383 = vmatprep.subr.bf16.mxu0 0
        %1384 = vmatpush1.bf16.msra.mxu0 0
        %1385 = vmatprep.subr.bf16.mxu0 0
        %1386 = vmatpush1.bf16.msra.mxu0 0
        %1387 = vmatprep.subr.bf16.mxu0 0
        %1388 = vmatpush1.bf16.msra.mxu0 0
        %1389 = vmatprep.subr.bf16.mxu0 0
        %1390 = vmatpush1.bf16.msra.mxu0 0
        %1391 = vmatprep.subr.bf16.mxu0 0
        %1392 = vmatpush1.bf16.msra.mxu0 0
        %1393 = vmatprep.subr.bf16.mxu0 0
        %1394 = vmatpush1.bf16.msra.mxu0 0
        %1395 = vmatprep.subr.bf16.mxu0 0
        %1396 = vmatpush1.bf16.msra.mxu0 0
        %1397 = vmatprep.subr.bf16.mxu0 0
        %1398 = vmatpush1.bf16.msra.mxu0 0
        %1399 = vmatprep.subr.bf16.mxu0 0
        %1400 = vmatpush1.bf16.msra.mxu0 0
        %1401 = vmatprep.mubr.bf16.mxu0 0
        %1402 = vmatmul.mubr.bf16.gmra.mrb[0].mxu0 %v1358
        %v1403 = vpop.f32.mrb[0].mxu0
        %v1404 = vadd.f32 %v1336, %v1403
        %v1405 = vpop.f32.mrb[0].mxu0
        %v1406 = vpop.f32.mrb[0].mxu0
        %v1407 = vadd.f32 %v1336, %v1406
        %v1408 = vpop.f32.mrb[0].mxu0
        %1409 = vmatprep.mubr.bf16.mxu0 0
        %1410 = vmatmul.mubr.bf16.gmra.mrb[0].mxu0 %v1361
        %v1411 = vpop.f32.mrb[0].mxu0
        %v1412 = vadd.f32 %v1336, %v1411
        %v1413 = vpop.f32.mrb[0].mxu0
        %v1414 = vpop.f32.mrb[0].mxu0
        %v1415 = vadd.f32 %v1336, %v1414
        %v1416 = vpop.f32.mrb[0].mxu0
        %1417 = vmatprep.mubr.bf16.mxu0 0
        %1418 = vmatmul.mubr.bf16.gmra.mrb[0].mxu0 %v1364
        %v1419 = vpop.f32.mrb[0].mxu0
        %v1420 = vadd.f32 %v1336, %v1419
        %v1421 = vpop.f32.mrb[0].mxu0
        %v1422 = vpop.f32.mrb[0].mxu0
        %v1423 = vadd.f32 %v1336, %v1422
        %v1424 = vpop.f32.mrb[0].mxu0
        %1425 = vmatprep.mubr.bf16.mxu0 0
        %1426 = vmatmul.mubr.bf16.gmra.mrb[0].mxu0 %v1367
        %v1427 = vpop.f32.mrb[0].mxu0
        %v1428 = vadd.f32 %v1336, %v1427
        %v1429 = vpop.f32.mrb[0].mxu0
        %v1430 = vpop.f32.mrb[0].mxu0
        %v1431 = vadd.f32 %v1336, %v1430
        %v1432 = vpop.f32.mrb[0].mxu0
        %1433 = vdwg.mxu0
        %vm1434 = vcmask 130048
        %v1435 = vsel %vm1434, %v1404, 0.0
        %1436 = vadd.xlane.f32.xlu0 %v1435
        %v1437 = vpop.xlane.xlu0 %1436
        %v1438 = vsel %vm1434, %v1407, 0.0
        %1439 = vadd.xlane.f32.xlu0 %v1438
        %v1440 = vpop.xlane.xlu0 %1439
        %v1441 = vsel %vm1434, %v1412, 0.0
        %1442 = vadd.xlane.f32.xlu0 %v1441
        %v1443 = vpop.xlane.xlu0 %1442
        %v1444 = vsel %vm1434, %v1415, 0.0
        %1445 = vadd.xlane.f32.xlu0 %v1444
        %v1446 = vpop.xlane.xlu0 %1445
        %v1447 = vsel %vm1434, %v1420, 0.0
        %1448 = vadd.xlane.f32.xlu0 %v1447
        %v1449 = vpop.xlane.xlu0 %1448
        %v1450 = vsel %vm1434, %v1423, 0.0
        %1451 = vadd.xlane.f32.xlu0 %v1450
        %v1452 = vpop.xlane.xlu0 %1451
        %v1453 = vsel %vm1434, %v1428, 0.0
        %1454 = vadd.xlane.f32.xlu0 %v1453
        %v1455 = vpop.xlane.xlu0 %1454
        %v1456 = vsel %vm1434, %v1431, 0.0
        %1457 = vadd.xlane.f32.xlu0 %v1456
        %v1458 = vpop.xlane.xlu0 %1457
        %v1459 = vrcp.pop 16.0
        %v1460 = vmul.f32 %v1437, %v1459
        %v1461 = vmul.f32 %v1440, %v1459
        %v1462 = vmul.f32 %v1443, %v1459
        %v1463 = vmul.f32 %v1446, %v1459
        %v1464 = vmul.f32 %v1449, %v1459
        %v1465 = vmul.f32 %v1452, %v1459
        %v1466 = vmul.f32 %v1455, %v1459
        %v1467 = vmul.f32 %v1458, %v1459
        %v1468 = vsub.f32 %v1404, %v1460
        %v1469 = vsub.f32 %v1407, %v1461
        %v1470 = vsub.f32 %v1412, %v1462
        %v1471 = vsub.f32 %v1415, %v1463
        %v1472 = vsub.f32 %v1420, %v1464
        %v1473 = vsub.f32 %v1423, %v1465
        %v1474 = vsub.f32 %v1428, %v1466
        %v1475 = vsub.f32 %v1431, %v1467
        %v1476 = vmul.f32 %v1468, %v1468
        %v1477 = vmul.f32 %v1469, %v1469
        %v1478 = vmul.f32 %v1470, %v1470
        %v1479 = vmul.f32 %v1471, %v1471
        %v1480 = vmul.f32 %v1472, %v1472
        %v1481 = vmul.f32 %v1473, %v1473
        %v1482 = vmul.f32 %v1474, %v1474
        %v1483 = vmul.f32 %v1475, %v1475
        %v1484 = vsel %vm1434, %v1476, 0.0
        %1485 = vadd.xlane.f32.xlu0 %v1484
        %v1486 = vpop.xlane.xlu0 %1485
        %v1487 = vsel %vm1434, %v1477, 0.0
        %1488 = vadd.xlane.f32.xlu0 %v1487
        %v1489 = vpop.xlane.xlu0 %1488
        %v1490 = vsel %vm1434, %v1478, 0.0
        %1491 = vadd.xlane.f32.xlu0 %v1490
        %v1492 = vpop.xlane.xlu0 %1491
        %v1493 = vsel %vm1434, %v1479, 0.0
        %1494 = vadd.xlane.f32.xlu0 %v1493
        %v1495 = vpop.xlane.xlu0 %1494
        %v1496 = vsel %vm1434, %v1480, 0.0
        %1497 = vadd.xlane.f32.xlu0 %v1496
        %v1498 = vpop.xlane.xlu0 %1497
        %v1499 = vsel %vm1434, %v1481, 0.0
        %1500 = vadd.xlane.f32.xlu0 %v1499
        %v1501 = vpop.xlane.xlu0 %1500
        %v1502 = vsel %vm1434, %v1482, 0.0
        %1503 = vadd.xlane.f32.xlu0 %v1502
        %v1504 = vpop.xlane.xlu0 %1503
        %v1505 = vsel %vm1434, %v1483, 0.0
        %1506 = vadd.xlane.f32.xlu0 %v1505
        %v1507 = vpop.xlane.xlu0 %1506
        %v1508 = vmul.f32 %v1486, %v1459
        %v1509 = vmul.f32 %v1489, %v1459
        %v1510 = vmul.f32 %v1492, %v1459
        %v1511 = vmul.f32 %v1495, %v1459
        %v1512 = vmul.f32 %v1498, %v1459
        %v1513 = vmul.f32 %v1501, %v1459
        %v1514 = vmul.f32 %v1504, %v1459
        %v1515 = vmul.f32 %v1507, %v1459
        %v1516 = vadd.f32 %v1508, 1e-05
        %v1517 = vadd.f32 %v1509, 1e-05
        %v1518 = vadd.f32 %v1510, 1e-05
        %v1519 = vadd.f32 %v1511, 1e-05
        %v1520 = vadd.f32 %v1512, 1e-05
        %v1521 = vadd.f32 %v1513, 1e-05
        %v1522 = vadd.f32 %v1514, 1e-05
        %v1523 = vadd.f32 %v1515, 1e-05
        %v1524 = vrsqrt.pop %v1516
        %v1525 = vrsqrt.pop %v1517
        %v1526 = vrsqrt.pop %v1518
        %v1527 = vrsqrt.pop %v1519
        %v1528 = vrsqrt.pop %v1520
        %v1529 = vrsqrt.pop %v1521
        %v1530 = vrsqrt.pop %v1522
        %v1531 = vrsqrt.pop %v1523
        %v1532 = vmul.f32 %v1468, %v1524
        %v1533 = vmul.f32 %v1469, %v1525
        %v1534 = vmul.f32 %v1470, %v1526
        %v1535 = vmul.f32 %v1471, %v1527
        %v1536 = vmul.f32 %v1472, %v1528
        %v1537 = vmul.f32 %v1473, %v1529
        %v1538 = vmul.f32 %v1474, %v1530
        %v1539 = vmul.f32 %v1475, %v1531
        %v1541 = vlaneseq
        %v1542 = vshrl.u32 %v1541, 7
        %v1543 = vsub.s32 0, %v1542
        %v1544 = vrot.slane %v1234, %v1543
        %v1546 = vmul.f32 %v1532, %v1544
        %v1547 = vmul.f32 %v1533, %v1544
        %v1548 = vmul.f32 %v1534, %v1544
        %v1549 = vmul.f32 %v1535, %v1544
        %v1550 = vmul.f32 %v1536, %v1544
        %v1551 = vmul.f32 %v1537, %v1544
        %v1552 = vmul.f32 %v1538, %v1544
        %v1553 = vmul.f32 %v1539, %v1544
        %v1555 = vlaneseq
        %v1556 = vshrl.u32 %v1555, 7
        %v1557 = vsub.s32 0, %v1556
        %v1558 = vrot.slane %v1235, %v1557
        %v1560 = vadd.f32 %v1546, %v1558
        %v1561 = vadd.f32 %v1547, %v1558
        %v1562 = vadd.f32 %v1548, %v1558
        %v1563 = vadd.f32 %v1549, %v1558
        %v1564 = vadd.f32 %v1550, %v1558
        %v1565 = vadd.f32 %v1551, %v1558
        %v1566 = vadd.f32 %v1552, %v1558
        %v1567 = vadd.f32 %v1553, %v1558
        %v1568 = vsel %vm1434, %v1560, 0.0
        %1569 = vadd.xlane.f32.xlu0 %v1568
        %v1570 = vpop.xlane.xlu0 %1569
        %v1571 = vsel %vm1434, %v1561, 0.0
        %1572 = vadd.xlane.f32.xlu0 %v1571
        %v1573 = vpop.xlane.xlu0 %1572
        %v1574 = vsel %vm1434, %v1562, 0.0
        %1575 = vadd.xlane.f32.xlu0 %v1574
        %v1576 = vpop.xlane.xlu0 %1575
        %v1577 = vsel %vm1434, %v1563, 0.0
        %1578 = vadd.xlane.f32.xlu0 %v1577
        %v1579 = vpop.xlane.xlu0 %1578
        %v1580 = vsel %vm1434, %v1564, 0.0
        %1581 = vadd.xlane.f32.xlu0 %v1580
        %v1582 = vpop.xlane.xlu0 %1581
        %v1583 = vsel %vm1434, %v1565, 0.0
        %1584 = vadd.xlane.f32.xlu0 %v1583
        %v1585 = vpop.xlane.xlu0 %1584
        %v1586 = vsel %vm1434, %v1566, 0.0
        %1587 = vadd.xlane.f32.xlu0 %v1586
        %v1588 = vpop.xlane.xlu0 %1587
        %v1589 = vsel %vm1434, %v1567, 0.0
        %1590 = vadd.xlane.f32.xlu0 %v1589
        %v1591 = vpop.xlane.xlu0 %1590
        %v1592 = vmul.f32 %v1570, %v1459
        %v1593 = vmul.f32 %v1573, %v1459
        %v1594 = vmul.f32 %v1576, %v1459
        %v1595 = vmul.f32 %v1579, %v1459
        %v1596 = vmul.f32 %v1582, %v1459
        %v1597 = vmul.f32 %v1585, %v1459
        %v1598 = vmul.f32 %v1588, %v1459
        %v1599 = vmul.f32 %v1591, %v1459
        %v1600 = vsub.f32 %v1560, %v1592
        %v1601 = vsub.f32 %v1561, %v1593
        %v1602 = vsub.f32 %v1562, %v1594
        %v1603 = vsub.f32 %v1563, %v1595
        %v1604 = vsub.f32 %v1564, %v1596
        %v1605 = vsub.f32 %v1565, %v1597
        %v1606 = vsub.f32 %v1566, %v1598
        %v1607 = vsub.f32 %v1567, %v1599
        %v1608 = vmul.f32 %v1600, %v1600
        %v1609 = vmul.f32 %v1601, %v1601
        %v1610 = vmul.f32 %v1602, %v1602
        %v1611 = vmul.f32 %v1603, %v1603
        %v1612 = vmul.f32 %v1604, %v1604
        %v1613 = vmul.f32 %v1605, %v1605
        %v1614 = vmul.f32 %v1606, %v1606
        %v1615 = vmul.f32 %v1607, %v1607
        %v1616 = vsel %vm1434, %v1608, 0.0
        %1617 = vadd.xlane.f32.xlu0 %v1616
        %v1618 = vpop.xlane.xlu0 %1617
        %v1619 = vsel %vm1434, %v1609, 0.0
        %1620 = vadd.xlane.f32.xlu0 %v1619
        %v1621 = vpop.xlane.xlu0 %1620
        %v1622 = vsel %vm1434, %v1610, 0.0
        %1623 = vadd.xlane.f32.xlu0 %v1622
        %v1624 = vpop.xlane.xlu0 %1623
        %v1625 = vsel %vm1434, %v1611, 0.0
        %1626 = vadd.xlane.f32.xlu0 %v1625
        %v1627 = vpop.xlane.xlu0 %1626
        %v1628 = vsel %vm1434, %v1612, 0.0
        %1629 = vadd.xlane.f32.xlu0 %v1628
        %v1630 = vpop.xlane.xlu0 %1629
        %v1631 = vsel %vm1434, %v1613, 0.0
        %1632 = vadd.xlane.f32.xlu0 %v1631
        %v1633 = vpop.xlane.xlu0 %1632
        %v1634 = vsel %vm1434, %v1614, 0.0
        %1635 = vadd.xlane.f32.xlu0 %v1634
        %v1636 = vpop.xlane.xlu0 %1635
        %v1637 = vsel %vm1434, %v1615, 0.0
        %1638 = vadd.xlane.f32.xlu0 %v1637
        %v1639 = vpop.xlane.xlu0 %1638
        %v1640 = vmul.f32 %v1618, %v1459
        %v1641 = vmul.f32 %v1621, %v1459
        %v1642 = vmul.f32 %v1624, %v1459
        %v1643 = vmul.f32 %v1627, %v1459
        %v1644 = vmul.f32 %v1630, %v1459
        %v1645 = vmul.f32 %v1633, %v1459
        %v1646 = vmul.f32 %v1636, %v1459
        %v1647 = vmul.f32 %v1639, %v1459
        %v1648 = vadd.f32 %v1640, 1e-05
        %v1649 = vadd.f32 %v1641, 1e-05
        %v1650 = vadd.f32 %v1642, 1e-05
        %v1651 = vadd.f32 %v1643, 1e-05
        %v1652 = vadd.f32 %v1644, 1e-05
        %v1653 = vadd.f32 %v1645, 1e-05
        %v1654 = vadd.f32 %v1646, 1e-05
        %v1655 = vadd.f32 %v1647, 1e-05
        %v1656 = vrsqrt.pop %v1648
        %v1657 = vrsqrt.pop %v1649
        %v1658 = vrsqrt.pop %v1650
        %v1659 = vrsqrt.pop %v1651
        %v1660 = vrsqrt.pop %v1652
        %v1661 = vrsqrt.pop %v1653
        %v1662 = vrsqrt.pop %v1654
        %v1663 = vrsqrt.pop %v1655
        %v1664 = vmul.f32 %v1600, %v1656
        %v1665 = vmul.f32 %v1601, %v1657
        %v1666 = vmul.f32 %v1602, %v1658
        %v1667 = vmul.f32 %v1603, %v1659
        %v1668 = vmul.f32 %v1604, %v1660
        %v1669 = vmul.f32 %v1605, %v1661
        %v1670 = vmul.f32 %v1606, %v1662
        %v1671 = vmul.f32 %v1607, %v1663
        %v1673 = vlaneseq
        %v1674 = vshrl.u32 %v1673, 7
        %v1675 = vsub.s32 0, %v1674
        %v1676 = vrot.slane %v1236, %v1675
        %v1678 = vmul.f32 %v1664, %v1676
        %v1679 = vmul.f32 %v1665, %v1676
        %v1680 = vmul.f32 %v1666, %v1676
        %v1681 = vmul.f32 %v1667, %v1676
        %v1682 = vmul.f32 %v1668, %v1676
        %v1683 = vmul.f32 %v1669, %v1676
        %v1684 = vmul.f32 %v1670, %v1676
        %v1685 = vmul.f32 %v1671, %v1676
        %v1687 = vlaneseq
        %v1688 = vshrl.u32 %v1687, 7
        %v1689 = vsub.s32 0, %v1688
        %v1690 = vrot.slane %v1237, %v1689
        %v1692 = vadd.f32 %v1678, %v1690
        %v1693 = vadd.f32 %v1679, %v1690
        %v1694 = vadd.f32 %v1680, %v1690
        %v1695 = vadd.f32 %v1681, %v1690
        %v1696 = vadd.f32 %v1682, %v1690
        %v1697 = vadd.f32 %v1683, %v1690
        %v1698 = vadd.f32 %v1684, %v1690
        %v1699 = vadd.f32 %v1685, %v1690
        %v1700 = vpack.c.bf16 %v1693, %v1692
        %v1701 = vpack.c.bf16 %v1695, %v1694
        %v1702 = vpack.c.bf16 %v1697, %v1696
        %v1703 = vpack.c.bf16 %v1699, %v1698
        %v1705 = vlaneseq
        %v1706 = vshrl.u32 %v1705, 7
        %v1707 = vsub.s32 0, %v1706
        %v1708 = vrot.slane %v1240, %v1707
        %v1712 = vunpack.c.l.b16 %v1238
        %v1713 = vunpack.c.l.b16 %v1239
        %v1714 = vpack.c.b16 %v1713, %v1712
        %v1717 = vsel %vm1434, %v1700, 0
        %v1720 = vsel %vm1434, %v1701, 0
        %v1723 = vsel %vm1434, %v1702, 0
        %v1726 = vsel %vm1434, %v1703, 0
        %1728 = vmatprep.subr.bf16.mxu0 0
        %1729 = vmatpush1.bf16.msra.mxu0 %v1714
        %1730 = vmatprep.subr.bf16.mxu0 0
        %1731 = vmatpush1.bf16.msra.mxu0 0
        %1732 = vmatprep.subr.bf16.mxu0 0
        %1733 = vmatpush1.bf16.msra.mxu0 0
        %1734 = vmatprep.subr.bf16.mxu0 0
        %1735 = vmatpush1.bf16.msra.mxu0 0
        %1736 = vmatprep.subr.bf16.mxu0 0
        %1737 = vmatpush1.bf16.msra.mxu0 0
        %1738 = vmatprep.subr.bf16.mxu0 0
        %1739 = vmatpush1.bf16.msra.mxu0 0
        %1740 = vmatprep.subr.bf16.mxu0 0
        %1741 = vmatpush1.bf16.msra.mxu0 0
        %1742 = vmatprep.subr.bf16.mxu0 0
        %1743 = vmatpush1.bf16.msra.mxu0 0
        %1744 = vmatprep.subr.bf16.mxu0 0
        %1745 = vmatpush1.bf16.msra.mxu0 0
        %1746 = vmatprep.subr.bf16.mxu0 0
        %1747 = vmatpush1.bf16.msra.mxu0 0
        %1748 = vmatprep.subr.bf16.mxu0 0
        %1749 = vmatpush1.bf16.msra.mxu0 0
        %1750 = vmatprep.subr.bf16.mxu0 0
        %1751 = vmatpush1.bf16.msra.mxu0 0
        %1752 = vmatprep.subr.bf16.mxu0 0
        %1753 = vmatpush1.bf16.msra.mxu0 0
        %1754 = vmatprep.subr.bf16.mxu0 0
        %1755 = vmatpush1.bf16.msra.mxu0 0
        %1756 = vmatprep.subr.bf16.mxu0 0
        %1757 = vmatpush1.bf16.msra.mxu0 0
        %1758 = vmatprep.subr.bf16.mxu0 0
        %1759 = vmatpush1.bf16.msra.mxu0 0
        %1760 = vmatprep.mubr.bf16.mxu0 0
        %1761 = vmatmul.mubr.bf16.gmra.mrb[0].mxu0 %v1717
        %v1762 = vpop.f32.mrb[0].mxu0
        %v1763 = vadd.f32 %v1708, %v1762
        %v1764 = vpop.f32.mrb[0].mxu0
        %v1765 = vpop.f32.mrb[0].mxu0
        %v1766 = vadd.f32 %v1708, %v1765
        %v1767 = vpop.f32.mrb[0].mxu0
        %1768 = vmatprep.mubr.bf16.mxu0 0
        %1769 = vmatmul.mubr.bf16.gmra.mrb[0].mxu0 %v1720
        %v1770 = vpop.f32.mrb[0].mxu0
        %v1771 = vadd.f32 %v1708, %v1770
        %v1772 = vpop.f32.mrb[0].mxu0
        %v1773 = vpop.f32.mrb[0].mxu0
        %v1774 = vadd.f32 %v1708, %v1773
        %v1775 = vpop.f32.mrb[0].mxu0
        %1776 = vmatprep.mubr.bf16.mxu0 0
        %1777 = vmatmul.mubr.bf16.gmra.mrb[0].mxu0 %v1723
        %v1778 = vpop.f32.mrb[0].mxu0
        %v1779 = vadd.f32 %v1708, %v1778
        %v1780 = vpop.f32.mrb[0].mxu0
        %v1781 = vpop.f32.mrb[0].mxu0
        %v1782 = vadd.f32 %v1708, %v1781
        %v1783 = vpop.f32.mrb[0].mxu0
        %1784 = vmatprep.mubr.bf16.mxu0 0
        %1785 = vmatmul.mubr.bf16.gmra.mrb[0].mxu0 %v1726
        %v1786 = vpop.f32.mrb[0].mxu0
        %v1787 = vadd.f32 %v1708, %v1786
        %v1788 = vpop.f32.mrb[0].mxu0
        %v1789 = vpop.f32.mrb[0].mxu0
        %v1790 = vadd.f32 %v1708, %v1789
        %v1791 = vpop.f32.mrb[0].mxu0
        %1792 = vdwg.mxu0
        %1801 = vrot.lane.b32.xlu0 %v1763, 120
        %v1802 = vpop.permute.xlu0 %1801
        %1803 = vrot.lane.b32.xlu0 %v1766, 120
        %v1804 = vpop.permute.xlu0 %1803
        %1805 = vrot.lane.b32.xlu0 %v1771, 120
        %v1806 = vpop.permute.xlu0 %1805
        %1807 = vrot.lane.b32.xlu0 %v1774, 120
        %v1808 = vpop.permute.xlu0 %1807
        %1809 = vrot.lane.b32.xlu0 %v1779, 120
        %v1810 = vpop.permute.xlu0 %1809
        %1811 = vrot.lane.b32.xlu0 %v1782, 120
        %v1812 = vpop.permute.xlu0 %1811
        %1813 = vrot.lane.b32.xlu0 %v1787, 120
        %v1814 = vpop.permute.xlu0 %1813
        %1815 = vrot.lane.b32.xlu0 %v1790, 120
        %v1816 = vpop.permute.xlu0 %1815
        %v1825 = vpack.c.bf16 %v1766, %v1763
        %v1826 = vpack.c.bf16 %v1774, %v1771
        %v1827 = vpack.c.bf16 %v1782, %v1779
        %v1828 = vpack.c.bf16 %v1790, %v1787
        %v1829 = vpack.c.bf16 %v1804, %v1802
        %v1830 = vpack.c.bf16 %v1808, %v1806
        %v1831 = vpack.c.bf16 %v1812, %v1810
        %v1832 = vpack.c.bf16 %v1816, %v1814
        %1834 = vrot.lane.b32.xlu0 %v1825, 112
        %v1835 = vpop.permute.xlu0 %1834
        %vm1836 = vcmask 64512
        %v1838 = vsel %vm1836, %v1825, 0
        %v1841 = vsel %vm1836, %v1835, 0
        %1843 = vmatprep.subr.bf16.mxu0 0
        %1844 = vmatpush1.bf16.xpose.msra.mxu0 %v1841
        %1845 = vmatprep.subr.bf16.mxu0 0
        %1846 = vmatpush1.bf16.xpose.msra.mxu0 0
        %1847 = vmatprep.subr.bf16.mxu0 0
        %1848 = vmatpush1.bf16.xpose.msra.mxu0 0
        %1849 = vmatprep.subr.bf16.mxu0 0
        %1850 = vmatpush1.bf16.xpose.msra.mxu0 0
        %1851 = vmatprep.subr.bf16.mxu0 0
        %1852 = vmatpush1.bf16.xpose.msra.mxu0 0
        %1853 = vmatprep.subr.bf16.mxu0 0
        %1854 = vmatpush1.bf16.xpose.msra.mxu0 0
        %1855 = vmatprep.subr.bf16.mxu0 0
        %1856 = vmatpush1.bf16.xpose.msra.mxu0 0
        %1857 = vmatprep.subr.bf16.mxu0 0
        %1858 = vmatpush1.bf16.xpose.msra.mxu0 0
        %1859 = vmatprep.subr.bf16.mxu0 0
        %1860 = vmatpush1.bf16.xpose.msra.mxu0 0
        %1861 = vmatprep.subr.bf16.mxu0 0
        %1862 = vmatpush1.bf16.xpose.msra.mxu0 0
        %1863 = vmatprep.subr.bf16.mxu0 0
        %1864 = vmatpush1.bf16.xpose.msra.mxu0 0
        %1865 = vmatprep.subr.bf16.mxu0 0
        %1866 = vmatpush1.bf16.xpose.msra.mxu0 0
        %1867 = vmatprep.subr.bf16.mxu0 0
        %1868 = vmatpush1.bf16.xpose.msra.mxu0 0
        %1869 = vmatprep.subr.bf16.mxu0 0
        %1870 = vmatpush1.bf16.xpose.msra.mxu0 0
        %1871 = vmatprep.subr.bf16.mxu0 0
        %1872 = vmatpush1.bf16.xpose.msra.mxu0 0
        %1873 = vmatprep.subr.bf16.mxu0 0
        %1874 = vmatpush1.bf16.xpose.msra.mxu0 0
        %1875 = vmatprep.mubr.bf16.mxu0 0
        %1876 = vmatmul.mubr.bf16.gmra.mrb[0].mxu0 %v1838
        %v1877 = vpop.f32.mrb[0].mxu0
        %v1878 = vadd.f32 %v1241, %v1877
        %v1879 = vpop.f32.mrb[0].mxu0
        %v1880 = vpop.f32.mrb[0].mxu0
        %v1881 = vadd.f32 %v1242, %v1880
        %v1882 = vpop.f32.mrb[0].mxu0
        %1883 = vdwg.mxu0
        %1885 = vrot.lane.b32.xlu0 %v1826, 112
        %v1886 = vpop.permute.xlu0 %1885
        %v1888 = vsel %vm1836, %v1826, 0
        %v1891 = vsel %vm1836, %v1886, 0
        %1893 = vmatprep.subr.bf16.mxu0 0
        %1894 = vmatpush1.bf16.xpose.msra.mxu0 %v1891
        %1895 = vmatprep.subr.bf16.mxu0 0
        %1896 = vmatpush1.bf16.xpose.msra.mxu0 0
        %1897 = vmatprep.subr.bf16.mxu0 0
        %1898 = vmatpush1.bf16.xpose.msra.mxu0 0
        %1899 = vmatprep.subr.bf16.mxu0 0
        %1900 = vmatpush1.bf16.xpose.msra.mxu0 0
        %1901 = vmatprep.subr.bf16.mxu0 0
        %1902 = vmatpush1.bf16.xpose.msra.mxu0 0
        %1903 = vmatprep.subr.bf16.mxu0 0
        %1904 = vmatpush1.bf16.xpose.msra.mxu0 0
        %1905 = vmatprep.subr.bf16.mxu0 0
        %1906 = vmatpush1.bf16.xpose.msra.mxu0 0
        %1907 = vmatprep.subr.bf16.mxu0 0
        %1908 = vmatpush1.bf16.xpose.msra.mxu0 0
        %1909 = vmatprep.subr.bf16.mxu0 0
        %1910 = vmatpush1.bf16.xpose.msra.mxu0 0
        %1911 = vmatprep.subr.bf16.mxu0 0
        %1912 = vmatpush1.bf16.xpose.msra.mxu0 0
        %1913 = vmatprep.subr.bf16.mxu0 0
        %1914 = vmatpush1.bf16.xpose.msra.mxu0 0
        %1915 = vmatprep.subr.bf16.mxu0 0
        %1916 = vmatpush1.bf16.xpose.msra.mxu0 0
        %1917 = vmatprep.subr.bf16.mxu0 0
        %1918 = vmatpush1.bf16.xpose.msra.mxu0 0
        %1919 = vmatprep.subr.bf16.mxu0 0
        %1920 = vmatpush1.bf16.xpose.msra.mxu0 0
        %1921 = vmatprep.subr.bf16.mxu0 0
        %1922 = vmatpush1.bf16.xpose.msra.mxu0 0
        %1923 = vmatprep.subr.bf16.mxu0 0
        %1924 = vmatpush1.bf16.xpose.msra.mxu0 0
        %1925 = vmatprep.mubr.bf16.mxu0 0
        %1926 = vmatmul.mubr.bf16.gmra.mrb[0].mxu0 %v1888
        %v1927 = vpop.f32.mrb[0].mxu0
        %v1928 = vadd.f32 %v1241, %v1927
        %v1929 = vpop.f32.mrb[0].mxu0
        %v1930 = vpop.f32.mrb[0].mxu0
        %v1931 = vadd.f32 %v1242, %v1930
        %v1932 = vpop.f32.mrb[0].mxu0
        %1933 = vdwg.mxu0
        %1935 = vrot.lane.b32.xlu0 %v1827, 112
        %v1936 = vpop.permute.xlu0 %1935
        %v1938 = vsel %vm1836, %v1827, 0
        %v1941 = vsel %vm1836, %v1936, 0
        %1943 = vmatprep.subr.bf16.mxu0 0
        %1944 = vmatpush1.bf16.xpose.msra.mxu0 %v1941
        %1945 = vmatprep.subr.bf16.mxu0 0
        %1946 = vmatpush1.bf16.xpose.msra.mxu0 0
        %1947 = vmatprep.subr.bf16.mxu0 0
        %1948 = vmatpush1.bf16.xpose.msra.mxu0 0
        %1949 = vmatprep.subr.bf16.mxu0 0
        %1950 = vmatpush1.bf16.xpose.msra.mxu0 0
        %1951 = vmatprep.subr.bf16.mxu0 0
        %1952 = vmatpush1.bf16.xpose.msra.mxu0 0
        %1953 = vmatprep.subr.bf16.mxu0 0
        %1954 = vmatpush1.bf16.xpose.msra.mxu0 0
        %1955 = vmatprep.subr.bf16.mxu0 0
        %1956 = vmatpush1.bf16.xpose.msra.mxu0 0
        %1957 = vmatprep.subr.bf16.mxu0 0
        %1958 = vmatpush1.bf16.xpose.msra.mxu0 0
        %1959 = vmatprep.subr.bf16.mxu0 0
        %1960 = vmatpush1.bf16.xpose.msra.mxu0 0
        %1961 = vmatprep.subr.bf16.mxu0 0
        %1962 = vmatpush1.bf16.xpose.msra.mxu0 0
        %1963 = vmatprep.subr.bf16.mxu0 0
        %1964 = vmatpush1.bf16.xpose.msra.mxu0 0
        %1965 = vmatprep.subr.bf16.mxu0 0
        %1966 = vmatpush1.bf16.xpose.msra.mxu0 0
        %1967 = vmatprep.subr.bf16.mxu0 0
        %1968 = vmatpush1.bf16.xpose.msra.mxu0 0
        %1969 = vmatprep.subr.bf16.mxu0 0
        %1970 = vmatpush1.bf16.xpose.msra.mxu0 0
        %1971 = vmatprep.subr.bf16.mxu0 0
        %1972 = vmatpush1.bf16.xpose.msra.mxu0 0
        %1973 = vmatprep.subr.bf16.mxu0 0
        %1974 = vmatpush1.bf16.xpose.msra.mxu0 0
        %1975 = vmatprep.mubr.bf16.mxu0 0
        %1976 = vmatmul.mubr.bf16.gmra.mrb[0].mxu0 %v1938
        %v1977 = vpop.f32.mrb[0].mxu0
        %v1978 = vadd.f32 %v1241, %v1977
        %v1979 = vpop.f32.mrb[0].mxu0
        %v1980 = vpop.f32.mrb[0].mxu0
        %v1981 = vadd.f32 %v1242, %v1980
        %v1982 = vpop.f32.mrb[0].mxu0
        %1983 = vdwg.mxu0
        %1985 = vrot.lane.b32.xlu0 %v1828, 112
        %v1986 = vpop.permute.xlu0 %1985
        %v1988 = vsel %vm1836, %v1828, 0
        %v1991 = vsel %vm1836, %v1986, 0
        %1993 = vmatprep.subr.bf16.mxu0 0
        %1994 = vmatpush1.bf16.xpose.msra.mxu0 %v1991
        %1995 = vmatprep.subr.bf16.mxu0 0
        %1996 = vmatpush1.bf16.xpose.msra.mxu0 0
        %1997 = vmatprep.subr.bf16.mxu0 0
        %1998 = vmatpush1.bf16.xpose.msra.mxu0 0
        %1999 = vmatprep.subr.bf16.mxu0 0
        %2000 = vmatpush1.bf16.xpose.msra.mxu0 0
        %2001 = vmatprep.subr.bf16.mxu0 0
        %2002 = vmatpush1.bf16.xpose.msra.mxu0 0
        %2003 = vmatprep.subr.bf16.mxu0 0
        %2004 = vmatpush1.bf16.xpose.msra.mxu0 0
        %2005 = vmatprep.subr.bf16.mxu0 0
        %2006 = vmatpush1.bf16.xpose.msra.mxu0 0
        %2007 = vmatprep.subr.bf16.mxu0 0
        %2008 = vmatpush1.bf16.xpose.msra.mxu0 0
        %2009 = vmatprep.subr.bf16.mxu0 0
        %2010 = vmatpush1.bf16.xpose.msra.mxu0 0
        %2011 = vmatprep.subr.bf16.mxu0 0
        %2012 = vmatpush1.bf16.xpose.msra.mxu0 0
        %2013 = vmatprep.subr.bf16.mxu0 0
        %2014 = vmatpush1.bf16.xpose.msra.mxu0 0
        %2015 = vmatprep.subr.bf16.mxu0 0
        %2016 = vmatpush1.bf16.xpose.msra.mxu0 0
        %2017 = vmatprep.subr.bf16.mxu0 0
        %2018 = vmatpush1.bf16.xpose.msra.mxu0 0
        %2019 = vmatprep.subr.bf16.mxu0 0
        %2020 = vmatpush1.bf16.xpose.msra.mxu0 0
        %2021 = vmatprep.subr.bf16.mxu0 0
        %2022 = vmatpush1.bf16.xpose.msra.mxu0 0
        %2023 = vmatprep.subr.bf16.mxu0 0
        %2024 = vmatpush1.bf16.xpose.msra.mxu0 0
        %2025 = vmatprep.mubr.bf16.mxu0 0
        %2026 = vmatmul.mubr.bf16.gmra.mrb[0].mxu0 %v1988
        %v2027 = vpop.f32.mrb[0].mxu0
        %v2028 = vadd.f32 %v1241, %v2027
        %v2029 = vpop.f32.mrb[0].mxu0
        %v2030 = vpop.f32.mrb[0].mxu0
        %v2031 = vadd.f32 %v1242, %v2030
        %v2032 = vpop.f32.mrb[0].mxu0
        %2033 = vdwg.mxu0
        %2035 = vrot.lane.b32.xlu0 %v1829, 112
        %v2036 = vpop.permute.xlu0 %2035
        %v2038 = vsel %vm1836, %v1829, 0
        %v2041 = vsel %vm1836, %v2036, 0
        %2043 = vmatprep.subr.bf16.mxu0 0
        %2044 = vmatpush1.bf16.xpose.msra.mxu0 %v2041
        %2045 = vmatprep.subr.bf16.mxu0 0
        %2046 = vmatpush1.bf16.xpose.msra.mxu0 0
        %2047 = vmatprep.subr.bf16.mxu0 0
        %2048 = vmatpush1.bf16.xpose.msra.mxu0 0
        %2049 = vmatprep.subr.bf16.mxu0 0
        %2050 = vmatpush1.bf16.xpose.msra.mxu0 0
        %2051 = vmatprep.subr.bf16.mxu0 0
        %2052 = vmatpush1.bf16.xpose.msra.mxu0 0
        %2053 = vmatprep.subr.bf16.mxu0 0
        %2054 = vmatpush1.bf16.xpose.msra.mxu0 0
        %2055 = vmatprep.subr.bf16.mxu0 0
        %2056 = vmatpush1.bf16.xpose.msra.mxu0 0
        %2057 = vmatprep.subr.bf16.mxu0 0
        %2058 = vmatpush1.bf16.xpose.msra.mxu0 0
        %2059 = vmatprep.subr.bf16.mxu0 0
        %2060 = vmatpush1.bf16.xpose.msra.mxu0 0
        %2061 = vmatprep.subr.bf16.mxu0 0
        %2062 = vmatpush1.bf16.xpose.msra.mxu0 0
        %2063 = vmatprep.subr.bf16.mxu0 0
        %2064 = vmatpush1.bf16.xpose.msra.mxu0 0
        %2065 = vmatprep.subr.bf16.mxu0 0
        %2066 = vmatpush1.bf16.xpose.msra.mxu0 0
        %2067 = vmatprep.subr.bf16.mxu0 0
        %2068 = vmatpush1.bf16.xpose.msra.mxu0 0
        %2069 = vmatprep.subr.bf16.mxu0 0
        %2070 = vmatpush1.bf16.xpose.msra.mxu0 0
        %2071 = vmatprep.subr.bf16.mxu0 0
        %2072 = vmatpush1.bf16.xpose.msra.mxu0 0
        %2073 = vmatprep.subr.bf16.mxu0 0
        %2074 = vmatpush1.bf16.xpose.msra.mxu0 0
        %2075 = vmatprep.mubr.bf16.mxu0 0
        %2076 = vmatmul.mubr.bf16.gmra.mrb[0].mxu0 %v2038
        %v2077 = vpop.f32.mrb[0].mxu0
        %v2078 = vadd.f32 %v1243, %v2077
        %v2079 = vpop.f32.mrb[0].mxu0
        %v2080 = vpop.f32.mrb[0].mxu0
        %v2081 = vadd.f32 %v1244, %v2080
        %v2082 = vpop.f32.mrb[0].mxu0
        %2083 = vdwg.mxu0
        %2085 = vrot.lane.b32.xlu0 %v1830, 112
        %v2086 = vpop.permute.xlu0 %2085
        %v2088 = vsel %vm1836, %v1830, 0
        %v2091 = vsel %vm1836, %v2086, 0
        %2093 = vmatprep.subr.bf16.mxu0 0
        %2094 = vmatpush1.bf16.xpose.msra.mxu0 %v2091
        %2095 = vmatprep.subr.bf16.mxu0 0
        %2096 = vmatpush1.bf16.xpose.msra.mxu0 0
        %2097 = vmatprep.subr.bf16.mxu0 0
        %2098 = vmatpush1.bf16.xpose.msra.mxu0 0
        %2099 = vmatprep.subr.bf16.mxu0 0
        %2100 = vmatpush1.bf16.xpose.msra.mxu0 0
        %2101 = vmatprep.subr.bf16.mxu0 0
        %2102 = vmatpush1.bf16.xpose.msra.mxu0 0
        %2103 = vmatprep.subr.bf16.mxu0 0
        %2104 = vmatpush1.bf16.xpose.msra.mxu0 0
        %2105 = vmatprep.subr.bf16.mxu0 0
        %2106 = vmatpush1.bf16.xpose.msra.mxu0 0
        %2107 = vmatprep.subr.bf16.mxu0 0
        %2108 = vmatpush1.bf16.xpose.msra.mxu0 0
        %2109 = vmatprep.subr.bf16.mxu0 0
        %2110 = vmatpush1.bf16.xpose.msra.mxu0 0
        %2111 = vmatprep.subr.bf16.mxu0 0
        %2112 = vmatpush1.bf16.xpose.msra.mxu0 0
        %2113 = vmatprep.subr.bf16.mxu0 0
        %2114 = vmatpush1.bf16.xpose.msra.mxu0 0
        %2115 = vmatprep.subr.bf16.mxu0 0
        %2116 = vmatpush1.bf16.xpose.msra.mxu0 0
        %2117 = vmatprep.subr.bf16.mxu0 0
        %2118 = vmatpush1.bf16.xpose.msra.mxu0 0
        %2119 = vmatprep.subr.bf16.mxu0 0
        %2120 = vmatpush1.bf16.xpose.msra.mxu0 0
        %2121 = vmatprep.subr.bf16.mxu0 0
        %2122 = vmatpush1.bf16.xpose.msra.mxu0 0
        %2123 = vmatprep.subr.bf16.mxu0 0
        %2124 = vmatpush1.bf16.xpose.msra.mxu0 0
        %2125 = vmatprep.mubr.bf16.mxu0 0
        %2126 = vmatmul.mubr.bf16.gmra.mrb[0].mxu0 %v2088
        %v2127 = vpop.f32.mrb[0].mxu0
        %v2128 = vadd.f32 %v1243, %v2127
        %v2129 = vpop.f32.mrb[0].mxu0
        %v2130 = vpop.f32.mrb[0].mxu0
        %v2131 = vadd.f32 %v1244, %v2130
        %v2132 = vpop.f32.mrb[0].mxu0
        %2133 = vdwg.mxu0
        %2135 = vrot.lane.b32.xlu0 %v1831, 112
        %v2136 = vpop.permute.xlu0 %2135
        %v2138 = vsel %vm1836, %v1831, 0
        %v2141 = vsel %vm1836, %v2136, 0
        %2143 = vmatprep.subr.bf16.mxu0 0
        %2144 = vmatpush1.bf16.xpose.msra.mxu0 %v2141
        %2145 = vmatprep.subr.bf16.mxu0 0
        %2146 = vmatpush1.bf16.xpose.msra.mxu0 0
        %2147 = vmatprep.subr.bf16.mxu0 0
        %2148 = vmatpush1.bf16.xpose.msra.mxu0 0
        %2149 = vmatprep.subr.bf16.mxu0 0
        %2150 = vmatpush1.bf16.xpose.msra.mxu0 0
        %2151 = vmatprep.subr.bf16.mxu0 0
        %2152 = vmatpush1.bf16.xpose.msra.mxu0 0
        %2153 = vmatprep.subr.bf16.mxu0 0
        %2154 = vmatpush1.bf16.xpose.msra.mxu0 0
        %2155 = vmatprep.subr.bf16.mxu0 0
        %2156 = vmatpush1.bf16.xpose.msra.mxu0 0
        %2157 = vmatprep.subr.bf16.mxu0 0
        %2158 = vmatpush1.bf16.xpose.msra.mxu0 0
        %2159 = vmatprep.subr.bf16.mxu0 0
        %2160 = vmatpush1.bf16.xpose.msra.mxu0 0
        %2161 = vmatprep.subr.bf16.mxu0 0
        %2162 = vmatpush1.bf16.xpose.msra.mxu0 0
        %2163 = vmatprep.subr.bf16.mxu0 0
        %2164 = vmatpush1.bf16.xpose.msra.mxu0 0
        %2165 = vmatprep.subr.bf16.mxu0 0
        %2166 = vmatpush1.bf16.xpose.msra.mxu0 0
        %2167 = vmatprep.subr.bf16.mxu0 0
        %2168 = vmatpush1.bf16.xpose.msra.mxu0 0
        %2169 = vmatprep.subr.bf16.mxu0 0
        %2170 = vmatpush1.bf16.xpose.msra.mxu0 0
        %2171 = vmatprep.subr.bf16.mxu0 0
        %2172 = vmatpush1.bf16.xpose.msra.mxu0 0
        %2173 = vmatprep.subr.bf16.mxu0 0
        %2174 = vmatpush1.bf16.xpose.msra.mxu0 0
        %2175 = vmatprep.mubr.bf16.mxu0 0
        %2176 = vmatmul.mubr.bf16.gmra.mrb[0].mxu0 %v2138
        %v2177 = vpop.f32.mrb[0].mxu0
        %v2178 = vadd.f32 %v1243, %v2177
        %v2179 = vpop.f32.mrb[0].mxu0
        %v2180 = vpop.f32.mrb[0].mxu0
        %v2181 = vadd.f32 %v1244, %v2180
        %v2182 = vpop.f32.mrb[0].mxu0
        %2183 = vdwg.mxu0
        %2185 = vrot.lane.b32.xlu0 %v1832, 112
        %v2186 = vpop.permute.xlu0 %2185
        %v2188 = vsel %vm1836, %v1832, 0
        %v2191 = vsel %vm1836, %v2186, 0
        %2193 = vmatprep.subr.bf16.mxu0 0
        %2194 = vmatpush1.bf16.xpose.msra.mxu0 %v2191
        %2195 = vmatprep.subr.bf16.mxu0 0
        %2196 = vmatpush1.bf16.xpose.msra.mxu0 0
        %2197 = vmatprep.subr.bf16.mxu0 0
        %2198 = vmatpush1.bf16.xpose.msra.mxu0 0
        %2199 = vmatprep.subr.bf16.mxu0 0
        %2200 = vmatpush1.bf16.xpose.msra.mxu0 0
        %2201 = vmatprep.subr.bf16.mxu0 0
        %2202 = vmatpush1.bf16.xpose.msra.mxu0 0
        %2203 = vmatprep.subr.bf16.mxu0 0
        %2204 = vmatpush1.bf16.xpose.msra.mxu0 0
        %2205 = vmatprep.subr.bf16.mxu0 0
        %2206 = vmatpush1.bf16.xpose.msra.mxu0 0
        %2207 = vmatprep.subr.bf16.mxu0 0
        %2208 = vmatpush1.bf16.xpose.msra.mxu0 0
        %2209 = vmatprep.subr.bf16.mxu0 0
        %2210 = vmatpush1.bf16.xpose.msra.mxu0 0
        %2211 = vmatprep.subr.bf16.mxu0 0
        %2212 = vmatpush1.bf16.xpose.msra.mxu0 0
        %2213 = vmatprep.subr.bf16.mxu0 0
        %2214 = vmatpush1.bf16.xpose.msra.mxu0 0
        %2215 = vmatprep.subr.bf16.mxu0 0
        %2216 = vmatpush1.bf16.xpose.msra.mxu0 0
        %2217 = vmatprep.subr.bf16.mxu0 0
        %2218 = vmatpush1.bf16.xpose.msra.mxu0 0
        %2219 = vmatprep.subr.bf16.mxu0 0
        %2220 = vmatpush1.bf16.xpose.msra.mxu0 0
        %2221 = vmatprep.subr.bf16.mxu0 0
        %2222 = vmatpush1.bf16.xpose.msra.mxu0 0
        %2223 = vmatprep.subr.bf16.mxu0 0
        %2224 = vmatpush1.bf16.xpose.msra.mxu0 0
        %2225 = vmatprep.mubr.bf16.mxu0 0
        %2226 = vmatmul.mubr.bf16.gmra.mrb[0].mxu0 %v2188
        %v2227 = vpop.f32.mrb[0].mxu0
        %v2228 = vadd.f32 %v1243, %v2227
        %v2229 = vpop.f32.mrb[0].mxu0
        %v2230 = vpop.f32.mrb[0].mxu0
        %v2231 = vadd.f32 %v1244, %v2230
        %v2232 = vpop.f32.mrb[0].mxu0
        %2233 = vdwg.mxu0
        %v2234 = vsel %vm1434, %v1878, -inf
        %2235 = vmax.xlane.f32.xlu0 %v2234
        %v2236 = vpop.xlane.xlu0 %2235
        %v2237 = vsel %vm1434, %v1881, -inf
        %2238 = vmax.xlane.f32.xlu0 %v2237
        %v2239 = vpop.xlane.xlu0 %2238
        %v2240 = vsel %vm1434, %v1928, -inf
        %2241 = vmax.xlane.f32.xlu0 %v2240
        %v2242 = vpop.xlane.xlu0 %2241
        %v2243 = vsel %vm1434, %v1931, -inf
        %2244 = vmax.xlane.f32.xlu0 %v2243
        %v2245 = vpop.xlane.xlu0 %2244
        %v2246 = vsel %vm1434, %v1978, -inf
        %2247 = vmax.xlane.f32.xlu0 %v2246
        %v2248 = vpop.xlane.xlu0 %2247
        %v2249 = vsel %vm1434, %v1981, -inf
        %2250 = vmax.xlane.f32.xlu0 %v2249
        %v2251 = vpop.xlane.xlu0 %2250
        %v2252 = vsel %vm1434, %v2028, -inf
        %2253 = vmax.xlane.f32.xlu0 %v2252
        %v2254 = vpop.xlane.xlu0 %2253
        %v2255 = vsel %vm1434, %v2031, -inf
        %2256 = vmax.xlane.f32.xlu0 %v2255
        %v2257 = vpop.xlane.xlu0 %2256
        %v2258 = vsel %vm1434, %v2078, -inf
        %2259 = vmax.xlane.f32.xlu0 %v2258
        %v2260 = vpop.xlane.xlu0 %2259
        %v2261 = vsel %vm1434, %v2081, -inf
        %2262 = vmax.xlane.f32.xlu0 %v2261
        %v2263 = vpop.xlane.xlu0 %2262
        %v2264 = vsel %vm1434, %v2128, -inf
        %2265 = vmax.xlane.f32.xlu0 %v2264
        %v2266 = vpop.xlane.xlu0 %2265
        %v2267 = vsel %vm1434, %v2131, -inf
        %2268 = vmax.xlane.f32.xlu0 %v2267
        %v2269 = vpop.xlane.xlu0 %2268
        %v2270 = vsel %vm1434, %v2178, -inf
        %2271 = vmax.xlane.f32.xlu0 %v2270
        %v2272 = vpop.xlane.xlu0 %2271
        %v2273 = vsel %vm1434, %v2181, -inf
        %2274 = vmax.xlane.f32.xlu0 %v2273
        %v2275 = vpop.xlane.xlu0 %2274
        %v2276 = vsel %vm1434, %v2228, -inf
        %2277 = vmax.xlane.f32.xlu0 %v2276
        %v2278 = vpop.xlane.xlu0 %2277
        %v2279 = vsel %vm1434, %v2231, -inf
        %2280 = vmax.xlane.f32.xlu0 %v2279
        %v2281 = vpop.xlane.xlu0 %2280
        %v2282 = vsub.f32 %v1878, %v2236
        %v2283 = vsub.f32 %v1881, %v2239
        %v2284 = vsub.f32 %v1928, %v2242
        %v2285 = vsub.f32 %v1931, %v2245
        %v2286 = vsub.f32 %v1978, %v2248
        %v2287 = vsub.f32 %v1981, %v2251
        %v2288 = vsub.f32 %v2028, %v2254
        %v2289 = vsub.f32 %v2031, %v2257
        %v2290 = vsub.f32 %v2078, %v2260
        %v2291 = vsub.f32 %v2081, %v2263
        %v2292 = vsub.f32 %v2128, %v2266
        %v2293 = vsub.f32 %v2131, %v2269
        %v2294 = vsub.f32 %v2178, %v2272
        %v2295 = vsub.f32 %v2181, %v2275
        %v2296 = vsub.f32 %v2228, %v2278
        %v2297 = vsub.f32 %v2231, %v2281
        %v2298 = vmul.f32 %v2282, 1.442695
        %v2299 = vpow.pop %v2298
        %v2300 = vmul.f32 %v2283, 1.442695
        %v2301 = vpow.pop %v2300
        %v2302 = vmul.f32 %v2284, 1.442695
        %v2303 = vpow.pop %v2302
        %v2304 = vmul.f32 %v2285, 1.442695
        %v2305 = vpow.pop %v2304
        %v2306 = vmul.f32 %v2286, 1.442695
        %v2307 = vpow.pop %v2306
        %v2308 = vmul.f32 %v2287, 1.442695
        %v2309 = vpow.pop %v2308
        %v2310 = vmul.f32 %v2288, 1.442695
        %v2311 = vpow.pop %v2310
        %v2312 = vmul.f32 %v2289, 1.442695
        %v2313 = vpow.pop %v2312
        %v2314 = vmul.f32 %v2290, 1.442695
        %v2315 = vpow.pop %v2314
        %v2316 = vmul.f32 %v2291, 1.442695
        %v2317 = vpow.pop %v2316
        %v2318 = vmul.f32 %v2292, 1.442695
        %v2319 = vpow.pop %v2318
        %v2320 = vmul.f32 %v2293, 1.442695
        %v2321 = vpow.pop %v2320
        %v2322 = vmul.f32 %v2294, 1.442695
        %v2323 = vpow.pop %v2322
        %v2324 = vmul.f32 %v2295, 1.442695
        %v2325 = vpow.pop %v2324
        %v2326 = vmul.f32 %v2296, 1.442695
        %v2327 = vpow.pop %v2326
        %v2328 = vmul.f32 %v2297, 1.442695
        %v2329 = vpow.pop %v2328
        %v2330 = vsel %vm1434, %v2299, 0.0
        %2331 = vadd.xlane.f32.xlu0 %v2330
        %v2332 = vpop.xlane.xlu0 %2331
        %v2333 = vsel %vm1434, %v2301, 0.0
        %2334 = vadd.xlane.f32.xlu0 %v2333
        %v2335 = vpop.xlane.xlu0 %2334
        %v2336 = vsel %vm1434, %v2303, 0.0
        %2337 = vadd.xlane.f32.xlu0 %v2336
        %v2338 = vpop.xlane.xlu0 %2337
        %v2339 = vsel %vm1434, %v2305, 0.0
        %2340 = vadd.xlane.f32.xlu0 %v2339
        %v2341 = vpop.xlane.xlu0 %2340
        %v2342 = vsel %vm1434, %v2307, 0.0
        %2343 = vadd.xlane.f32.xlu0 %v2342
        %v2344 = vpop.xlane.xlu0 %2343
        %v2345 = vsel %vm1434, %v2309, 0.0
        %2346 = vadd.xlane.f32.xlu0 %v2345
        %v2347 = vpop.xlane.xlu0 %2346
        %v2348 = vsel %vm1434, %v2311, 0.0
        %2349 = vadd.xlane.f32.xlu0 %v2348
        %v2350 = vpop.xlane.xlu0 %2349
        %v2351 = vsel %vm1434, %v2313, 0.0
        %2352 = vadd.xlane.f32.xlu0 %v2351
        %v2353 = vpop.xlane.xlu0 %2352
        %v2354 = vsel %vm1434, %v2315, 0.0
        %2355 = vadd.xlane.f32.xlu0 %v2354
        %v2356 = vpop.xlane.xlu0 %2355
        %v2357 = vsel %vm1434, %v2317, 0.0
        %2358 = vadd.xlane.f32.xlu0 %v2357
        %v2359 = vpop.xlane.xlu0 %2358
        %v2360 = vsel %vm1434, %v2319, 0.0
        %2361 = vadd.xlane.f32.xlu0 %v2360
        %v2362 = vpop.xlane.xlu0 %2361
        %v2363 = vsel %vm1434, %v2321, 0.0
        %2364 = vadd.xlane.f32.xlu0 %v2363
        %v2365 = vpop.xlane.xlu0 %2364
        %v2366 = vsel %vm1434, %v2323, 0.0
        %2367 = vadd.xlane.f32.xlu0 %v2366
        %v2368 = vpop.xlane.xlu0 %2367
        %v2369 = vsel %vm1434, %v2325, 0.0
        %2370 = vadd.xlane.f32.xlu0 %v2369
        %v2371 = vpop.xlane.xlu0 %2370
        %v2372 = vsel %vm1434, %v2327, 0.0
        %2373 = vadd.xlane.f32.xlu0 %v2372
        %v2374 = vpop.xlane.xlu0 %2373
        %v2375 = vsel %vm1434, %v2329, 0.0
        %2376 = vadd.xlane.f32.xlu0 %v2375
        %v2377 = vpop.xlane.xlu0 %2376
        %v2378 = vrcp.pop %v2332
        %v2379 = vrcp.pop %v2335
        %v2380 = vrcp.pop %v2338
        %v2381 = vrcp.pop %v2341
        %v2382 = vrcp.pop %v2344
        %v2383 = vrcp.pop %v2347
        %v2384 = vrcp.pop %v2350
        %v2385 = vrcp.pop %v2353
        %v2386 = vrcp.pop %v2356
        %v2387 = vrcp.pop %v2359
        %v2388 = vrcp.pop %v2362
        %v2389 = vrcp.pop %v2365
        %v2390 = vrcp.pop %v2368
        %v2391 = vrcp.pop %v2371
        %v2392 = vrcp.pop %v2374
        %v2393 = vrcp.pop %v2377
        %v2394 = vmul.f32 %v2299, %v2378
        %v2395 = vmul.f32 %v2301, %v2379
        %v2396 = vmul.f32 %v2303, %v2380
        %v2397 = vmul.f32 %v2305, %v2381
        %v2398 = vmul.f32 %v2307, %v2382
        %v2399 = vmul.f32 %v2309, %v2383
        %v2400 = vmul.f32 %v2311, %v2384
        %v2401 = vmul.f32 %v2313, %v2385
        %v2402 = vmul.f32 %v2315, %v2386
        %v2403 = vmul.f32 %v2317, %v2387
        %v2404 = vmul.f32 %v2319, %v2388
        %v2405 = vmul.f32 %v2321, %v2389
        %v2406 = vmul.f32 %v2323, %v2390
        %v2407 = vmul.f32 %v2325, %v2391
        %v2408 = vmul.f32 %v2327, %v2392
        %v2409 = vmul.f32 %v2329, %v2393
        %v2410 = vpack.c.bf16 %v2395, %v2394
        %v2411 = vpack.c.bf16 %v2397, %v2396
        %v2412 = vpack.c.bf16 %v2399, %v2398
        %v2413 = vpack.c.bf16 %v2401, %v2400
        %v2414 = vpack.c.bf16 %v2403, %v2402
        %v2415 = vpack.c.bf16 %v2405, %v2404
        %v2416 = vpack.c.bf16 %v2407, %v2406
        %v2417 = vpack.c.bf16 %v2409, %v2408
        %2418 = vrot.lane.b32.xlu0 %v1825, 96
        %v2419 = vpop.permute.xlu0 %2418
        %v2422 = vsel %vm1434, %v2410, 0
        %2424 = vmatprep.subr.bf16.mxu0 0
        %2425 = vmatpush1.bf16.msra.mxu0 %v2419
        %2426 = vmatprep.subr.bf16.mxu0 0
        %2427 = vmatpush1.bf16.msra.mxu0 0
        %2428 = vmatprep.subr.bf16.mxu0 0
        %2429 = vmatpush1.bf16.msra.mxu0 0
        %2430 = vmatprep.subr.bf16.mxu0 0
        %2431 = vmatpush1.bf16.msra.mxu0 0
        %2432 = vmatprep.subr.bf16.mxu0 0
        %2433 = vmatpush1.bf16.msra.mxu0 0
        %2434 = vmatprep.subr.bf16.mxu0 0
        %2435 = vmatpush1.bf16.msra.mxu0 0
        %2436 = vmatprep.subr.bf16.mxu0 0
        %2437 = vmatpush1.bf16.msra.mxu0 0
        %2438 = vmatprep.subr.bf16.mxu0 0
        %2439 = vmatpush1.bf16.msra.mxu0 0
        %2440 = vmatprep.subr.bf16.mxu0 0
        %2441 = vmatpush1.bf16.msra.mxu0 0
        %2442 = vmatprep.subr.bf16.mxu0 0
        %2443 = vmatpush1.bf16.msra.mxu0 0
        %2444 = vmatprep.subr.bf16.mxu0 0
        %2445 = vmatpush1.bf16.msra.mxu0 0
        %2446 = vmatprep.subr.bf16.mxu0 0
        %2447 = vmatpush1.bf16.msra.mxu0 0
        %2448 = vmatprep.subr.bf16.mxu0 0
        %2449 = vmatpush1.bf16.msra.mxu0 0
        %2450 = vmatprep.subr.bf16.mxu0 0
        %2451 = vmatpush1.bf16.msra.mxu0 0
        %2452 = vmatprep.subr.bf16.mxu0 0
        %2453 = vmatpush1.bf16.msra.mxu0 0
        %2454 = vmatprep.subr.bf16.mxu0 0
        %2455 = vmatpush1.bf16.msra.mxu0 0
        %2456 = vmatprep.mubr.bf16.mxu0 0
        %2457 = vmatmul.mubr.bf16.gmra.mrb[0].mxu0 %v2422
        %v2458 = vpop.f32.mrb[0].mxu0
        %v2459 = vadd.f32 0.0, %v2458
        %v2460 = vpop.f32.mrb[0].mxu0
        %v2461 = vpop.f32.mrb[0].mxu0
        %v2462 = vadd.f32 0.0, %v2461
        %v2463 = vpop.f32.mrb[0].mxu0
        %2464 = vdwg.mxu0
        %2465 = vrot.lane.b32.xlu0 %v1826, 96
        %v2466 = vpop.permute.xlu0 %2465
        %v2469 = vsel %vm1434, %v2411, 0
        %2471 = vmatprep.subr.bf16.mxu0 0
        %2472 = vmatpush1.bf16.msra.mxu0 %v2466
        %2473 = vmatprep.subr.bf16.mxu0 0
        %2474 = vmatpush1.bf16.msra.mxu0 0
        %2475 = vmatprep.subr.bf16.mxu0 0
        %2476 = vmatpush1.bf16.msra.mxu0 0
        %2477 = vmatprep.subr.bf16.mxu0 0
        %2478 = vmatpush1.bf16.msra.mxu0 0
        %2479 = vmatprep.subr.bf16.mxu0 0
        %2480 = vmatpush1.bf16.msra.mxu0 0
        %2481 = vmatprep.subr.bf16.mxu0 0
        %2482 = vmatpush1.bf16.msra.mxu0 0
        %2483 = vmatprep.subr.bf16.mxu0 0
        %2484 = vmatpush1.bf16.msra.mxu0 0
        %2485 = vmatprep.subr.bf16.mxu0 0
        %2486 = vmatpush1.bf16.msra.mxu0 0
        %2487 = vmatprep.subr.bf16.mxu0 0
        %2488 = vmatpush1.bf16.msra.mxu0 0
        %2489 = vmatprep.subr.bf16.mxu0 0
        %2490 = vmatpush1.bf16.msra.mxu0 0
        %2491 = vmatprep.subr.bf16.mxu0 0
        %2492 = vmatpush1.bf16.msra.mxu0 0
        %2493 = vmatprep.subr.bf16.mxu0 0
        %2494 = vmatpush1.bf16.msra.mxu0 0
        %2495 = vmatprep.subr.bf16.mxu0 0
        %2496 = vmatpush1.bf16.msra.mxu0 0
        %2497 = vmatprep.subr.bf16.mxu0 0
        %2498 = vmatpush1.bf16.msra.mxu0 0
        %2499 = vmatprep.subr.bf16.mxu0 0
        %2500 = vmatpush1.bf16.msra.mxu0 0
        %2501 = vmatprep.subr.bf16.mxu0 0
        %2502 = vmatpush1.bf16.msra.mxu0 0
        %2503 = vmatprep.mubr.bf16.mxu0 0
        %2504 = vmatmul.mubr.bf16.gmra.mrb[0].mxu0 %v2469
        %v2505 = vpop.f32.mrb[0].mxu0
        %v2506 = vadd.f32 0.0, %v2505
        %v2507 = vpop.f32.mrb[0].mxu0
        %v2508 = vpop.f32.mrb[0].mxu0
        %v2509 = vadd.f32 0.0, %v2508
        %v2510 = vpop.f32.mrb[0].mxu0
        %2511 = vdwg.mxu0
        %2512 = vrot.lane.b32.xlu0 %v1827, 96
        %v2513 = vpop.permute.xlu0 %2512
        %v2516 = vsel %vm1434, %v2412, 0
        %2518 = vmatprep.subr.bf16.mxu0 0
        %2519 = vmatpush1.bf16.msra.mxu0 %v2513
        %2520 = vmatprep.subr.bf16.mxu0 0
        %2521 = vmatpush1.bf16.msra.mxu0 0
        %2522 = vmatprep.subr.bf16.mxu0 0
        %2523 = vmatpush1.bf16.msra.mxu0 0
        %2524 = vmatprep.subr.bf16.mxu0 0
        %2525 = vmatpush1.bf16.msra.mxu0 0
        %2526 = vmatprep.subr.bf16.mxu0 0
        %2527 = vmatpush1.bf16.msra.mxu0 0
        %2528 = vmatprep.subr.bf16.mxu0 0
        %2529 = vmatpush1.bf16.msra.mxu0 0
        %2530 = vmatprep.subr.bf16.mxu0 0
        %2531 = vmatpush1.bf16.msra.mxu0 0
        %2532 = vmatprep.subr.bf16.mxu0 0
        %2533 = vmatpush1.bf16.msra.mxu0 0
        %2534 = vmatprep.subr.bf16.mxu0 0
        %2535 = vmatpush1.bf16.msra.mxu0 0
        %2536 = vmatprep.subr.bf16.mxu0 0
        %2537 = vmatpush1.bf16.msra.mxu0 0
        %2538 = vmatprep.subr.bf16.mxu0 0
        %2539 = vmatpush1.bf16.msra.mxu0 0
        %2540 = vmatprep.subr.bf16.mxu0 0
        %2541 = vmatpush1.bf16.msra.mxu0 0
        %2542 = vmatprep.subr.bf16.mxu0 0
        %2543 = vmatpush1.bf16.msra.mxu0 0
        %2544 = vmatprep.subr.bf16.mxu0 0
        %2545 = vmatpush1.bf16.msra.mxu0 0
        %2546 = vmatprep.subr.bf16.mxu0 0
        %2547 = vmatpush1.bf16.msra.mxu0 0
        %2548 = vmatprep.subr.bf16.mxu0 0
        %2549 = vmatpush1.bf16.msra.mxu0 0
        %2550 = vmatprep.mubr.bf16.mxu0 0
        %2551 = vmatmul.mubr.bf16.gmra.mrb[0].mxu0 %v2516
        %v2552 = vpop.f32.mrb[0].mxu0
        %v2553 = vadd.f32 0.0, %v2552
        %v2554 = vpop.f32.mrb[0].mxu0
        %v2555 = vpop.f32.mrb[0].mxu0
        %v2556 = vadd.f32 0.0, %v2555
        %v2557 = vpop.f32.mrb[0].mxu0
        %2558 = vdwg.mxu0
        %2559 = vrot.lane.b32.xlu0 %v1828, 96
        %v2560 = vpop.permute.xlu0 %2559
        %v2563 = vsel %vm1434, %v2413, 0
        %2565 = vmatprep.subr.bf16.mxu0 0
        %2566 = vmatpush1.bf16.msra.mxu0 %v2560
        %2567 = vmatprep.subr.bf16.mxu0 0
        %2568 = vmatpush1.bf16.msra.mxu0 0
        %2569 = vmatprep.subr.bf16.mxu0 0
        %2570 = vmatpush1.bf16.msra.mxu0 0
        %2571 = vmatprep.subr.bf16.mxu0 0
        %2572 = vmatpush1.bf16.msra.mxu0 0
        %2573 = vmatprep.subr.bf16.mxu0 0
        %2574 = vmatpush1.bf16.msra.mxu0 0
        %2575 = vmatprep.subr.bf16.mxu0 0
        %2576 = vmatpush1.bf16.msra.mxu0 0
        %2577 = vmatprep.subr.bf16.mxu0 0
        %2578 = vmatpush1.bf16.msra.mxu0 0
        %2579 = vmatprep.subr.bf16.mxu0 0
        %2580 = vmatpush1.bf16.msra.mxu0 0
        %2581 = vmatprep.subr.bf16.mxu0 0
        %2582 = vmatpush1.bf16.msra.mxu0 0
        %2583 = vmatprep.subr.bf16.mxu0 0
        %2584 = vmatpush1.bf16.msra.mxu0 0
        %2585 = vmatprep.subr.bf16.mxu0 0
        %2586 = vmatpush1.bf16.msra.mxu0 0
        %2587 = vmatprep.subr.bf16.mxu0 0
        %2588 = vmatpush1.bf16.msra.mxu0 0
        %2589 = vmatprep.subr.bf16.mxu0 0
        %2590 = vmatpush1.bf16.msra.mxu0 0
        %2591 = vmatprep.subr.bf16.mxu0 0
        %2592 = vmatpush1.bf16.msra.mxu0 0
        %2593 = vmatprep.subr.bf16.mxu0 0
        %2594 = vmatpush1.bf16.msra.mxu0 0
        %2595 = vmatprep.subr.bf16.mxu0 0
        %2596 = vmatpush1.bf16.msra.mxu0 0
        %2597 = vmatprep.mubr.bf16.mxu0 0
        %2598 = vmatmul.mubr.bf16.gmra.mrb[0].mxu0 %v2563
        %v2599 = vpop.f32.mrb[0].mxu0
        %v2600 = vadd.f32 0.0, %v2599
        %v2601 = vpop.f32.mrb[0].mxu0
        %v2602 = vpop.f32.mrb[0].mxu0
        %v2603 = vadd.f32 0.0, %v2602
        %v2604 = vpop.f32.mrb[0].mxu0
        %2605 = vdwg.mxu0
        %2606 = vrot.lane.b32.xlu0 %v1829, 96
        %v2607 = vpop.permute.xlu0 %2606
        %v2610 = vsel %vm1434, %v2414, 0
        %2612 = vmatprep.subr.bf16.mxu0 0
        %2613 = vmatpush1.bf16.msra.mxu0 %v2607
        %2614 = vmatprep.subr.bf16.mxu0 0
        %2615 = vmatpush1.bf16.msra.mxu0 0
        %2616 = vmatprep.subr.bf16.mxu0 0
        %2617 = vmatpush1.bf16.msra.mxu0 0
        %2618 = vmatprep.subr.bf16.mxu0 0
        %2619 = vmatpush1.bf16.msra.mxu0 0
        %2620 = vmatprep.subr.bf16.mxu0 0
        %2621 = vmatpush1.bf16.msra.mxu0 0
        %2622 = vmatprep.subr.bf16.mxu0 0
        %2623 = vmatpush1.bf16.msra.mxu0 0
        %2624 = vmatprep.subr.bf16.mxu0 0
        %2625 = vmatpush1.bf16.msra.mxu0 0
        %2626 = vmatprep.subr.bf16.mxu0 0
        %2627 = vmatpush1.bf16.msra.mxu0 0
        %2628 = vmatprep.subr.bf16.mxu0 0
        %2629 = vmatpush1.bf16.msra.mxu0 0
        %2630 = vmatprep.subr.bf16.mxu0 0
        %2631 = vmatpush1.bf16.msra.mxu0 0
        %2632 = vmatprep.subr.bf16.mxu0 0
        %2633 = vmatpush1.bf16.msra.mxu0 0
        %2634 = vmatprep.subr.bf16.mxu0 0
        %2635 = vmatpush1.bf16.msra.mxu0 0
        %2636 = vmatprep.subr.bf16.mxu0 0
        %2637 = vmatpush1.bf16.msra.mxu0 0
        %2638 = vmatprep.subr.bf16.mxu0 0
        %2639 = vmatpush1.bf16.msra.mxu0 0
        %2640 = vmatprep.subr.bf16.mxu0 0
        %2641 = vmatpush1.bf16.msra.mxu0 0
        %2642 = vmatprep.subr.bf16.mxu0 0
        %2643 = vmatpush1.bf16.msra.mxu0 0
        %2644 = vmatprep.mubr.bf16.mxu0 0
        %2645 = vmatmul.mubr.bf16.gmra.mrb[0].mxu0 %v2610
        %v2646 = vpop.f32.mrb[0].mxu0
        %v2647 = vadd.f32 0.0, %v2646
        %v2648 = vpop.f32.mrb[0].mxu0
        %v2649 = vpop.f32.mrb[0].mxu0
        %v2650 = vadd.f32 0.0, %v2649
        %v2651 = vpop.f32.mrb[0].mxu0
        %2652 = vdwg.mxu0
        %2653 = vrot.lane.b32.xlu0 %v1830, 96
        %v2654 = vpop.permute.xlu0 %2653
        %v2657 = vsel %vm1434, %v2415, 0
        %2659 = vmatprep.subr.bf16.mxu0 0
        %2660 = vmatpush1.bf16.msra.mxu0 %v2654
        %2661 = vmatprep.subr.bf16.mxu0 0
        %2662 = vmatpush1.bf16.msra.mxu0 0
        %2663 = vmatprep.subr.bf16.mxu0 0
        %2664 = vmatpush1.bf16.msra.mxu0 0
        %2665 = vmatprep.subr.bf16.mxu0 0
        %2666 = vmatpush1.bf16.msra.mxu0 0
        %2667 = vmatprep.subr.bf16.mxu0 0
        %2668 = vmatpush1.bf16.msra.mxu0 0
        %2669 = vmatprep.subr.bf16.mxu0 0
        %2670 = vmatpush1.bf16.msra.mxu0 0
        %2671 = vmatprep.subr.bf16.mxu0 0
        %2672 = vmatpush1.bf16.msra.mxu0 0
        %2673 = vmatprep.subr.bf16.mxu0 0
        %2674 = vmatpush1.bf16.msra.mxu0 0
        %2675 = vmatprep.subr.bf16.mxu0 0
        %2676 = vmatpush1.bf16.msra.mxu0 0
        %2677 = vmatprep.subr.bf16.mxu0 0
        %2678 = vmatpush1.bf16.msra.mxu0 0
        %2679 = vmatprep.subr.bf16.mxu0 0
        %2680 = vmatpush1.bf16.msra.mxu0 0
        %2681 = vmatprep.subr.bf16.mxu0 0
        %2682 = vmatpush1.bf16.msra.mxu0 0
        %2683 = vmatprep.subr.bf16.mxu0 0
        %2684 = vmatpush1.bf16.msra.mxu0 0
        %2685 = vmatprep.subr.bf16.mxu0 0
        %2686 = vmatpush1.bf16.msra.mxu0 0
        %2687 = vmatprep.subr.bf16.mxu0 0
        %2688 = vmatpush1.bf16.msra.mxu0 0
        %2689 = vmatprep.subr.bf16.mxu0 0
        %2690 = vmatpush1.bf16.msra.mxu0 0
        %2691 = vmatprep.mubr.bf16.mxu0 0
        %2692 = vmatmul.mubr.bf16.gmra.mrb[0].mxu0 %v2657
        %v2693 = vpop.f32.mrb[0].mxu0
        %v2694 = vadd.f32 0.0, %v2693
        %v2695 = vpop.f32.mrb[0].mxu0
        %v2696 = vpop.f32.mrb[0].mxu0
        %v2697 = vadd.f32 0.0, %v2696
        %v2698 = vpop.f32.mrb[0].mxu0
        %2699 = vdwg.mxu0
        %2700 = vrot.lane.b32.xlu0 %v1831, 96
        %v2701 = vpop.permute.xlu0 %2700
        %v2704 = vsel %vm1434, %v2416, 0
        %2706 = vmatprep.subr.bf16.mxu0 0
        %2707 = vmatpush1.bf16.msra.mxu0 %v2701
        %2708 = vmatprep.subr.bf16.mxu0 0
        %2709 = vmatpush1.bf16.msra.mxu0 0
        %2710 = vmatprep.subr.bf16.mxu0 0
        %2711 = vmatpush1.bf16.msra.mxu0 0
        %2712 = vmatprep.subr.bf16.mxu0 0
        %2713 = vmatpush1.bf16.msra.mxu0 0
        %2714 = vmatprep.subr.bf16.mxu0 0
        %2715 = vmatpush1.bf16.msra.mxu0 0
        %2716 = vmatprep.subr.bf16.mxu0 0
        %2717 = vmatpush1.bf16.msra.mxu0 0
        %2718 = vmatprep.subr.bf16.mxu0 0
        %2719 = vmatpush1.bf16.msra.mxu0 0
        %2720 = vmatprep.subr.bf16.mxu0 0
        %2721 = vmatpush1.bf16.msra.mxu0 0
        %2722 = vmatprep.subr.bf16.mxu0 0
        %2723 = vmatpush1.bf16.msra.mxu0 0
        %2724 = vmatprep.subr.bf16.mxu0 0
        %2725 = vmatpush1.bf16.msra.mxu0 0
        %2726 = vmatprep.subr.bf16.mxu0 0
        %2727 = vmatpush1.bf16.msra.mxu0 0
        %2728 = vmatprep.subr.bf16.mxu0 0
        %2729 = vmatpush1.bf16.msra.mxu0 0
        %2730 = vmatprep.subr.bf16.mxu0 0
        %2731 = vmatpush1.bf16.msra.mxu0 0
        %2732 = vmatprep.subr.bf16.mxu0 0
        %2733 = vmatpush1.bf16.msra.mxu0 0
        %2734 = vmatprep.subr.bf16.mxu0 0
        %2735 = vmatpush1.bf16.msra.mxu0 0
        %2736 = vmatprep.subr.bf16.mxu0 0
        %2737 = vmatpush1.bf16.msra.mxu0 0
        %2738 = vmatprep.mubr.bf16.mxu0 0
        %2739 = vmatmul.mubr.bf16.gmra.mrb[0].mxu0 %v2704
        %v2740 = vpop.f32.mrb[0].mxu0
        %v2741 = vadd.f32 0.0, %v2740
        %v2742 = vpop.f32.mrb[0].mxu0
        %v2743 = vpop.f32.mrb[0].mxu0
        %v2744 = vadd.f32 0.0, %v2743
        %v2745 = vpop.f32.mrb[0].mxu0
        %2746 = vdwg.mxu0
        %2747 = vrot.lane.b32.xlu0 %v1832, 96
        %v2748 = vpop.permute.xlu0 %2747
        %v2751 = vsel %vm1434, %v2417, 0
        %2753 = vmatprep.subr.bf16.mxu0 0
        %2754 = vmatpush1.bf16.msra.mxu0 %v2748
        %2755 = vmatprep.subr.bf16.mxu0 0
        %2756 = vmatpush1.bf16.msra.mxu0 0
        %2757 = vmatprep.subr.bf16.mxu0 0
        %2758 = vmatpush1.bf16.msra.mxu0 0
        %2759 = vmatprep.subr.bf16.mxu0 0
        %2760 = vmatpush1.bf16.msra.mxu0 0
        %2761 = vmatprep.subr.bf16.mxu0 0
        %2762 = vmatpush1.bf16.msra.mxu0 0
        %2763 = vmatprep.subr.bf16.mxu0 0
        %2764 = vmatpush1.bf16.msra.mxu0 0
        %2765 = vmatprep.subr.bf16.mxu0 0
        %2766 = vmatpush1.bf16.msra.mxu0 0
        %2767 = vmatprep.subr.bf16.mxu0 0
        %2768 = vmatpush1.bf16.msra.mxu0 0
        %2769 = vmatprep.subr.bf16.mxu0 0
        %2770 = vmatpush1.bf16.msra.mxu0 0
        %2771 = vmatprep.subr.bf16.mxu0 0
        %2772 = vmatpush1.bf16.msra.mxu0 0
        %2773 = vmatprep.subr.bf16.mxu0 0
        %2774 = vmatpush1.bf16.msra.mxu0 0
        %2775 = vmatprep.subr.bf16.mxu0 0
        %2776 = vmatpush1.bf16.msra.mxu0 0
        %2777 = vmatprep.subr.bf16.mxu0 0
        %2778 = vmatpush1.bf16.msra.mxu0 0
        %2779 = vmatprep.subr.bf16.mxu0 0
        %2780 = vmatpush1.bf16.msra.mxu0 0
        %2781 = vmatprep.subr.bf16.mxu0 0
        %2782 = vmatpush1.bf16.msra.mxu0 0
        %2783 = vmatprep.subr.bf16.mxu0 0
        %2784 = vmatpush1.bf16.msra.mxu0 0
        %2785 = vmatprep.mubr.bf16.mxu0 0
        %2786 = vmatmul.mubr.bf16.gmra.mrb[0].mxu0 %v2751
        %v2787 = vpop.f32.mrb[0].mxu0
        %v2788 = vadd.f32 0.0, %v2787
        %v2789 = vpop.f32.mrb[0].mxu0
        %v2790 = vpop.f32.mrb[0].mxu0
        %v2791 = vadd.f32 0.0, %v2790
        %v2792 = vpop.f32.mrb[0].mxu0
        %2793 = vdwg.mxu0
        %v2794 = vpack.c.bf16 %v2462, %v2459
        %v2795 = vpack.c.bf16 %v2509, %v2506
        %v2796 = vpack.c.bf16 %v2556, %v2553
        %v2797 = vpack.c.bf16 %v2603, %v2600
        %v2798 = vpack.c.bf16 %v2650, %v2647
        %v2799 = vpack.c.bf16 %v2697, %v2694
        %v2800 = vpack.c.bf16 %v2744, %v2741
        %v2801 = vpack.c.bf16 %v2791, %v2788
        %v2803 = vsel %vm1836, %v2794, 0
        %v2806 = vsel %vm1836, %v2795, 0
        %v2809 = vsel %vm1836, %v2796, 0
        %v2812 = vsel %vm1836, %v2797, 0
        %vm2814 = vcmask 1043456
        %v2816 = vsel %vm2814, %v1245, 0
        %2818 = vmatprep.subr.bf16.mxu0 0
        %2819 = vmatpush1.bf16.msra.mxu0 %v2816
        %2820 = vmatprep.subr.bf16.mxu0 0
        %2821 = vmatpush1.bf16.msra.mxu0 0
        %2822 = vmatprep.subr.bf16.mxu0 0
        %2823 = vmatpush1.bf16.msra.mxu0 0
        %2824 = vmatprep.subr.bf16.mxu0 0
        %2825 = vmatpush1.bf16.msra.mxu0 0
        %2826 = vmatprep.subr.bf16.mxu0 0
        %2827 = vmatpush1.bf16.msra.mxu0 0
        %2828 = vmatprep.subr.bf16.mxu0 0
        %2829 = vmatpush1.bf16.msra.mxu0 0
        %2830 = vmatprep.subr.bf16.mxu0 0
        %2831 = vmatpush1.bf16.msra.mxu0 0
        %2832 = vmatprep.subr.bf16.mxu0 0
        %2833 = vmatpush1.bf16.msra.mxu0 0
        %2834 = vmatprep.subr.bf16.mxu0 0
        %2835 = vmatpush1.bf16.msra.mxu0 0
        %2836 = vmatprep.subr.bf16.mxu0 0
        %2837 = vmatpush1.bf16.msra.mxu0 0
        %2838 = vmatprep.subr.bf16.mxu0 0
        %2839 = vmatpush1.bf16.msra.mxu0 0
        %2840 = vmatprep.subr.bf16.mxu0 0
        %2841 = vmatpush1.bf16.msra.mxu0 0
        %2842 = vmatprep.subr.bf16.mxu0 0
        %2843 = vmatpush1.bf16.msra.mxu0 0
        %2844 = vmatprep.subr.bf16.mxu0 0
        %2845 = vmatpush1.bf16.msra.mxu0 0
        %2846 = vmatprep.subr.bf16.mxu0 0
        %2847 = vmatpush1.bf16.msra.mxu0 0
        %2848 = vmatprep.subr.bf16.mxu0 0
        %2849 = vmatpush1.bf16.msra.mxu0 0
        %2850 = vmatprep.mubr.bf16.mxu0 0
        %2851 = vmatmul.mubr.bf16.gmra.mrb[0].mxu0 %v2803
        %v2852 = vpop.f32.mrb[0].mxu0
        %v2853 = vadd.f32 0.0, %v2852
        %v2854 = vpop.f32.mrb[0].mxu0
        %v2855 = vpop.f32.mrb[0].mxu0
        %v2856 = vadd.f32 0.0, %v2855
        %v2857 = vpop.f32.mrb[0].mxu0
        %2858 = vmatprep.mubr.bf16.mxu0 0
        %2859 = vmatmul.mubr.bf16.gmra.mrb[0].mxu0 %v2806
        %v2860 = vpop.f32.mrb[0].mxu0
        %v2861 = vadd.f32 0.0, %v2860
        %v2862 = vpop.f32.mrb[0].mxu0
        %v2863 = vpop.f32.mrb[0].mxu0
        %v2864 = vadd.f32 0.0, %v2863
        %v2865 = vpop.f32.mrb[0].mxu0
        %2866 = vmatprep.mubr.bf16.mxu0 0
        %2867 = vmatmul.mubr.bf16.gmra.mrb[0].mxu0 %v2809
        %v2868 = vpop.f32.mrb[0].mxu0
        %v2869 = vadd.f32 0.0, %v2868
        %v2870 = vpop.f32.mrb[0].mxu0
        %v2871 = vpop.f32.mrb[0].mxu0
        %v2872 = vadd.f32 0.0, %v2871
        %v2873 = vpop.f32.mrb[0].mxu0
        %2874 = vmatprep.mubr.bf16.mxu0 0
        %2875 = vmatmul.mubr.bf16.gmra.mrb[0].mxu0 %v2812
        %v2876 = vpop.f32.mrb[0].mxu0
        %v2877 = vadd.f32 0.0, %v2876
        %v2878 = vpop.f32.mrb[0].mxu0
        %v2879 = vpop.f32.mrb[0].mxu0
        %v2880 = vadd.f32 0.0, %v2879
        %v2881 = vpop.f32.mrb[0].mxu0
        %2882 = vdwg.mxu0
        %v2884 = vsel %vm1836, %v2798, 0
        %v2887 = vsel %vm1836, %v2799, 0
        %v2890 = vsel %vm1836, %v2800, 0
        %v2893 = vsel %vm1836, %v2801, 0
        %v2896 = vsel %vm2814, %v1246, 0
        %2898 = vmatprep.subr.bf16.mxu0 0
        %2899 = vmatpush1.bf16.msra.mxu0 %v2896
        %2900 = vmatprep.subr.bf16.mxu0 0
        %2901 = vmatpush1.bf16.msra.mxu0 0
        %2902 = vmatprep.subr.bf16.mxu0 0
        %2903 = vmatpush1.bf16.msra.mxu0 0
        %2904 = vmatprep.subr.bf16.mxu0 0
        %2905 = vmatpush1.bf16.msra.mxu0 0
        %2906 = vmatprep.subr.bf16.mxu0 0
        %2907 = vmatpush1.bf16.msra.mxu0 0
        %2908 = vmatprep.subr.bf16.mxu0 0
        %2909 = vmatpush1.bf16.msra.mxu0 0
        %2910 = vmatprep.subr.bf16.mxu0 0
        %2911 = vmatpush1.bf16.msra.mxu0 0
        %2912 = vmatprep.subr.bf16.mxu0 0
        %2913 = vmatpush1.bf16.msra.mxu0 0
        %2914 = vmatprep.subr.bf16.mxu0 0
        %2915 = vmatpush1.bf16.msra.mxu0 0
        %2916 = vmatprep.subr.bf16.mxu0 0
        %2917 = vmatpush1.bf16.msra.mxu0 0
        %2918 = vmatprep.subr.bf16.mxu0 0
        %2919 = vmatpush1.bf16.msra.mxu0 0
        %2920 = vmatprep.subr.bf16.mxu0 0
        %2921 = vmatpush1.bf16.msra.mxu0 0
        %2922 = vmatprep.subr.bf16.mxu0 0
        %2923 = vmatpush1.bf16.msra.mxu0 0
        %2924 = vmatprep.subr.bf16.mxu0 0
        %2925 = vmatpush1.bf16.msra.mxu0 0
        %2926 = vmatprep.subr.bf16.mxu0 0
        %2927 = vmatpush1.bf16.msra.mxu0 0
        %2928 = vmatprep.subr.bf16.mxu0 0
        %2929 = vmatpush1.bf16.msra.mxu0 0
        %2930 = vmatprep.mubr.bf16.mxu0 0
        %2931 = vmatmul.mubr.bf16.gmra.mrb[0].mxu0 %v2884
        %v2932 = vpop.f32.mrb[0].mxu0
        %v2933 = vadd.f32 0.0, %v2932
        %v2934 = vpop.f32.mrb[0].mxu0
        %v2935 = vpop.f32.mrb[0].mxu0
        %v2936 = vadd.f32 0.0, %v2935
        %v2937 = vpop.f32.mrb[0].mxu0
        %2938 = vmatprep.mubr.bf16.mxu0 0
        %2939 = vmatmul.mubr.bf16.gmra.mrb[0].mxu0 %v2887
        %v2940 = vpop.f32.mrb[0].mxu0
        %v2941 = vadd.f32 0.0, %v2940
        %v2942 = vpop.f32.mrb[0].mxu0
        %v2943 = vpop.f32.mrb[0].mxu0
        %v2944 = vadd.f32 0.0, %v2943
        %v2945 = vpop.f32.mrb[0].mxu0
        %2946 = vmatprep.mubr.bf16.mxu0 0
        %2947 = vmatmul.mubr.bf16.gmra.mrb[0].mxu0 %v2890
        %v2948 = vpop.f32.mrb[0].mxu0
        %v2949 = vadd.f32 0.0, %v2948
        %v2950 = vpop.f32.mrb[0].mxu0
        %v2951 = vpop.f32.mrb[0].mxu0
        %v2952 = vadd.f32 0.0, %v2951
        %v2953 = vpop.f32.mrb[0].mxu0
        %2954 = vmatprep.mubr.bf16.mxu0 0
        %2955 = vmatmul.mubr.bf16.gmra.mrb[0].mxu0 %v2893
        %v2956 = vpop.f32.mrb[0].mxu0
        %v2957 = vadd.f32 0.0, %v2956
        %v2958 = vpop.f32.mrb[0].mxu0
        %v2959 = vpop.f32.mrb[0].mxu0
        %v2960 = vadd.f32 0.0, %v2959
        %v2961 = vpop.f32.mrb[0].mxu0
        %2962 = vdwg.mxu0
        %v2963 = vsel %vm1434, %v2853, 0.0
        %v2964 = vsel %vm1434, %v2933, 0.0
        %v2965 = vadd.f32 %v2963, %v2964
        %v2966 = vsel %vm1434, %v2856, 0.0
        %v2967 = vsel %vm1434, %v2936, 0.0
        %v2968 = vadd.f32 %v2966, %v2967
        %v2969 = vsel %vm1434, %v2861, 0.0
        %v2970 = vsel %vm1434, %v2941, 0.0
        %v2971 = vadd.f32 %v2969, %v2970
        %v2972 = vsel %vm1434, %v2864, 0.0
        %v2973 = vsel %vm1434, %v2944, 0.0
        %v2974 = vadd.f32 %v2972, %v2973
        %v2975 = vsel %vm1434, %v2869, 0.0
        %v2976 = vsel %vm1434, %v2949, 0.0
        %v2977 = vadd.f32 %v2975, %v2976
        %v2978 = vsel %vm1434, %v2872, 0.0
        %v2979 = vsel %vm1434, %v2952, 0.0
        %v2980 = vadd.f32 %v2978, %v2979
        %v2981 = vsel %vm1434, %v2877, 0.0
        %v2982 = vsel %vm1434, %v2957, 0.0
        %v2983 = vadd.f32 %v2981, %v2982
        %v2984 = vsel %vm1434, %v2880, 0.0
        %v2985 = vsel %vm1434, %v2960, 0.0
        %v2986 = vadd.f32 %v2984, %v2985
        %v2988 = vlaneseq
        %v2989 = vshrl.u32 %v2988, 7
        %v2990 = vsub.s32 0, %v2989
        %v2991 = vrot.slane %v1247, %v2990
        %v2993 = vadd.f32 %v2965, %v2991
        %v2994 = vadd.f32 %v2968, %v2991
        %v2995 = vadd.f32 %v2971, %v2991
        %v2996 = vadd.f32 %v2974, %v2991
        %v2997 = vadd.f32 %v2977, %v2991
        %v2998 = vadd.f32 %v2980, %v2991
        %v2999 = vadd.f32 %v2983, %v2991
        %v3000 = vadd.f32 %v2986, %v2991
        %v3001 = vadd.f32 %v1560, %v2993
        %v3002 = vadd.f32 %v1561, %v2994
        %v3003 = vadd.f32 %v1562, %v2995
        %v3004 = vadd.f32 %v1563, %v2996
        %v3005 = vadd.f32 %v1564, %v2997
        %v3006 = vadd.f32 %v1565, %v2998
        %v3007 = vadd.f32 %v1566, %v2999
        %v3008 = vadd.f32 %v1567, %v3000
        %v3009 = vsel %vm1434, %v3001, 0.0
        %3010 = vadd.xlane.f32.xlu0 %v3009
        %v3011 = vpop.xlane.xlu0 %3010
        %v3012 = vsel %vm1434, %v3002, 0.0
        %3013 = vadd.xlane.f32.xlu0 %v3012
        %v3014 = vpop.xlane.xlu0 %3013
        %v3015 = vsel %vm1434, %v3003, 0.0
        %3016 = vadd.xlane.f32.xlu0 %v3015
        %v3017 = vpop.xlane.xlu0 %3016
        %v3018 = vsel %vm1434, %v3004, 0.0
        %3019 = vadd.xlane.f32.xlu0 %v3018
        %v3020 = vpop.xlane.xlu0 %3019
        %v3021 = vsel %vm1434, %v3005, 0.0
        %3022 = vadd.xlane.f32.xlu0 %v3021
        %v3023 = vpop.xlane.xlu0 %3022
        %v3024 = vsel %vm1434, %v3006, 0.0
        %3025 = vadd.xlane.f32.xlu0 %v3024
        %v3026 = vpop.xlane.xlu0 %3025
        %v3027 = vsel %vm1434, %v3007, 0.0
        %3028 = vadd.xlane.f32.xlu0 %v3027
        %v3029 = vpop.xlane.xlu0 %3028
        %v3030 = vsel %vm1434, %v3008, 0.0
        %3031 = vadd.xlane.f32.xlu0 %v3030
        %v3032 = vpop.xlane.xlu0 %3031
        %v3033 = vmul.f32 %v3011, %v1459
        %v3034 = vmul.f32 %v3014, %v1459
        %v3035 = vmul.f32 %v3017, %v1459
        %v3036 = vmul.f32 %v3020, %v1459
        %v3037 = vmul.f32 %v3023, %v1459
        %v3038 = vmul.f32 %v3026, %v1459
        %v3039 = vmul.f32 %v3029, %v1459
        %v3040 = vmul.f32 %v3032, %v1459
        %v3041 = vsub.f32 %v3001, %v3033
        %v3042 = vsub.f32 %v3002, %v3034
        %v3043 = vsub.f32 %v3003, %v3035
        %v3044 = vsub.f32 %v3004, %v3036
        %v3045 = vsub.f32 %v3005, %v3037
        %v3046 = vsub.f32 %v3006, %v3038
        %v3047 = vsub.f32 %v3007, %v3039
        %v3048 = vsub.f32 %v3008, %v3040
        %v3049 = vmul.f32 %v3041, %v3041
        %v3050 = vmul.f32 %v3042, %v3042
        %v3051 = vmul.f32 %v3043, %v3043
        %v3052 = vmul.f32 %v3044, %v3044
        %v3053 = vmul.f32 %v3045, %v3045
        %v3054 = vmul.f32 %v3046, %v3046
        %v3055 = vmul.f32 %v3047, %v3047
        %v3056 = vmul.f32 %v3048, %v3048
        %v3057 = vsel %vm1434, %v3049, 0.0
        %3058 = vadd.xlane.f32.xlu0 %v3057
        %v3059 = vpop.xlane.xlu0 %3058
        %v3060 = vsel %vm1434, %v3050, 0.0
        %3061 = vadd.xlane.f32.xlu0 %v3060
        %v3062 = vpop.xlane.xlu0 %3061
        %v3063 = vsel %vm1434, %v3051, 0.0
        %3064 = vadd.xlane.f32.xlu0 %v3063
        %v3065 = vpop.xlane.xlu0 %3064
        %v3066 = vsel %vm1434, %v3052, 0.0
        %3067 = vadd.xlane.f32.xlu0 %v3066
        %v3068 = vpop.xlane.xlu0 %3067
        %v3069 = vsel %vm1434, %v3053, 0.0
        %3070 = vadd.xlane.f32.xlu0 %v3069
        %v3071 = vpop.xlane.xlu0 %3070
        %v3072 = vsel %vm1434, %v3054, 0.0
        %3073 = vadd.xlane.f32.xlu0 %v3072
        %v3074 = vpop.xlane.xlu0 %3073
        %v3075 = vsel %vm1434, %v3055, 0.0
        %3076 = vadd.xlane.f32.xlu0 %v3075
        %v3077 = vpop.xlane.xlu0 %3076
        %v3078 = vsel %vm1434, %v3056, 0.0
        %3079 = vadd.xlane.f32.xlu0 %v3078
        %v3080 = vpop.xlane.xlu0 %3079
        %v3081 = vmul.f32 %v3059, %v1459
        %v3082 = vmul.f32 %v3062, %v1459
        %v3083 = vmul.f32 %v3065, %v1459
        %v3084 = vmul.f32 %v3068, %v1459
        %v3085 = vmul.f32 %v3071, %v1459
        %v3086 = vmul.f32 %v3074, %v1459
        %v3087 = vmul.f32 %v3077, %v1459
        %v3088 = vmul.f32 %v3080, %v1459
        %v3089 = vadd.f32 %v3081, 1e-05
        %v3090 = vadd.f32 %v3082, 1e-05
        %v3091 = vadd.f32 %v3083, 1e-05
        %v3092 = vadd.f32 %v3084, 1e-05
        %v3093 = vadd.f32 %v3085, 1e-05
        %v3094 = vadd.f32 %v3086, 1e-05
        %v3095 = vadd.f32 %v3087, 1e-05
        %v3096 = vadd.f32 %v3088, 1e-05
        %v3097 = vrsqrt.pop %v3089
        %v3098 = vrsqrt.pop %v3090
        %v3099 = vrsqrt.pop %v3091
        %v3100 = vrsqrt.pop %v3092
        %v3101 = vrsqrt.pop %v3093
        %v3102 = vrsqrt.pop %v3094
        %v3103 = vrsqrt.pop %v3095
        %v3104 = vrsqrt.pop %v3096
        %v3105 = vmul.f32 %v3041, %v3097
        %v3106 = vmul.f32 %v3042, %v3098
        %v3107 = vmul.f32 %v3043, %v3099
        %v3108 = vmul.f32 %v3044, %v3100
        %v3109 = vmul.f32 %v3045, %v3101
        %v3110 = vmul.f32 %v3046, %v3102
        %v3111 = vmul.f32 %v3047, %v3103
        %v3112 = vmul.f32 %v3048, %v3104
        %v3114 = vlaneseq
        %v3115 = vshrl.u32 %v3114, 7
        %v3116 = vsub.s32 0, %v3115
        %v3117 = vrot.slane %v1248, %v3116
        %v3119 = vmul.f32 %v3105, %v3117
        %v3120 = vmul.f32 %v3106, %v3117
        %v3121 = vmul.f32 %v3107, %v3117
        %v3122 = vmul.f32 %v3108, %v3117
        %v3123 = vmul.f32 %v3109, %v3117
        %v3124 = vmul.f32 %v3110, %v3117
        %v3125 = vmul.f32 %v3111, %v3117
        %v3126 = vmul.f32 %v3112, %v3117
        %v3128 = vlaneseq
        %v3129 = vshrl.u32 %v3128, 7
        %v3130 = vsub.s32 0, %v3129
        %v3131 = vrot.slane %v1249, %v3130
        %v3133 = vadd.f32 %v3119, %v3131
        %v3134 = vadd.f32 %v3120, %v3131
        %v3135 = vadd.f32 %v3121, %v3131
        %v3136 = vadd.f32 %v3122, %v3131
        %v3137 = vadd.f32 %v3123, %v3131
        %v3138 = vadd.f32 %v3124, %v3131
        %v3139 = vadd.f32 %v3125, %v3131
        %v3140 = vadd.f32 %v3126, %v3131
        %v3141 = vpack.c.bf16 %v3134, %v3133
        %v3142 = vpack.c.bf16 %v3136, %v3135
        %v3143 = vpack.c.bf16 %v3138, %v3137
        %v3144 = vpack.c.bf16 %v3140, %v3139
        %v3146 = vlaneseq
        %v3147 = vshrl.u32 %v3146, 7
        %v3148 = vsub.s32 0, %v3147
        %v3149 = vrot.slane %v1252, %v3148
        %v3153 = vunpack.c.l.b16 %v1250
        %v3154 = vunpack.c.l.b16 %v1251
        %v3155 = vpack.c.b16 %v3154, %v3153
        %v3158 = vsel %vm1434, %v3141, 0
        %v3161 = vsel %vm1434, %v3142, 0
        %v3164 = vsel %vm1434, %v3143, 0
        %v3167 = vsel %vm1434, %v3144, 0
        %3169 = vmatprep.subr.bf16.mxu0 0
        %3170 = vmatpush1.bf16.msra.mxu0 %v3155
        %3171 = vmatprep.subr.bf16.mxu0 0
        %3172 = vmatpush1.bf16.msra.mxu0 0
        %3173 = vmatprep.subr.bf16.mxu0 0
        %3174 = vmatpush1.bf16.msra.mxu0 0
        %3175 = vmatprep.subr.bf16.mxu0 0
        %3176 = vmatpush1.bf16.msra.mxu0 0
        %3177 = vmatprep.subr.bf16.mxu0 0
        %3178 = vmatpush1.bf16.msra.mxu0 0
        %3179 = vmatprep.subr.bf16.mxu0 0
        %3180 = vmatpush1.bf16.msra.mxu0 0
        %3181 = vmatprep.subr.bf16.mxu0 0
        %3182 = vmatpush1.bf16.msra.mxu0 0
        %3183 = vmatprep.subr.bf16.mxu0 0
        %3184 = vmatpush1.bf16.msra.mxu0 0
        %3185 = vmatprep.subr.bf16.mxu0 0
        %3186 = vmatpush1.bf16.msra.mxu0 0
        %3187 = vmatprep.subr.bf16.mxu0 0
        %3188 = vmatpush1.bf16.msra.mxu0 0
        %3189 = vmatprep.subr.bf16.mxu0 0
        %3190 = vmatpush1.bf16.msra.mxu0 0
        %3191 = vmatprep.subr.bf16.mxu0 0
        %3192 = vmatpush1.bf16.msra.mxu0 0
        %3193 = vmatprep.subr.bf16.mxu0 0
        %3194 = vmatpush1.bf16.msra.mxu0 0
        %3195 = vmatprep.subr.bf16.mxu0 0
        %3196 = vmatpush1.bf16.msra.mxu0 0
        %3197 = vmatprep.subr.bf16.mxu0 0
        %3198 = vmatpush1.bf16.msra.mxu0 0
        %3199 = vmatprep.subr.bf16.mxu0 0
        %3200 = vmatpush1.bf16.msra.mxu0 0
        %3201 = vmatprep.mubr.bf16.mxu0 0
        %3202 = vmatmul.mubr.bf16.gmra.mrb[0].mxu0 %v3158
        %v3203 = vpop.f32.mrb[0].mxu0
        %v3204 = vadd.f32 %v3149, %v3203
        %v3205 = vpop.f32.mrb[0].mxu0
        %v3206 = vpop.f32.mrb[0].mxu0
        %v3207 = vadd.f32 %v3149, %v3206
        %v3208 = vpop.f32.mrb[0].mxu0
        %3209 = vmatprep.mubr.bf16.mxu0 0
        %3210 = vmatmul.mubr.bf16.gmra.mrb[0].mxu0 %v3161
        %v3211 = vpop.f32.mrb[0].mxu0
        %v3212 = vadd.f32 %v3149, %v3211
        %v3213 = vpop.f32.mrb[0].mxu0
        %v3214 = vpop.f32.mrb[0].mxu0
        %v3215 = vadd.f32 %v3149, %v3214
        %v3216 = vpop.f32.mrb[0].mxu0
        %3217 = vmatprep.mubr.bf16.mxu0 0
        %3218 = vmatmul.mubr.bf16.gmra.mrb[0].mxu0 %v3164
        %v3219 = vpop.f32.mrb[0].mxu0
        %v3220 = vadd.f32 %v3149, %v3219
        %v3221 = vpop.f32.mrb[0].mxu0
        %v3222 = vpop.f32.mrb[0].mxu0
        %v3223 = vadd.f32 %v3149, %v3222
        %v3224 = vpop.f32.mrb[0].mxu0
        %3225 = vmatprep.mubr.bf16.mxu0 0
        %3226 = vmatmul.mubr.bf16.gmra.mrb[0].mxu0 %v3167
        %v3227 = vpop.f32.mrb[0].mxu0
        %v3228 = vadd.f32 %v3149, %v3227
        %v3229 = vpop.f32.mrb[0].mxu0
        %v3230 = vpop.f32.mrb[0].mxu0
        %v3231 = vadd.f32 %v3149, %v3230
        %v3232 = vpop.f32.mrb[0].mxu0
        %3233 = vdwg.mxu0
        %v3234 = vmul.f32 %v3204, %v3204
        %v3235 = vmul.f32 %v3207, %v3207
        %v3236 = vmul.f32 %v3212, %v3212
        %v3237 = vmul.f32 %v3215, %v3215
        %v3238 = vmul.f32 %v3220, %v3220
        %v3239 = vmul.f32 %v3223, %v3223
        %v3240 = vmul.f32 %v3228, %v3228
        %v3241 = vmul.f32 %v3231, %v3231
        %v3242 = vmul.f32 %v3204, %v3234
        %v3243 = vmul.f32 %v3207, %v3235
        %v3244 = vmul.f32 %v3212, %v3236
        %v3245 = vmul.f32 %v3215, %v3237
        %v3246 = vmul.f32 %v3220, %v3238
        %v3247 = vmul.f32 %v3223, %v3239
        %v3248 = vmul.f32 %v3228, %v3240
        %v3249 = vmul.f32 %v3231, %v3241
        %v3250 = vmul.f32 %v3242, 0.044715
        %v3251 = vmul.f32 %v3243, 0.044715
        %v3252 = vmul.f32 %v3244, 0.044715
        %v3253 = vmul.f32 %v3245, 0.044715
        %v3254 = vmul.f32 %v3246, 0.044715
        %v3255 = vmul.f32 %v3247, 0.044715
        %v3256 = vmul.f32 %v3248, 0.044715
        %v3257 = vmul.f32 %v3249, 0.044715
        %v3258 = vadd.f32 %v3204, %v3250
        %v3259 = vadd.f32 %v3207, %v3251
        %v3260 = vadd.f32 %v3212, %v3252
        %v3261 = vadd.f32 %v3215, %v3253
        %v3262 = vadd.f32 %v3220, %v3254
        %v3263 = vadd.f32 %v3223, %v3255
        %v3264 = vadd.f32 %v3228, %v3256
        %v3265 = vadd.f32 %v3231, %v3257
        %v3266 = vmul.f32 %v3258, 0.7978846
        %v3267 = vmul.f32 %v3259, 0.7978846
        %v3268 = vmul.f32 %v3260, 0.7978846
        %v3269 = vmul.f32 %v3261, 0.7978846
        %v3270 = vmul.f32 %v3262, 0.7978846
        %v3271 = vmul.f32 %v3263, 0.7978846
        %v3272 = vmul.f32 %v3264, 0.7978846
        %v3273 = vmul.f32 %v3265, 0.7978846
        %v3274 = vtanh.pop %v3266
        %v3275 = vtanh.pop %v3267
        %v3276 = vtanh.pop %v3268
        %v3277 = vtanh.pop %v3269
        %v3278 = vtanh.pop %v3270
        %v3279 = vtanh.pop %v3271
        %v3280 = vtanh.pop %v3272
        %v3281 = vtanh.pop %v3273
        %v3282 = vadd.f32 %v3274, 1.0
        %v3283 = vadd.f32 %v3275, 1.0
        %v3284 = vadd.f32 %v3276, 1.0
        %v3285 = vadd.f32 %v3277, 1.0
        %v3286 = vadd.f32 %v3278, 1.0
        %v3287 = vadd.f32 %v3279, 1.0
        %v3288 = vadd.f32 %v3280, 1.0
        %v3289 = vadd.f32 %v3281, 1.0
        %v3290 = vmul.f32 %v3282, 0.5
        %v3291 = vmul.f32 %v3283, 0.5
        %v3292 = vmul.f32 %v3284, 0.5
        %v3293 = vmul.f32 %v3285, 0.5
        %v3294 = vmul.f32 %v3286, 0.5
        %v3295 = vmul.f32 %v3287, 0.5
        %v3296 = vmul.f32 %v3288, 0.5
        %v3297 = vmul.f32 %v3289, 0.5
        %v3298 = vmul.f32 %v3204, %v3290
        %v3299 = vmul.f32 %v3207, %v3291
        %v3300 = vmul.f32 %v3212, %v3292
        %v3301 = vmul.f32 %v3215, %v3293
        %v3302 = vmul.f32 %v3220, %v3294
        %v3303 = vmul.f32 %v3223, %v3295
        %v3304 = vmul.f32 %v3228, %v3296
        %v3305 = vmul.f32 %v3231, %v3297
        %v3306 = vpack.c.bf16 %v3299, %v3298
        %v3307 = vpack.c.bf16 %v3301, %v3300
        %v3308 = vpack.c.bf16 %v3303, %v3302
        %v3309 = vpack.c.bf16 %v3305, %v3304
        %v3311 = vlaneseq
        %v3312 = vshrl.u32 %v3311, 7
        %v3313 = vsub.s32 0, %v3312
        %v3314 = vrot.slane %v1257, %v3313
        %v3320 = vunpack.c.l.b16 %v1253
        %v3321 = vunpack.c.l.b16 %v1254
        %v3322 = vunpack.c.l.b16 %v1255
        %v3323 = vunpack.c.l.b16 %v1256
        %v3324 = vpack.c.b16 %v3321, %v3320
        %v3325 = vpack.c.b16 %v3323, %v3322
        %vm3328 = vcmask 261120
        %v3330 = vsel %vm3328, %v3306, 0
        %v3333 = vsel %vm3328, %v3307, 0
        %v3336 = vsel %vm3328, %v3308, 0
        %v3339 = vsel %vm3328, %v3309, 0
        %3341 = vmatprep.subr.bf16.mxu0 0
        %3342 = vmatpush1.bf16.msra.mxu0 %v3324
        %3343 = vmatprep.subr.bf16.mxu0 0
        %3344 = vmatpush1.bf16.msra.mxu0 %v3325
        %3345 = vmatprep.subr.bf16.mxu0 0
        %3346 = vmatpush1.bf16.msra.mxu0 0
        %3347 = vmatprep.subr.bf16.mxu0 0
        %3348 = vmatpush1.bf16.msra.mxu0 0
        %3349 = vmatprep.subr.bf16.mxu0 0
        %3350 = vmatpush1.bf16.msra.mxu0 0
        %3351 = vmatprep.subr.bf16.mxu0 0
        %3352 = vmatpush1.bf16.msra.mxu0 0
        %3353 = vmatprep.subr.bf16.mxu0 0
        %3354 = vmatpush1.bf16.msra.mxu0 0
        %3355 = vmatprep.subr.bf16.mxu0 0
        %3356 = vmatpush1.bf16.msra.mxu0 0
        %3357 = vmatprep.subr.bf16.mxu0 0
        %3358 = vmatpush1.bf16.msra.mxu0 0
        %3359 = vmatprep.subr.bf16.mxu0 0
        %3360 = vmatpush1.bf16.msra.mxu0 0
        %3361 = vmatprep.subr.bf16.mxu0 0
        %3362 = vmatpush1.bf16.msra.mxu0 0
        %3363 = vmatprep.subr.bf16.mxu0 0
        %3364 = vmatpush1.bf16.msra.mxu0 0
        %3365 = vmatprep.subr.bf16.mxu0 0
        %3366 = vmatpush1.bf16.msra.mxu0 0
        %3367 = vmatprep.subr.bf16.mxu0 0
        %3368 = vmatpush1.bf16.msra.mxu0 0
        %3369 = vmatprep.subr.bf16.mxu0 0
        %3370 = vmatpush1.bf16.msra.mxu0 0
        %3371 = vmatprep.subr.bf16.mxu0 0
        %3372 = vmatpush1.bf16.msra.mxu0 0
        %3373 = vmatprep.mubr.bf16.mxu0 0
        %3374 = vmatmul.mubr.bf16.gmra.mrb[0].mxu0 %v3330
        %v3375 = vpop.f32.mrb[0].mxu0
        %v3376 = vadd.f32 %v3314, %v3375
        %v3377 = vpop.f32.mrb[0].mxu0
        %v3378 = vpop.f32.mrb[0].mxu0
        %v3379 = vadd.f32 %v3314, %v3378
        %v3380 = vpop.f32.mrb[0].mxu0
        %3381 = vmatprep.mubr.bf16.mxu0 0
        %3382 = vmatmul.mubr.bf16.gmra.mrb[0].mxu0 %v3333
        %v3383 = vpop.f32.mrb[0].mxu0
        %v3384 = vadd.f32 %v3314, %v3383
        %v3385 = vpop.f32.mrb[0].mxu0
        %v3386 = vpop.f32.mrb[0].mxu0
        %v3387 = vadd.f32 %v3314, %v3386
        %v3388 = vpop.f32.mrb[0].mxu0
        %3389 = vmatprep.mubr.bf16.mxu0 0
        %3390 = vmatmul.mubr.bf16.gmra.mrb[0].mxu0 %v3336
        %v3391 = vpop.f32.mrb[0].mxu0
        %v3392 = vadd.f32 %v3314, %v3391
        %v3393 = vpop.f32.mrb[0].mxu0
        %v3394 = vpop.f32.mrb[0].mxu0
        %v3395 = vadd.f32 %v3314, %v3394
        %v3396 = vpop.f32.mrb[0].mxu0
        %3397 = vmatprep.mubr.bf16.mxu0 0
        %3398 = vmatmul.mubr.bf16.gmra.mrb[0].mxu0 %v3339
        %v3399 = vpop.f32.mrb[0].mxu0
        %v3400 = vadd.f32 %v3314, %v3399
        %v3401 = vpop.f32.mrb[0].mxu0
        %v3402 = vpop.f32.mrb[0].mxu0
        %v3403 = vadd.f32 %v3314, %v3402
        %v3404 = vpop.f32.mrb[0].mxu0
        %3405 = vdwg.mxu0
        %v3406 = vadd.f32 %v3001, %v3376
        %v3407 = vadd.f32 %v3002, %v3379
        %v3408 = vadd.f32 %v3003, %v3384
        %v3409 = vadd.f32 %v3004, %v3387
        %v3410 = vadd.f32 %v3005, %v3392
        %v3411 = vadd.f32 %v3006, %v3395
        %v3412 = vadd.f32 %v3007, %v3400
        %v3413 = vadd.f32 %v3008, %v3403
        %v3414 = vpack.c.bf16 %v3407, %v3406
        %v3415 = vpack.c.bf16 %v3409, %v3408
        %v3416 = vpack.c.bf16 %v3411, %v3410
        %v3417 = vpack.c.bf16 %v3413, %v3412
        %v3419 = vlaneseq
        %v3420 = vshrl.u32 %v3419, 7
        %v3421 = vsub.s32 0, %v3420
        %v3422 = vrot.slane %v1260, %v3421
        %v3426 = vunpack.c.l.b16 %v1258
        %v3427 = vunpack.c.l.b16 %v1259
        %v3428 = vpack.c.b16 %v3427, %v3426
        %v3431 = vsel %vm1434, %v3414, 0
        %v3434 = vsel %vm1434, %v3415, 0
        %v3437 = vsel %vm1434, %v3416, 0
        %v3440 = vsel %vm1434, %v3417, 0
        %3442 = vmatprep.subr.bf16.mxu0 0
        %3443 = vmatpush1.bf16.msra.mxu0 %v3428
        %3444 = vmatprep.subr.bf16.mxu0 0
        %3445 = vmatpush1.bf16.msra.mxu0 0
        %3446 = vmatprep.subr.bf16.mxu0 0
        %3447 = vmatpush1.bf16.msra.mxu0 0
        %3448 = vmatprep.subr.bf16.mxu0 0
        %3449 = vmatpush1.bf16.msra.mxu0 0
        %3450 = vmatprep.subr.bf16.mxu0 0
        %3451 = vmatpush1.bf16.msra.mxu0 0
        %3452 = vmatprep.subr.bf16.mxu0 0
        %3453 = vmatpush1.bf16.msra.mxu0 0
        %3454 = vmatprep.subr.bf16.mxu0 0
        %3455 = vmatpush1.bf16.msra.mxu0 0
        %3456 = vmatprep.subr.bf16.mxu0 0
        %3457 = vmatpush1.bf16.msra.mxu0 0
        %3458 = vmatprep.subr.bf16.mxu0 0
        %3459 = vmatpush1.bf16.msra.mxu0 0
        %3460 = vmatprep.subr.bf16.mxu0 0
        %3461 = vmatpush1.bf16.msra.mxu0 0
        %3462 = vmatprep.subr.bf16.mxu0 0
        %3463 = vmatpush1.bf16.msra.mxu0 0
        %3464 = vmatprep.subr.bf16.mxu0 0
        %3465 = vmatpush1.bf16.msra.mxu0 0
        %3466 = vmatprep.subr.bf16.mxu0 0
        %3467 = vmatpush1.bf16.msra.mxu0 0
        %3468 = vmatprep.subr.bf16.mxu0 0
        %3469 = vmatpush1.bf16.msra.mxu0 0
        %3470 = vmatprep.subr.bf16.mxu0 0
        %3471 = vmatpush1.bf16.msra.mxu0 0
        %3472 = vmatprep.subr.bf16.mxu0 0
        %3473 = vmatpush1.bf16.msra.mxu0 0
        %3474 = vmatprep.mubr.bf16.mxu0 0
        %3475 = vmatmul.mubr.bf16.gmra.mrb[0].mxu0 %v3431
        %v3476 = vpop.f32.mrb[0].mxu0
        %v3477 = vadd.f32 %v3422, %v3476
        %v3478 = vpop.f32.mrb[0].mxu0
        %v3479 = vpop.f32.mrb[0].mxu0
        %v3480 = vadd.f32 %v3422, %v3479
        %v3481 = vpop.f32.mrb[0].mxu0
        %3482 = vmatprep.mubr.bf16.mxu0 0
        %3483 = vmatmul.mubr.bf16.gmra.mrb[0].mxu0 %v3434
        %v3484 = vpop.f32.mrb[0].mxu0
        %v3485 = vadd.f32 %v3422, %v3484
        %v3486 = vpop.f32.mrb[0].mxu0
        %v3487 = vpop.f32.mrb[0].mxu0
        %v3488 = vadd.f32 %v3422, %v3487
        %v3489 = vpop.f32.mrb[0].mxu0
        %3490 = vmatprep.mubr.bf16.mxu0 0
        %3491 = vmatmul.mubr.bf16.gmra.mrb[0].mxu0 %v3437
        %v3492 = vpop.f32.mrb[0].mxu0
        %v3493 = vadd.f32 %v3422, %v3492
        %v3494 = vpop.f32.mrb[0].mxu0
        %v3495 = vpop.f32.mrb[0].mxu0
        %v3496 = vadd.f32 %v3422, %v3495
        %v3497 = vpop.f32.mrb[0].mxu0
        %3498 = vmatprep.mubr.bf16.mxu0 0
        %3499 = vmatmul.mubr.bf16.gmra.mrb[0].mxu0 %v3440
        %v3500 = vpop.f32.mrb[0].mxu0
        %v3501 = vadd.f32 %v3422, %v3500
        %v3502 = vpop.f32.mrb[0].mxu0
        %v3503 = vpop.f32.mrb[0].mxu0
        %v3504 = vadd.f32 %v3422, %v3503
        %v3505 = vpop.f32.mrb[0].mxu0
        %3506 = vdwg.mxu0
        %3507 = vst [vmem:[%s1223] sm:$0xff] %v3477
        %3508 = vst [vmem:[%s1223 + $0x8] sm:$0xff] %v3480
        %3509 = vst [vmem:[%s1223 + $0x10] sm:$0xff] %v3485
        %3510 = vst [vmem:[%s1223 + $0x18] sm:$0xff] %v3488
        %3511 = vst [vmem:[%s1223 + $0x20] sm:$0xff] %v3493
        %3512 = vst [vmem:[%s1223 + $0x28] sm:$0xff] %v3496
        %3513 = vst [vmem:[%s1223 + $0x30] sm:$0xff] %v3501
        %3514 = vst [vmem:[%s1223 + $0x38] sm:$0xff] %v3504
        %v3523 = vunpack.c.l.b16 %v1261
        %v3524 = vunpack.c.l.b16 %v1262
        %v3525 = vunpack.c.l.b16 %v1263
        %v3526 = vunpack.c.l.b16 %v1264
        %v3527 = vunpack.c.l.b16 %v1265
        %v3528 = vunpack.c.l.b16 %v1266
        %v3529 = vunpack.c.l.b16 %v1267
        %v3530 = vunpack.c.l.b16 %v1268
        %v3531 = vpack.c.b16 %v3524, %v3523
        %v3532 = vpack.c.b16 %v3526, %v3525
        %v3533 = vpack.c.b16 %v3528, %v3527
        %v3534 = vpack.c.b16 %v3530, %v3529
        %vm3535 = vcmask 523264
        %v3537 = vsel %vm3535, %v3531, 0
        %v3540 = vsel %vm3535, %v3532, 0
        %v3543 = vsel %vm3535, %v3533, 0
        %v3546 = vsel %vm3535, %v3534, 0
        %3548 = vmatprep.subr.bf16.mxu0 0
        %3549 = vmatpush1.bf16.msra.mxu0 %v3414
        %3550 = vmatprep.subr.bf16.mxu0 0
        %3551 = vmatpush1.bf16.msra.mxu0 %v3415
        %3552 = vmatprep.subr.bf16.mxu0 0
        %3553 = vmatpush1.bf16.msra.mxu0 %v3416
        %3554 = vmatprep.subr.bf16.mxu0 0
        %3555 = vmatpush1.bf16.msra.mxu0 %v3417
        %3556 = vmatprep.subr.bf16.mxu0 0
        %3557 = vmatpush1.bf16.msra.mxu0 0
        %3558 = vmatprep.subr.bf16.mxu0 0
        %3559 = vmatpush1.bf16.msra.mxu0 0
        %3560 = vmatprep.subr.bf16.mxu0 0
        %3561 = vmatpush1.bf16.msra.mxu0 0
        %3562 = vmatprep.subr.bf16.mxu0 0
        %3563 = vmatpush1.bf16.msra.mxu0 0
        %3564 = vmatprep.subr.bf16.mxu0 0
        %3565 = vmatpush1.bf16.msra.mxu0 0
        %3566 = vmatprep.subr.bf16.mxu0 0
        %3567 = vmatpush1.bf16.msra.mxu0 0
        %3568 = vmatprep.subr.bf16.mxu0 0
        %3569 = vmatpush1.bf16.msra.mxu0 0
        %3570 = vmatprep.subr.bf16.mxu0 0
        %3571 = vmatpush1.bf16.msra.mxu0 0
        %3572 = vmatprep.subr.bf16.mxu0 0
        %3573 = vmatpush1.bf16.msra.mxu0 0
        %3574 = vmatprep.subr.bf16.mxu0 0
        %3575 = vmatpush1.bf16.msra.mxu0 0
        %3576 = vmatprep.subr.bf16.mxu0 0
        %3577 = vmatpush1.bf16.msra.mxu0 0
        %3578 = vmatprep.subr.bf16.mxu0 0
        %3579 = vmatpush1.bf16.msra.mxu0 0
        %3580 = vmatprep.mubr.bf16.mxu0 0
        %3581 = vmatmul.mubr.bf16.gmra.mrb[0].mxu0 %v3537
        %v3582 = vpop.f32.mrb[0].mxu0
        %v3583 = vadd.f32 0.0, %v3582
        %v3584 = vpop.f32.mrb[0].mxu0
        %v3585 = vpop.f32.mrb[0].mxu0
        %v3586 = vadd.f32 0.0, %v3585
        %v3587 = vpop.f32.mrb[0].mxu0
        %3588 = vmatprep.mubr.bf16.mxu0 0
        %3589 = vmatmul.mubr.bf16.gmra.mrb[0].mxu0 %v3540
        %v3590 = vpop.f32.mrb[0].mxu0
        %v3591 = vadd.f32 0.0, %v3590
        %v3592 = vpop.f32.mrb[0].mxu0
        %v3593 = vpop.f32.mrb[0].mxu0
        %v3594 = vadd.f32 0.0, %v3593
        %v3595 = vpop.f32.mrb[0].mxu0
        %3596 = vmatprep.mubr.bf16.mxu0 0
        %3597 = vmatmul.mubr.bf16.gmra.mrb[0].mxu0 %v3543
        %v3598 = vpop.f32.mrb[0].mxu0
        %v3599 = vadd.f32 0.0, %v3598
        %v3600 = vpop.f32.mrb[0].mxu0
        %v3601 = vpop.f32.mrb[0].mxu0
        %v3602 = vadd.f32 0.0, %v3601
        %v3603 = vpop.f32.mrb[0].mxu0
        %3604 = vmatprep.mubr.bf16.mxu0 0
        %3605 = vmatmul.mubr.bf16.gmra.mrb[0].mxu0 %v3546
        %v3606 = vpop.f32.mrb[0].mxu0
        %v3607 = vadd.f32 0.0, %v3606
        %v3608 = vpop.f32.mrb[0].mxu0
        %v3609 = vpop.f32.mrb[0].mxu0
        %v3610 = vadd.f32 0.0, %v3609
        %v3611 = vpop.f32.mrb[0].mxu0
        %3612 = vdwg.mxu0
        %3615 = vrot.lane.b32.xlu0 %v3591, 16
        %v3616 = vpop.permute.xlu0 %3615
        %3617 = vrot.lane.b32.xlu0 %v3594, 16
        %v3618 = vpop.permute.xlu0 %3617
        %3623 = vrot.lane.b32.xlu0 %v3599, 32
        %v3624 = vpop.permute.xlu0 %3623
        %3625 = vrot.lane.b32.xlu0 %v3602, 32
        %v3626 = vpop.permute.xlu0 %3625
        %3631 = vrot.lane.b32.xlu0 %v3607, 48
        %v3632 = vpop.permute.xlu0 %3631
        %3633 = vrot.lane.b32.xlu0 %v3610, 48
        %v3634 = vpop.permute.xlu0 %3633
        %v3637 = vsel %vm1434, %v3583, %v3616
        %v3638 = vsel %vm1434, %v3586, %v3618
        %v3639 = vsel %vm3328, %v3637, %v3624
        %v3640 = vsel %vm3328, %v3638, %v3626
        %v3641 = vsel %vm1356, %v3639, %v3632
        %v3642 = vsel %vm1356, %v3640, %v3634
        %v3643 = vsel %vm3535, %v3641, 0.0
        %3644 = vadd.xlane.f32.xlu0 %v3643
        %v3645 = vpop.xlane.xlu0 %3644
        %v3646 = vsel %vm3535, %v3642, 0.0
        %3647 = vadd.xlane.f32.xlu0 %v3646
        %v3648 = vpop.xlane.xlu0 %3647
        %v3649 = vrcp.pop 64.0
        %v3650 = vmul.f32 %v3645, %v3649
        %v3651 = vmul.f32 %v3648, %v3649
        %v3652 = vsub.f32 %v3641, %v3650
        %v3653 = vsub.f32 %v3642, %v3651
        %v3654 = vmul.f32 %v3652, %v3652
        %v3655 = vmul.f32 %v3653, %v3653
        %v3656 = vsel %vm3535, %v3654, 0.0
        %3657 = vadd.xlane.f32.xlu0 %v3656
        %v3658 = vpop.xlane.xlu0 %3657
        %v3659 = vsel %vm3535, %v3655, 0.0
        %3660 = vadd.xlane.f32.xlu0 %v3659
        %v3661 = vpop.xlane.xlu0 %3660
        %v3662 = vmul.f32 %v3658, %v3649
        %v3663 = vmul.f32 %v3661, %v3649
        %v3664 = vadd.f32 %v3662, 1e-05
        %v3665 = vadd.f32 %v3663, 1e-05
        %v3666 = vrsqrt.pop %v3664
        %v3667 = vrsqrt.pop %v3665
        %v3668 = vmul.f32 %v3652, %v3666
        %v3669 = vmul.f32 %v3653, %v3667
        %v3671 = vlaneseq
        %v3672 = vshrl.u32 %v3671, 7
        %v3673 = vsub.s32 0, %v3672
        %v3674 = vrot.slane %v1269, %v3673
        %v3676 = vmul.f32 %v3668, %v3674
        %v3677 = vmul.f32 %v3669, %v3674
        %v3679 = vlaneseq
        %v3680 = vshrl.u32 %v3679, 7
        %v3681 = vsub.s32 0, %v3680
        %v3682 = vrot.slane %v1270, %v3681
        %v3684 = vadd.f32 %v3676, %v3682
        %v3685 = vadd.f32 %v3677, %v3682
        %v3686 = vpack.c.bf16 %v3685, %v3684
        %v3695 = vunpack.c.l.b16 %v1271
        %v3696 = vunpack.c.l.b16 %v1272
        %v3697 = vunpack.c.l.b16 %v1273
        %v3698 = vunpack.c.l.b16 %v1274
        %v3699 = vunpack.c.l.b16 %v1275
        %v3700 = vunpack.c.l.b16 %v1276
        %v3701 = vunpack.c.l.b16 %v1277
        %v3702 = vunpack.c.l.b16 %v1278
        %v3703 = vpack.c.b16 %v3696, %v3695
        %v3704 = vpack.c.b16 %v3698, %v3697
        %v3705 = vpack.c.b16 %v3700, %v3699
        %v3706 = vpack.c.b16 %v3702, %v3701
        %v3712 = vsel %vm3535, %v3686, 0
        %3714 = vmatprep.subr.bf16.mxu0 0
        %3715 = vmatpush1.bf16.msra.mxu0 %v3703
        %3716 = vmatprep.subr.bf16.mxu0 0
        %3717 = vmatpush1.bf16.msra.mxu0 %v3704
        %3718 = vmatprep.subr.bf16.mxu0 0
        %3719 = vmatpush1.bf16.msra.mxu0 %v3705
        %3720 = vmatprep.subr.bf16.mxu0 0
        %3721 = vmatpush1.bf16.msra.mxu0 %v3706
        %3722 = vmatprep.subr.bf16.mxu0 0
        %3723 = vmatpush1.bf16.msra.mxu0 0
        %3724 = vmatprep.subr.bf16.mxu0 0
        %3725 = vmatpush1.bf16.msra.mxu0 0
        %3726 = vmatprep.subr.bf16.mxu0 0
        %3727 = vmatpush1.bf16.msra.mxu0 0
        %3728 = vmatprep.subr.bf16.mxu0 0
        %3729 = vmatpush1.bf16.msra.mxu0 0
        %3730 = vmatprep.subr.bf16.mxu0 0
        %3731 = vmatpush1.bf16.msra.mxu0 0
        %3732 = vmatprep.subr.bf16.mxu0 0
        %3733 = vmatpush1.bf16.msra.mxu0 0
        %3734 = vmatprep.subr.bf16.mxu0 0
        %3735 = vmatpush1.bf16.msra.mxu0 0
        %3736 = vmatprep.subr.bf16.mxu0 0
        %3737 = vmatpush1.bf16.msra.mxu0 0
        %3738 = vmatprep.subr.bf16.mxu0 0
        %3739 = vmatpush1.bf16.msra.mxu0 0
        %3740 = vmatprep.subr.bf16.mxu0 0
        %3741 = vmatpush1.bf16.msra.mxu0 0
        %3742 = vmatprep.subr.bf16.mxu0 0
        %3743 = vmatpush1.bf16.msra.mxu0 0
        %3744 = vmatprep.subr.bf16.mxu0 0
        %3745 = vmatpush1.bf16.msra.mxu0 0
        %3746 = vmatprep.mubr.bf16.mxu0 0
        %3747 = vmatmul.mubr.bf16.gmra.mrb[0].mxu0 %v3712
        %v3748 = vpop.f32.mrb[0].mxu0
        %v3749 = vadd.f32 0.0, %v3748
        %v3750 = vpop.f32.mrb[0].mxu0
        %v3751 = vpop.f32.mrb[0].mxu0
        %v3752 = vadd.f32 0.0, %v3751
        %v3753 = vpop.f32.mrb[0].mxu0
        %3754 = vdwg.mxu0
        %v3755 = vsel %vm3328, %v3749, 0.0
        %3756 = vadd.xlane.f32.xlu0 %v3755
        %v3757 = vpop.xlane.xlu0 %3756
        %v3758 = vsel %vm3328, %v3752, 0.0
        %3759 = vadd.xlane.f32.xlu0 %v3758
        %v3760 = vpop.xlane.xlu0 %3759
        %v3761 = vrcp.pop 32.0
        %v3762 = vmul.f32 %v3757, %v3761
        %v3763 = vmul.f32 %v3760, %v3761
        %v3764 = vsub.f32 %v3749, %v3762
        %v3765 = vsub.f32 %v3752, %v3763
        %v3766 = vmul.f32 %v3764, %v3764
        %v3767 = vmul.f32 %v3765, %v3765
        %v3768 = vsel %vm3328, %v3766, 0.0
        %3769 = vadd.xlane.f32.xlu0 %v3768
        %v3770 = vpop.xlane.xlu0 %3769
        %v3771 = vsel %vm3328, %v3767, 0.0
        %3772 = vadd.xlane.f32.xlu0 %v3771
        %v3773 = vpop.xlane.xlu0 %3772
        %v3774 = vmul.f32 %v3770, %v3761
        %v3775 = vmul.f32 %v3773, %v3761
        %v3776 = vadd.f32 %v3774, 1e-05
        %v3777 = vadd.f32 %v3775, 1e-05
        %v3778 = vrsqrt.pop %v3776
        %v3779 = vrsqrt.pop %v3777
        %v3780 = vmul.f32 %v3764, %v3778
        %v3781 = vmul.f32 %v3765, %v3779
        %v3783 = vlaneseq
        %v3784 = vshrl.u32 %v3783, 7
        %v3785 = vsub.s32 0, %v3784
        %v3786 = vrot.slane %v1279, %v3785
        %v3788 = vmul.f32 %v3780, %v3786
        %v3789 = vmul.f32 %v3781, %v3786
        %v3791 = vlaneseq
        %v3792 = vshrl.u32 %v3791, 7
        %v3793 = vsub.s32 0, %v3792
        %v3794 = vrot.slane %v1280, %v3793
        %v3796 = vadd.f32 %v3788, %v3794
        %v3797 = vadd.f32 %v3789, %v3794
        %v3798 = vpack.c.bf16 %v3797, %v3796
        %v3800 = vlaneseq
        %v3801 = vshrl.u32 %v3800, 7
        %v3802 = vsub.s32 0, %v3801
        %v3803 = vrot.slane %v1285, %v3802
        %v3809 = vunpack.c.l.b16 %v1281
        %v3810 = vunpack.c.l.b16 %v1282
        %v3811 = vunpack.c.l.b16 %v1283
        %v3812 = vunpack.c.l.b16 %v1284
        %v3813 = vpack.c.b16 %v3810, %v3809
        %v3814 = vpack.c.b16 %v3812, %v3811
        %v3818 = vsel %vm3328, %v3798, 0
        %3820 = vmatprep.subr.bf16.mxu0 0
        %3821 = vmatpush1.bf16.msra.mxu0 %v3813
        %3822 = vmatprep.subr.bf16.mxu0 0
        %3823 = vmatpush1.bf16.msra.mxu0 %v3814
        %3824 = vmatprep.subr.bf16.mxu0 0
        %3825 = vmatpush1.bf16.msra.mxu0 0
        %3826 = vmatprep.subr.bf16.mxu0 0
        %3827 = vmatpush1.bf16.msra.mxu0 0
        %3828 = vmatprep.subr.bf16.mxu0 0
        %3829 = vmatpush1.bf16.msra.mxu0 0
        %3830 = vmatprep.subr.bf16.mxu0 0
        %3831 = vmatpush1.bf16.msra.mxu0 0
        %3832 = vmatprep.subr.bf16.mxu0 0
        %3833 = vmatpush1.bf16.msra.mxu0 0
        %3834 = vmatprep.subr.bf16.mxu0 0
        %3835 = vmatpush1.bf16.msra.mxu0 0
        %3836 = vmatprep.subr.bf16.mxu0 0
        %3837 = vmatpush1.bf16.msra.mxu0 0
        %3838 = vmatprep.subr.bf16.mxu0 0
        %3839 = vmatpush1.bf16.msra.mxu0 0
        %3840 = vmatprep.subr.bf16.mxu0 0
        %3841 = vmatpush1.bf16.msra.mxu0 0
        %3842 = vmatprep.subr.bf16.mxu0 0
        %3843 = vmatpush1.bf16.msra.mxu0 0
        %3844 = vmatprep.subr.bf16.mxu0 0
        %3845 = vmatpush1.bf16.msra.mxu0 0
        %3846 = vmatprep.subr.bf16.mxu0 0
        %3847 = vmatpush1.bf16.msra.mxu0 0
        %3848 = vmatprep.subr.bf16.mxu0 0
        %3849 = vmatpush1.bf16.msra.mxu0 0
        %3850 = vmatprep.subr.bf16.mxu0 0
        %3851 = vmatpush1.bf16.msra.mxu0 0
        %3852 = vmatprep.mubr.bf16.mxu0 0
        %3853 = vmatmul.mubr.bf16.gmra.mrb[0].mxu0 %v3818
        %v3854 = vpop.f32.mrb[0].mxu0
        %v3855 = vadd.f32 %v3803, %v3854
        %v3856 = vpop.f32.mrb[0].mxu0
        %v3857 = vpop.f32.mrb[0].mxu0
        %v3858 = vadd.f32 %v3803, %v3857
        %v3859 = vpop.f32.mrb[0].mxu0
        %3860 = vdwg.mxu0
        %3863 = vrot.lane.b32.xlu0 %v3855, 120
        %v3864 = vpop.permute.xlu0 %3863
        %3865 = vrot.lane.b32.xlu0 %v3858, 120
        %v3866 = vpop.permute.xlu0 %3865
        %3869 = vrot.lane.b32.xlu0 %v3855, 112
        %v3870 = vpop.permute.xlu0 %3869
        %3871 = vrot.lane.b32.xlu0 %v3858, 112
        %v3872 = vpop.permute.xlu0 %3871
        %3875 = vrot.lane.b32.xlu0 %v3855, 104
        %v3876 = vpop.permute.xlu0 %3875
        %3877 = vrot.lane.b32.xlu0 %v3858, 104
        %v3878 = vpop.permute.xlu0 %3877
        %v3881 = vpack.c.bf16 %v3858, %v3855
        %v3882 = vpack.c.bf16 %v3866, %v3864
        %v3883 = vpack.c.bf16 %v3872, %v3870
        %v3884 = vpack.c.bf16 %v3878, %v3876
        %3886 = vrot.lane.b32.xlu0 %v3881, 96
        %v3887 = vpop.permute.xlu0 %3886
        %v3889 = vsel %vm1836, %v3881, 0
        %v3892 = vsel %vm1836, %v3887, 0
        %3894 = vmatprep.subr.bf16.mxu0 0
        %3895 = vmatpush1.bf16.xpose.msra.mxu0 %v3892
        %3896 = vmatprep.subr.bf16.mxu0 0
        %3897 = vmatpush1.bf16.xpose.msra.mxu0 0
        %3898 = vmatprep.subr.bf16.mxu0 0
        %3899 = vmatpush1.bf16.xpose.msra.mxu0 0
        %3900 = vmatprep.subr.bf16.mxu0 0
        %3901 = vmatpush1.bf16.xpose.msra.mxu0 0
        %3902 = vmatprep.subr.bf16.mxu0 0
        %3903 = vmatpush1.bf16.xpose.msra.mxu0 0
        %3904 = vmatprep.subr.bf16.mxu0 0
        %3905 = vmatpush1.bf16.xpose.msra.mxu0 0
        %3906 = vmatprep.subr.bf16.mxu0 0
        %3907 = vmatpush1.bf16.xpose.msra.mxu0 0
        %3908 = vmatprep.subr.bf16.mxu0 0
        %3909 = vmatpush1.bf16.xpose.msra.mxu0 0
        %3910 = vmatprep.subr.bf16.mxu0 0
        %3911 = vmatpush1.bf16.xpose.msra.mxu0 0
        %3912 = vmatprep.subr.bf16.mxu0 0
        %3913 = vmatpush1.bf16.xpose.msra.mxu0 0
        %3914 = vmatprep.subr.bf16.mxu0 0
        %3915 = vmatpush1.bf16.xpose.msra.mxu0 0
        %3916 = vmatprep.subr.bf16.mxu0 0
        %3917 = vmatpush1.bf16.xpose.msra.mxu0 0
        %3918 = vmatprep.subr.bf16.mxu0 0
        %3919 = vmatpush1.bf16.xpose.msra.mxu0 0
        %3920 = vmatprep.subr.bf16.mxu0 0
        %3921 = vmatpush1.bf16.xpose.msra.mxu0 0
        %3922 = vmatprep.subr.bf16.mxu0 0
        %3923 = vmatpush1.bf16.xpose.msra.mxu0 0
        %3924 = vmatprep.subr.bf16.mxu0 0
        %3925 = vmatpush1.bf16.xpose.msra.mxu0 0
        %3926 = vmatprep.mubr.bf16.mxu0 0
        %3927 = vmatmul.mubr.bf16.gmra.mrb[0].mxu0 %v3889
        %v3928 = vpop.f32.mrb[0].mxu0
        %v3929 = vadd.f32 %v1286, %v3928
        %v3930 = vpop.f32.mrb[0].mxu0
        %v3931 = vpop.f32.mrb[0].mxu0
        %v3932 = vadd.f32 %v1287, %v3931
        %v3933 = vpop.f32.mrb[0].mxu0
        %3934 = vdwg.mxu0
        %3936 = vrot.lane.b32.xlu0 %v3882, 96
        %v3937 = vpop.permute.xlu0 %3936
        %v3939 = vsel %vm1836, %v3882, 0
        %v3942 = vsel %vm1836, %v3937, 0
        %3944 = vmatprep.subr.bf16.mxu0 0
        %3945 = vmatpush1.bf16.xpose.msra.mxu0 %v3942
        %3946 = vmatprep.subr.bf16.mxu0 0
        %3947 = vmatpush1.bf16.xpose.msra.mxu0 0
        %3948 = vmatprep.subr.bf16.mxu0 0
        %3949 = vmatpush1.bf16.xpose.msra.mxu0 0
        %3950 = vmatprep.subr.bf16.mxu0 0
        %3951 = vmatpush1.bf16.xpose.msra.mxu0 0
        %3952 = vmatprep.subr.bf16.mxu0 0
        %3953 = vmatpush1.bf16.xpose.msra.mxu0 0
        %3954 = vmatprep.subr.bf16.mxu0 0
        %3955 = vmatpush1.bf16.xpose.msra.mxu0 0
        %3956 = vmatprep.subr.bf16.mxu0 0
        %3957 = vmatpush1.bf16.xpose.msra.mxu0 0
        %3958 = vmatprep.subr.bf16.mxu0 0
        %3959 = vmatpush1.bf16.xpose.msra.mxu0 0
        %3960 = vmatprep.subr.bf16.mxu0 0
        %3961 = vmatpush1.bf16.xpose.msra.mxu0 0
        %3962 = vmatprep.subr.bf16.mxu0 0
        %3963 = vmatpush1.bf16.xpose.msra.mxu0 0
        %3964 = vmatprep.subr.bf16.mxu0 0
        %3965 = vmatpush1.bf16.xpose.msra.mxu0 0
        %3966 = vmatprep.subr.bf16.mxu0 0
        %3967 = vmatpush1.bf16.xpose.msra.mxu0 0
        %3968 = vmatprep.subr.bf16.mxu0 0
        %3969 = vmatpush1.bf16.xpose.msra.mxu0 0
        %3970 = vmatprep.subr.bf16.mxu0 0
        %3971 = vmatpush1.bf16.xpose.msra.mxu0 0
        %3972 = vmatprep.subr.bf16.mxu0 0
        %3973 = vmatpush1.bf16.xpose.msra.mxu0 0
        %3974 = vmatprep.subr.bf16.mxu0 0
        %3975 = vmatpush1.bf16.xpose.msra.mxu0 0
        %3976 = vmatprep.mubr.bf16.mxu0 0
        %3977 = vmatmul.mubr.bf16.gmra.mrb[0].mxu0 %v3939
        %v3978 = vpop.f32.mrb[0].mxu0
        %v3979 = vadd.f32 %v1288, %v3978
        %v3980 = vpop.f32.mrb[0].mxu0
        %v3981 = vpop.f32.mrb[0].mxu0
        %v3982 = vadd.f32 %v1289, %v3981
        %v3983 = vpop.f32.mrb[0].mxu0
        %3984 = vdwg.mxu0
        %3986 = vrot.lane.b32.xlu0 %v3883, 96
        %v3987 = vpop.permute.xlu0 %3986
        %v3989 = vsel %vm1836, %v3883, 0
        %v3992 = vsel %vm1836, %v3987, 0
        %3994 = vmatprep.subr.bf16.mxu0 0
        %3995 = vmatpush1.bf16.xpose.msra.mxu0 %v3992
        %3996 = vmatprep.subr.bf16.mxu0 0
        %3997 = vmatpush1.bf16.xpose.msra.mxu0 0
        %3998 = vmatprep.subr.bf16.mxu0 0
        %3999 = vmatpush1.bf16.xpose.msra.mxu0 0
        %4000 = vmatprep.subr.bf16.mxu0 0
        %4001 = vmatpush1.bf16.xpose.msra.mxu0 0
        %4002 = vmatprep.subr.bf16.mxu0 0
        %4003 = vmatpush1.bf16.xpose.msra.mxu0 0
        %4004 = vmatprep.subr.bf16.mxu0 0
        %4005 = vmatpush1.bf16.xpose.msra.mxu0 0
        %4006 = vmatprep.subr.bf16.mxu0 0
        %4007 = vmatpush1.bf16.xpose.msra.mxu0 0
        %4008 = vmatprep.subr.bf16.mxu0 0
        %4009 = vmatpush1.bf16.xpose.msra.mxu0 0
        %4010 = vmatprep.subr.bf16.mxu0 0
        %4011 = vmatpush1.bf16.xpose.msra.mxu0 0
        %4012 = vmatprep.subr.bf16.mxu0 0
        %4013 = vmatpush1.bf16.xpose.msra.mxu0 0
        %4014 = vmatprep.subr.bf16.mxu0 0
        %4015 = vmatpush1.bf16.xpose.msra.mxu0 0
        %4016 = vmatprep.subr.bf16.mxu0 0
        %4017 = vmatpush1.bf16.xpose.msra.mxu0 0
        %4018 = vmatprep.subr.bf16.mxu0 0
        %4019 = vmatpush1.bf16.xpose.msra.mxu0 0
        %4020 = vmatprep.subr.bf16.mxu0 0
        %4021 = vmatpush1.bf16.xpose.msra.mxu0 0
        %4022 = vmatprep.subr.bf16.mxu0 0
        %4023 = vmatpush1.bf16.xpose.msra.mxu0 0
        %4024 = vmatprep.subr.bf16.mxu0 0
        %4025 = vmatpush1.bf16.xpose.msra.mxu0 0
        %4026 = vmatprep.mubr.bf16.mxu0 0
        %4027 = vmatmul.mubr.bf16.gmra.mrb[0].mxu0 %v3989
        %v4028 = vpop.f32.mrb[0].mxu0
        %v4029 = vadd.f32 %v1290, %v4028
        %v4030 = vpop.f32.mrb[0].mxu0
        %v4031 = vpop.f32.mrb[0].mxu0
        %v4032 = vadd.f32 %v1291, %v4031
        %v4033 = vpop.f32.mrb[0].mxu0
        %4034 = vdwg.mxu0
        %4036 = vrot.lane.b32.xlu0 %v3884, 96
        %v4037 = vpop.permute.xlu0 %4036
        %v4039 = vsel %vm1836, %v3884, 0
        %v4042 = vsel %vm1836, %v4037, 0
        %4044 = vmatprep.subr.bf16.mxu0 0
        %4045 = vmatpush1.bf16.xpose.msra.mxu0 %v4042
        %4046 = vmatprep.subr.bf16.mxu0 0
        %4047 = vmatpush1.bf16.xpose.msra.mxu0 0
        %4048 = vmatprep.subr.bf16.mxu0 0
        %4049 = vmatpush1.bf16.xpose.msra.mxu0 0
        %4050 = vmatprep.subr.bf16.mxu0 0
        %4051 = vmatpush1.bf16.xpose.msra.mxu0 0
        %4052 = vmatprep.subr.bf16.mxu0 0
        %4053 = vmatpush1.bf16.xpose.msra.mxu0 0
        %4054 = vmatprep.subr.bf16.mxu0 0
        %4055 = vmatpush1.bf16.xpose.msra.mxu0 0
        %4056 = vmatprep.subr.bf16.mxu0 0
        %4057 = vmatpush1.bf16.xpose.msra.mxu0 0
        %4058 = vmatprep.subr.bf16.mxu0 0
        %4059 = vmatpush1.bf16.xpose.msra.mxu0 0
        %4060 = vmatprep.subr.bf16.mxu0 0
        %4061 = vmatpush1.bf16.xpose.msra.mxu0 0
        %4062 = vmatprep.subr.bf16.mxu0 0
        %4063 = vmatpush1.bf16.xpose.msra.mxu0 0
        %4064 = vmatprep.subr.bf16.mxu0 0
        %4065 = vmatpush1.bf16.xpose.msra.mxu0 0
        %4066 = vmatprep.subr.bf16.mxu0 0
        %4067 = vmatpush1.bf16.xpose.msra.mxu0 0
        %4068 = vmatprep.subr.bf16.mxu0 0
        %4069 = vmatpush1.bf16.xpose.msra.mxu0 0
        %4070 = vmatprep.subr.bf16.mxu0 0
        %4071 = vmatpush1.bf16.xpose.msra.mxu0 0
        %4072 = vmatprep.subr.bf16.mxu0 0
        %4073 = vmatpush1.bf16.xpose.msra.mxu0 0
        %4074 = vmatprep.subr.bf16.mxu0 0
        %4075 = vmatpush1.bf16.xpose.msra.mxu0 0
        %4076 = vmatprep.mubr.bf16.mxu0 0
        %4077 = vmatmul.mubr.bf16.gmra.mrb[0].mxu0 %v4039
        %v4078 = vpop.f32.mrb[0].mxu0
        %v4079 = vadd.f32 %v1292, %v4078
        %v4080 = vpop.f32.mrb[0].mxu0
        %v4081 = vpop.f32.mrb[0].mxu0
        %v4082 = vadd.f32 %v1293, %v4081
        %v4083 = vpop.f32.mrb[0].mxu0
        %4084 = vdwg.mxu0
        %v4085 = vsel %vm1434, %v3929, -inf
        %4086 = vmax.xlane.f32.xlu0 %v4085
        %v4087 = vpop.xlane.xlu0 %4086
        %v4088 = vsel %vm1434, %v3932, -inf
        %4089 = vmax.xlane.f32.xlu0 %v4088
        %v4090 = vpop.xlane.xlu0 %4089
        %v4091 = vsel %vm1434, %v3979, -inf
        %4092 = vmax.xlane.f32.xlu0 %v4091
        %v4093 = vpop.xlane.xlu0 %4092
        %v4094 = vsel %vm1434, %v3982, -inf
        %4095 = vmax.xlane.f32.xlu0 %v4094
        %v4096 = vpop.xlane.xlu0 %4095
        %v4097 = vsel %vm1434, %v4029, -inf
        %4098 = vmax.xlane.f32.xlu0 %v4097
        %v4099 = vpop.xlane.xlu0 %4098
        %v4100 = vsel %vm1434, %v4032, -inf
        %4101 = vmax.xlane.f32.xlu0 %v4100
        %v4102 = vpop.xlane.xlu0 %4101
        %v4103 = vsel %vm1434, %v4079, -inf
        %4104 = vmax.xlane.f32.xlu0 %v4103
        %v4105 = vpop.xlane.xlu0 %4104
        %v4106 = vsel %vm1434, %v4082, -inf
        %4107 = vmax.xlane.f32.xlu0 %v4106
        %v4108 = vpop.xlane.xlu0 %4107
        %v4109 = vsub.f32 %v3929, %v4087
        %v4110 = vsub.f32 %v3932, %v4090
        %v4111 = vsub.f32 %v3979, %v4093
        %v4112 = vsub.f32 %v3982, %v4096
        %v4113 = vsub.f32 %v4029, %v4099
        %v4114 = vsub.f32 %v4032, %v4102
        %v4115 = vsub.f32 %v4079, %v4105
        %v4116 = vsub.f32 %v4082, %v4108
        %v4117 = vmul.f32 %v4109, 1.442695
        %v4118 = vpow.pop %v4117
        %v4119 = vmul.f32 %v4110, 1.442695
        %v4120 = vpow.pop %v4119
        %v4121 = vmul.f32 %v4111, 1.442695
        %v4122 = vpow.pop %v4121
        %v4123 = vmul.f32 %v4112, 1.442695
        %v4124 = vpow.pop %v4123
        %v4125 = vmul.f32 %v4113, 1.442695
        %v4126 = vpow.pop %v4125
        %v4127 = vmul.f32 %v4114, 1.442695
        %v4128 = vpow.pop %v4127
        %v4129 = vmul.f32 %v4115, 1.442695
        %v4130 = vpow.pop %v4129
        %v4131 = vmul.f32 %v4116, 1.442695
        %v4132 = vpow.pop %v4131
        %v4133 = vsel %vm1434, %v4118, 0.0
        %4134 = vadd.xlane.f32.xlu0 %v4133
        %v4135 = vpop.xlane.xlu0 %4134
        %v4136 = vsel %vm1434, %v4120, 0.0
        %4137 = vadd.xlane.f32.xlu0 %v4136
        %v4138 = vpop.xlane.xlu0 %4137
        %v4139 = vsel %vm1434, %v4122, 0.0
        %4140 = vadd.xlane.f32.xlu0 %v4139
        %v4141 = vpop.xlane.xlu0 %4140
        %v4142 = vsel %vm1434, %v4124, 0.0
        %4143 = vadd.xlane.f32.xlu0 %v4142
        %v4144 = vpop.xlane.xlu0 %4143
        %v4145 = vsel %vm1434, %v4126, 0.0
        %4146 = vadd.xlane.f32.xlu0 %v4145
        %v4147 = vpop.xlane.xlu0 %4146
        %v4148 = vsel %vm1434, %v4128, 0.0
        %4149 = vadd.xlane.f32.xlu0 %v4148
        %v4150 = vpop.xlane.xlu0 %4149
        %v4151 = vsel %vm1434, %v4130, 0.0
        %4152 = vadd.xlane.f32.xlu0 %v4151
        %v4153 = vpop.xlane.xlu0 %4152
        %v4154 = vsel %vm1434, %v4132, 0.0
        %4155 = vadd.xlane.f32.xlu0 %v4154
        %v4156 = vpop.xlane.xlu0 %4155
        %v4157 = vrcp.pop %v4135
        %v4158 = vrcp.pop %v4138
        %v4159 = vrcp.pop %v4141
        %v4160 = vrcp.pop %v4144
        %v4161 = vrcp.pop %v4147
        %v4162 = vrcp.pop %v4150
        %v4163 = vrcp.pop %v4153
        %v4164 = vrcp.pop %v4156
        %v4165 = vmul.f32 %v4118, %v4157
        %v4166 = vmul.f32 %v4120, %v4158
        %v4167 = vmul.f32 %v4122, %v4159
        %v4168 = vmul.f32 %v4124, %v4160
        %v4169 = vmul.f32 %v4126, %v4161
        %v4170 = vmul.f32 %v4128, %v4162
        %v4171 = vmul.f32 %v4130, %v4163
        %v4172 = vmul.f32 %v4132, %v4164
        %v4173 = vpack.c.bf16 %v4166, %v4165
        %v4174 = vpack.c.bf16 %v4168, %v4167
        %v4175 = vpack.c.bf16 %v4170, %v4169
        %v4176 = vpack.c.bf16 %v4172, %v4171
        %4177 = vrot.lane.b32.xlu0 %v3881, 64
        %v4178 = vpop.permute.xlu0 %4177
        %v4181 = vsel %vm1434, %v4173, 0
        %4183 = vmatprep.subr.bf16.mxu0 0
        %4184 = vmatpush1.bf16.msra.mxu0 %v4178
        %4185 = vmatprep.subr.bf16.mxu0 0
        %4186 = vmatpush1.bf16.msra.mxu0 0
        %4187 = vmatprep.subr.bf16.mxu0 0
        %4188 = vmatpush1.bf16.msra.mxu0 0
        %4189 = vmatprep.subr.bf16.mxu0 0
        %4190 = vmatpush1.bf16.msra.mxu0 0
        %4191 = vmatprep.subr.bf16.mxu0 0
        %4192 = vmatpush1.bf16.msra.mxu0 0
        %4193 = vmatprep.subr.bf16.mxu0 0
        %4194 = vmatpush1.bf16.msra.mxu0 0
        %4195 = vmatprep.subr.bf16.mxu0 0
        %4196 = vmatpush1.bf16.msra.mxu0 0
        %4197 = vmatprep.subr.bf16.mxu0 0
        %4198 = vmatpush1.bf16.msra.mxu0 0
        %4199 = vmatprep.subr.bf16.mxu0 0
        %4200 = vmatpush1.bf16.msra.mxu0 0
        %4201 = vmatprep.subr.bf16.mxu0 0
        %4202 = vmatpush1.bf16.msra.mxu0 0
        %4203 = vmatprep.subr.bf16.mxu0 0
        %4204 = vmatpush1.bf16.msra.mxu0 0
        %4205 = vmatprep.subr.bf16.mxu0 0
        %4206 = vmatpush1.bf16.msra.mxu0 0
        %4207 = vmatprep.subr.bf16.mxu0 0
        %4208 = vmatpush1.bf16.msra.mxu0 0
        %4209 = vmatprep.subr.bf16.mxu0 0
        %4210 = vmatpush1.bf16.msra.mxu0 0
        %4211 = vmatprep.subr.bf16.mxu0 0
        %4212 = vmatpush1.bf16.msra.mxu0 0
        %4213 = vmatprep.subr.bf16.mxu0 0
        %4214 = vmatpush1.bf16.msra.mxu0 0
        %4215 = vmatprep.mubr.bf16.mxu0 0
        %4216 = vmatmul.mubr.bf16.gmra.mrb[0].mxu0 %v4181
        %v4217 = vpop.f32.mrb[0].mxu0
        %v4218 = vadd.f32 0.0, %v4217
        %v4219 = vpop.f32.mrb[0].mxu0
        %v4220 = vpop.f32.mrb[0].mxu0
        %v4221 = vadd.f32 0.0, %v4220
        %v4222 = vpop.f32.mrb[0].mxu0
        %4223 = vdwg.mxu0
        %4224 = vrot.lane.b32.xlu0 %v3882, 64
        %v4225 = vpop.permute.xlu0 %4224
        %v4228 = vsel %vm1434, %v4174, 0
        %4230 = vmatprep.subr.bf16.mxu0 0
        %4231 = vmatpush1.bf16.msra.mxu0 %v4225
        %4232 = vmatprep.subr.bf16.mxu0 0
        %4233 = vmatpush1.bf16.msra.mxu0 0
        %4234 = vmatprep.subr.bf16.mxu0 0
        %4235 = vmatpush1.bf16.msra.mxu0 0
        %4236 = vmatprep.subr.bf16.mxu0 0
        %4237 = vmatpush1.bf16.msra.mxu0 0
        %4238 = vmatprep.subr.bf16.mxu0 0
        %4239 = vmatpush1.bf16.msra.mxu0 0
        %4240 = vmatprep.subr.bf16.mxu0 0
        %4241 = vmatpush1.bf16.msra.mxu0 0
        %4242 = vmatprep.subr.bf16.mxu0 0
        %4243 = vmatpush1.bf16.msra.mxu0 0
        %4244 = vmatprep.subr.bf16.mxu0 0
        %4245 = vmatpush1.bf16.msra.mxu0 0
        %4246 = vmatprep.subr.bf16.mxu0 0
        %4247 = vmatpush1.bf16.msra.mxu0 0
        %4248 = vmatprep.subr.bf16.mxu0 0
        %4249 = vmatpush1.bf16.msra.mxu0 0
        %4250 = vmatprep.subr.bf16.mxu0 0
        %4251 = vmatpush1.bf16.msra.mxu0 0
        %4252 = vmatprep.subr.bf16.mxu0 0
        %4253 = vmatpush1.bf16.msra.mxu0 0
        %4254 = vmatprep.subr.bf16.mxu0 0
        %4255 = vmatpush1.bf16.msra.mxu0 0
        %4256 = vmatprep.subr.bf16.mxu0 0
        %4257 = vmatpush1.bf16.msra.mxu0 0
        %4258 = vmatprep.subr.bf16.mxu0 0
        %4259 = vmatpush1.bf16.msra.mxu0 0
        %4260 = vmatprep.subr.bf16.mxu0 0
        %4261 = vmatpush1.bf16.msra.mxu0 0
        %4262 = vmatprep.mubr.bf16.mxu0 0
        %4263 = vmatmul.mubr.bf16.gmra.mrb[0].mxu0 %v4228
        %v4264 = vpop.f32.mrb[0].mxu0
        %v4265 = vadd.f32 0.0, %v4264
        %v4266 = vpop.f32.mrb[0].mxu0
        %v4267 = vpop.f32.mrb[0].mxu0
        %v4268 = vadd.f32 0.0, %v4267
        %v4269 = vpop.f32.mrb[0].mxu0
        %4270 = vdwg.mxu0
        %4271 = vrot.lane.b32.xlu0 %v3883, 64
        %v4272 = vpop.permute.xlu0 %4271
        %v4275 = vsel %vm1434, %v4175, 0
        %4277 = vmatprep.subr.bf16.mxu0 0
        %4278 = vmatpush1.bf16.msra.mxu0 %v4272
        %4279 = vmatprep.subr.bf16.mxu0 0
        %4280 = vmatpush1.bf16.msra.mxu0 0
        %4281 = vmatprep.subr.bf16.mxu0 0
        %4282 = vmatpush1.bf16.msra.mxu0 0
        %4283 = vmatprep.subr.bf16.mxu0 0
        %4284 = vmatpush1.bf16.msra.mxu0 0
        %4285 = vmatprep.subr.bf16.mxu0 0
        %4286 = vmatpush1.bf16.msra.mxu0 0
        %4287 = vmatprep.subr.bf16.mxu0 0
        %4288 = vmatpush1.bf16.msra.mxu0 0
        %4289 = vmatprep.subr.bf16.mxu0 0
        %4290 = vmatpush1.bf16.msra.mxu0 0
        %4291 = vmatprep.subr.bf16.mxu0 0
        %4292 = vmatpush1.bf16.msra.mxu0 0
        %4293 = vmatprep.subr.bf16.mxu0 0
        %4294 = vmatpush1.bf16.msra.mxu0 0
        %4295 = vmatprep.subr.bf16.mxu0 0
        %4296 = vmatpush1.bf16.msra.mxu0 0
        %4297 = vmatprep.subr.bf16.mxu0 0
        %4298 = vmatpush1.bf16.msra.mxu0 0
        %4299 = vmatprep.subr.bf16.mxu0 0
        %4300 = vmatpush1.bf16.msra.mxu0 0
        %4301 = vmatprep.subr.bf16.mxu0 0
        %4302 = vmatpush1.bf16.msra.mxu0 0
        %4303 = vmatprep.subr.bf16.mxu0 0
        %4304 = vmatpush1.bf16.msra.mxu0 0
        %4305 = vmatprep.subr.bf16.mxu0 0
        %4306 = vmatpush1.bf16.msra.mxu0 0
        %4307 = vmatprep.subr.bf16.mxu0 0
        %4308 = vmatpush1.bf16.msra.mxu0 0
        %4309 = vmatprep.mubr.bf16.mxu0 0
        %4310 = vmatmul.mubr.bf16.gmra.mrb[0].mxu0 %v4275
        %v4311 = vpop.f32.mrb[0].mxu0
        %v4312 = vadd.f32 0.0, %v4311
        %v4313 = vpop.f32.mrb[0].mxu0
        %v4314 = vpop.f32.mrb[0].mxu0
        %v4315 = vadd.f32 0.0, %v4314
        %v4316 = vpop.f32.mrb[0].mxu0
        %4317 = vdwg.mxu0
        %4318 = vrot.lane.b32.xlu0 %v3884, 64
        %v4319 = vpop.permute.xlu0 %4318
        %v4322 = vsel %vm1434, %v4176, 0
        %4324 = vmatprep.subr.bf16.mxu0 0
        %4325 = vmatpush1.bf16.msra.mxu0 %v4319
        %4326 = vmatprep.subr.bf16.mxu0 0
        %4327 = vmatpush1.bf16.msra.mxu0 0
        %4328 = vmatprep.subr.bf16.mxu0 0
        %4329 = vmatpush1.bf16.msra.mxu0 0
        %4330 = vmatprep.subr.bf16.mxu0 0
        %4331 = vmatpush1.bf16.msra.mxu0 0
        %4332 = vmatprep.subr.bf16.mxu0 0
        %4333 = vmatpush1.bf16.msra.mxu0 0
        %4334 = vmatprep.subr.bf16.mxu0 0
        %4335 = vmatpush1.bf16.msra.mxu0 0
        %4336 = vmatprep.subr.bf16.mxu0 0
        %4337 = vmatpush1.bf16.msra.mxu0 0
        %4338 = vmatprep.subr.bf16.mxu0 0
        %4339 = vmatpush1.bf16.msra.mxu0 0
        %4340 = vmatprep.subr.bf16.mxu0 0
        %4341 = vmatpush1.bf16.msra.mxu0 0
        %4342 = vmatprep.subr.bf16.mxu0 0
        %4343 = vmatpush1.bf16.msra.mxu0 0
        %4344 = vmatprep.subr.bf16.mxu0 0
        %4345 = vmatpush1.bf16.msra.mxu0 0
        %4346 = vmatprep.subr.bf16.mxu0 0
        %4347 = vmatpush1.bf16.msra.mxu0 0
        %4348 = vmatprep.subr.bf16.mxu0 0
        %4349 = vmatpush1.bf16.msra.mxu0 0
        %4350 = vmatprep.subr.bf16.mxu0 0
        %4351 = vmatpush1.bf16.msra.mxu0 0
        %4352 = vmatprep.subr.bf16.mxu0 0
        %4353 = vmatpush1.bf16.msra.mxu0 0
        %4354 = vmatprep.subr.bf16.mxu0 0
        %4355 = vmatpush1.bf16.msra.mxu0 0
        %4356 = vmatprep.mubr.bf16.mxu0 0
        %4357 = vmatmul.mubr.bf16.gmra.mrb[0].mxu0 %v4322
        %v4358 = vpop.f32.mrb[0].mxu0
        %v4359 = vadd.f32 0.0, %v4358
        %v4360 = vpop.f32.mrb[0].mxu0
        %v4361 = vpop.f32.mrb[0].mxu0
        %v4362 = vadd.f32 0.0, %v4361
        %v4363 = vpop.f32.mrb[0].mxu0
        %4364 = vdwg.mxu0
        %v4365 = vpack.c.bf16 %v4221, %v4218
        %v4366 = vpack.c.bf16 %v4268, %v4265
        %v4367 = vpack.c.bf16 %v4315, %v4312
        %v4368 = vpack.c.bf16 %v4362, %v4359
        %v4370 = vsel %vm1836, %v4365, 0
        %v4373 = vsel %vm2814, %v1294, 0
        %4375 = vmatprep.subr.bf16.mxu0 0
        %4376 = vmatpush1.bf16.msra.mxu0 %v4373
        %4377 = vmatprep.subr.bf16.mxu0 0
        %4378 = vmatpush1.bf16.msra.mxu0 0
        %4379 = vmatprep.subr.bf16.mxu0 0
        %4380 = vmatpush1.bf16.msra.mxu0 0
        %4381 = vmatprep.subr.bf16.mxu0 0
        %4382 = vmatpush1.bf16.msra.mxu0 0
        %4383 = vmatprep.subr.bf16.mxu0 0
        %4384 = vmatpush1.bf16.msra.mxu0 0
        %4385 = vmatprep.subr.bf16.mxu0 0
        %4386 = vmatpush1.bf16.msra.mxu0 0
        %4387 = vmatprep.subr.bf16.mxu0 0
        %4388 = vmatpush1.bf16.msra.mxu0 0
        %4389 = vmatprep.subr.bf16.mxu0 0
        %4390 = vmatpush1.bf16.msra.mxu0 0
        %4391 = vmatprep.subr.bf16.mxu0 0
        %4392 = vmatpush1.bf16.msra.mxu0 0
        %4393 = vmatprep.subr.bf16.mxu0 0
        %4394 = vmatpush1.bf16.msra.mxu0 0
        %4395 = vmatprep.subr.bf16.mxu0 0
        %4396 = vmatpush1.bf16.msra.mxu0 0
        %4397 = vmatprep.subr.bf16.mxu0 0
        %4398 = vmatpush1.bf16.msra.mxu0 0
        %4399 = vmatprep.subr.bf16.mxu0 0
        %4400 = vmatpush1.bf16.msra.mxu0 0
        %4401 = vmatprep.subr.bf16.mxu0 0
        %4402 = vmatpush1.bf16.msra.mxu0 0
        %4403 = vmatprep.subr.bf16.mxu0 0
        %4404 = vmatpush1.bf16.msra.mxu0 0
        %4405 = vmatprep.subr.bf16.mxu0 0
        %4406 = vmatpush1.bf16.msra.mxu0 0
        %4407 = vmatprep.mubr.bf16.mxu0 0
        %4408 = vmatmul.mubr.bf16.gmra.mrb[0].mxu0 %v4370
        %v4409 = vpop.f32.mrb[0].mxu0
        %v4410 = vadd.f32 0.0, %v4409
        %v4411 = vpop.f32.mrb[0].mxu0
        %v4412 = vpop.f32.mrb[0].mxu0
        %v4413 = vadd.f32 0.0, %v4412
        %v4414 = vpop.f32.mrb[0].mxu0
        %4415 = vdwg.mxu0
        %v4417 = vsel %vm1836, %v4366, 0
        %v4420 = vsel %vm2814, %v1295, 0
        %4422 = vmatprep.subr.bf16.mxu0 0
        %4423 = vmatpush1.bf16.msra.mxu0 %v4420
        %4424 = vmatprep.subr.bf16.mxu0 0
        %4425 = vmatpush1.bf16.msra.mxu0 0
        %4426 = vmatprep.subr.bf16.mxu0 0
        %4427 = vmatpush1.bf16.msra.mxu0 0
        %4428 = vmatprep.subr.bf16.mxu0 0
        %4429 = vmatpush1.bf16.msra.mxu0 0
        %4430 = vmatprep.subr.bf16.mxu0 0
        %4431 = vmatpush1.bf16.msra.mxu0 0
        %4432 = vmatprep.subr.bf16.mxu0 0
        %4433 = vmatpush1.bf16.msra.mxu0 0
        %4434 = vmatprep.subr.bf16.mxu0 0
        %4435 = vmatpush1.bf16.msra.mxu0 0
        %4436 = vmatprep.subr.bf16.mxu0 0
        %4437 = vmatpush1.bf16.msra.mxu0 0
        %4438 = vmatprep.subr.bf16.mxu0 0
        %4439 = vmatpush1.bf16.msra.mxu0 0
        %4440 = vmatprep.subr.bf16.mxu0 0
        %4441 = vmatpush1.bf16.msra.mxu0 0
        %4442 = vmatprep.subr.bf16.mxu0 0
        %4443 = vmatpush1.bf16.msra.mxu0 0
        %4444 = vmatprep.subr.bf16.mxu0 0
        %4445 = vmatpush1.bf16.msra.mxu0 0
        %4446 = vmatprep.subr.bf16.mxu0 0
        %4447 = vmatpush1.bf16.msra.mxu0 0
        %4448 = vmatprep.subr.bf16.mxu0 0
        %4449 = vmatpush1.bf16.msra.mxu0 0
        %4450 = vmatprep.subr.bf16.mxu0 0
        %4451 = vmatpush1.bf16.msra.mxu0 0
        %4452 = vmatprep.subr.bf16.mxu0 0
        %4453 = vmatpush1.bf16.msra.mxu0 0
        %4454 = vmatprep.mubr.bf16.mxu0 0
        %4455 = vmatmul.mubr.bf16.gmra.mrb[0].mxu0 %v4417
        %v4456 = vpop.f32.mrb[0].mxu0
        %v4457 = vadd.f32 0.0, %v4456
        %v4458 = vpop.f32.mrb[0].mxu0
        %v4459 = vpop.f32.mrb[0].mxu0
        %v4460 = vadd.f32 0.0, %v4459
        %v4461 = vpop.f32.mrb[0].mxu0
        %4462 = vdwg.mxu0
        %v4464 = vsel %vm1836, %v4367, 0
        %v4467 = vsel %vm2814, %v1296, 0
        %4469 = vmatprep.subr.bf16.mxu0 0
        %4470 = vmatpush1.bf16.msra.mxu0 %v4467
        %4471 = vmatprep.subr.bf16.mxu0 0
        %4472 = vmatpush1.bf16.msra.mxu0 0
        %4473 = vmatprep.subr.bf16.mxu0 0
        %4474 = vmatpush1.bf16.msra.mxu0 0
        %4475 = vmatprep.subr.bf16.mxu0 0
        %4476 = vmatpush1.bf16.msra.mxu0 0
        %4477 = vmatprep.subr.bf16.mxu0 0
        %4478 = vmatpush1.bf16.msra.mxu0 0
        %4479 = vmatprep.subr.bf16.mxu0 0
        %4480 = vmatpush1.bf16.msra.mxu0 0
        %4481 = vmatprep.subr.bf16.mxu0 0
        %4482 = vmatpush1.bf16.msra.mxu0 0
        %4483 = vmatprep.subr.bf16.mxu0 0
        %4484 = vmatpush1.bf16.msra.mxu0 0
        %4485 = vmatprep.subr.bf16.mxu0 0
        %4486 = vmatpush1.bf16.msra.mxu0 0
        %4487 = vmatprep.subr.bf16.mxu0 0
        %4488 = vmatpush1.bf16.msra.mxu0 0
        %4489 = vmatprep.subr.bf16.mxu0 0
        %4490 = vmatpush1.bf16.msra.mxu0 0
        %4491 = vmatprep.subr.bf16.mxu0 0
        %4492 = vmatpush1.bf16.msra.mxu0 0
        %4493 = vmatprep.subr.bf16.mxu0 0
        %4494 = vmatpush1.bf16.msra.mxu0 0
        %4495 = vmatprep.subr.bf16.mxu0 0
        %4496 = vmatpush1.bf16.msra.mxu0 0
        %4497 = vmatprep.subr.bf16.mxu0 0
        %4498 = vmatpush1.bf16.msra.mxu0 0
        %4499 = vmatprep.subr.bf16.mxu0 0
        %4500 = vmatpush1.bf16.msra.mxu0 0
        %4501 = vmatprep.mubr.bf16.mxu0 0
        %4502 = vmatmul.mubr.bf16.gmra.mrb[0].mxu0 %v4464
        %v4503 = vpop.f32.mrb[0].mxu0
        %v4504 = vadd.f32 0.0, %v4503
        %v4505 = vpop.f32.mrb[0].mxu0
        %v4506 = vpop.f32.mrb[0].mxu0
        %v4507 = vadd.f32 0.0, %v4506
        %v4508 = vpop.f32.mrb[0].mxu0
        %4509 = vdwg.mxu0
        %v4511 = vsel %vm1836, %v4368, 0
        %v4514 = vsel %vm2814, %v1297, 0
        %4516 = vmatprep.subr.bf16.mxu0 0
        %4517 = vmatpush1.bf16.msra.mxu0 %v4514
        %4518 = vmatprep.subr.bf16.mxu0 0
        %4519 = vmatpush1.bf16.msra.mxu0 0
        %4520 = vmatprep.subr.bf16.mxu0 0
        %4521 = vmatpush1.bf16.msra.mxu0 0
        %4522 = vmatprep.subr.bf16.mxu0 0
        %4523 = vmatpush1.bf16.msra.mxu0 0
        %4524 = vmatprep.subr.bf16.mxu0 0
        %4525 = vmatpush1.bf16.msra.mxu0 0
        %4526 = vmatprep.subr.bf16.mxu0 0
        %4527 = vmatpush1.bf16.msra.mxu0 0
        %4528 = vmatprep.subr.bf16.mxu0 0
        %4529 = vmatpush1.bf16.msra.mxu0 0
        %4530 = vmatprep.subr.bf16.mxu0 0
        %4531 = vmatpush1.bf16.msra.mxu0 0
        %4532 = vmatprep.subr.bf16.mxu0 0
        %4533 = vmatpush1.bf16.msra.mxu0 0
        %4534 = vmatprep.subr.bf16.mxu0 0
        %4535 = vmatpush1.bf16.msra.mxu0 0
        %4536 = vmatprep.subr.bf16.mxu0 0
        %4537 = vmatpush1.bf16.msra.mxu0 0
        %4538 = vmatprep.subr.bf16.mxu0 0
        %4539 = vmatpush1.bf16.msra.mxu0 0
        %4540 = vmatprep.subr.bf16.mxu0 0
        %4541 = vmatpush1.bf16.msra.mxu0 0
        %4542 = vmatprep.subr.bf16.mxu0 0
        %4543 = vmatpush1.bf16.msra.mxu0 0
        %4544 = vmatprep.subr.bf16.mxu0 0
        %4545 = vmatpush1.bf16.msra.mxu0 0
        %4546 = vmatprep.subr.bf16.mxu0 0
        %4547 = vmatpush1.bf16.msra.mxu0 0
        %4548 = vmatprep.mubr.bf16.mxu0 0
        %4549 = vmatmul.mubr.bf16.gmra.mrb[0].mxu0 %v4511
        %v4550 = vpop.f32.mrb[0].mxu0
        %v4551 = vadd.f32 0.0, %v4550
        %v4552 = vpop.f32.mrb[0].mxu0
        %v4553 = vpop.f32.mrb[0].mxu0
        %v4554 = vadd.f32 0.0, %v4553
        %v4555 = vpop.f32.mrb[0].mxu0
        %4556 = vdwg.mxu0
        %v4557 = vsel %vm3328, %v4410, 0.0
        %v4558 = vsel %vm3328, %v4457, 0.0
        %v4559 = vadd.f32 %v4557, %v4558
        %v4560 = vsel %vm3328, %v4504, 0.0
        %v4561 = vadd.f32 %v4559, %v4560
        %v4562 = vsel %vm3328, %v4551, 0.0
        %v4563 = vadd.f32 %v4561, %v4562
        %v4564 = vsel %vm3328, %v4413, 0.0
        %v4565 = vsel %vm3328, %v4460, 0.0
        %v4566 = vadd.f32 %v4564, %v4565
        %v4567 = vsel %vm3328, %v4507, 0.0
        %v4568 = vadd.f32 %v4566, %v4567
        %v4569 = vsel %vm3328, %v4554, 0.0
        %v4570 = vadd.f32 %v4568, %v4569
        %v4572 = vlaneseq
        %v4573 = vshrl.u32 %v4572, 7
        %v4574 = vsub.s32 0, %v4573
        %v4575 = vrot.slane %v1298, %v4574
        %v4577 = vadd.f32 %v4563, %v4575
        %v4578 = vadd.f32 %v4570, %v4575
        %v4579 = vadd.f32 %v3749, %v4577
        %v4580 = vadd.f32 %v3752, %v4578
        %v4581 = vsel %vm3328, %v4579, 0.0
        %4582 = vadd.xlane.f32.xlu0 %v4581
        %v4583 = vpop.xlane.xlu0 %4582
        %v4584 = vsel %vm3328, %v4580, 0.0
        %4585 = vadd.xlane.f32.xlu0 %v4584
        %v4586 = vpop.xlane.xlu0 %4585
        %v4587 = vmul.f32 %v4583, %v3761
        %v4588 = vmul.f32 %v4586, %v3761
        %v4589 = vsub.f32 %v4579, %v4587
        %v4590 = vsub.f32 %v4580, %v4588
        %v4591 = vmul.f32 %v4589, %v4589
        %v4592 = vmul.f32 %v4590, %v4590
        %v4593 = vsel %vm3328, %v4591, 0.0
        %4594 = vadd.xlane.f32.xlu0 %v4593
        %v4595 = vpop.xlane.xlu0 %4594
        %v4596 = vsel %vm3328, %v4592, 0.0
        %4597 = vadd.xlane.f32.xlu0 %v4596
        %v4598 = vpop.xlane.xlu0 %4597
        %v4599 = vmul.f32 %v4595, %v3761
        %v4600 = vmul.f32 %v4598, %v3761
        %v4601 = vadd.f32 %v4599, 1e-05
        %v4602 = vadd.f32 %v4600, 1e-05
        %v4603 = vrsqrt.pop %v4601
        %v4604 = vrsqrt.pop %v4602
        %v4605 = vmul.f32 %v4589, %v4603
        %v4606 = vmul.f32 %v4590, %v4604
        %v4608 = vlaneseq
        %v4609 = vshrl.u32 %v4608, 7
        %v4610 = vsub.s32 0, %v4609
        %v4611 = vrot.slane %v1299, %v4610
        %v4613 = vmul.f32 %v4605, %v4611
        %v4614 = vmul.f32 %v4606, %v4611
        %v4616 = vlaneseq
        %v4617 = vshrl.u32 %v4616, 7
        %v4618 = vsub.s32 0, %v4617
        %v4619 = vrot.slane %v1300, %v4618
        %v4621 = vadd.f32 %v4613, %v4619
        %v4622 = vadd.f32 %v4614, %v4619
        %v4623 = vpack.c.bf16 %v4622, %v4621
        %v4625 = vlaneseq
        %v4626 = vshrl.u32 %v4625, 7
        %v4627 = vsub.s32 0, %v4626
        %v4628 = vrot.slane %v1305, %v4627
        %v4634 = vunpack.c.l.b16 %v1301
        %v4635 = vunpack.c.l.b16 %v1302
        %v4636 = vunpack.c.l.b16 %v1303
        %v4637 = vunpack.c.l.b16 %v1304
        %v4638 = vpack.c.b16 %v4635, %v4634
        %v4639 = vpack.c.b16 %v4637, %v4636
        %v4643 = vsel %vm3328, %v4623, 0
        %4645 = vmatprep.subr.bf16.mxu0 0
        %4646 = vmatpush1.bf16.msra.mxu0 %v4638
        %4647 = vmatprep.subr.bf16.mxu0 0
        %4648 = vmatpush1.bf16.msra.mxu0 %v4639
        %4649 = vmatprep.subr.bf16.mxu0 0
        %4650 = vmatpush1.bf16.msra.mxu0 0
        %4651 = vmatprep.subr.bf16.mxu0 0
        %4652 = vmatpush1.bf16.msra.mxu0 0
        %4653 = vmatprep.subr.bf16.mxu0 0
        %4654 = vmatpush1.bf16.msra.mxu0 0
        %4655 = vmatprep.subr.bf16.mxu0 0
        %4656 = vmatpush1.bf16.msra.mxu0 0
        %4657 = vmatprep.subr.bf16.mxu0 0
        %4658 = vmatpush1.bf16.msra.mxu0 0
        %4659 = vmatprep.subr.bf16.mxu0 0
        %4660 = vmatpush1.bf16.msra.mxu0 0
        %4661 = vmatprep.subr.bf16.mxu0 0
        %4662 = vmatpush1.bf16.msra.mxu0 0
        %4663 = vmatprep.subr.bf16.mxu0 0
        %4664 = vmatpush1.bf16.msra.mxu0 0
        %4665 = vmatprep.subr.bf16.mxu0 0
        %4666 = vmatpush1.bf16.msra.mxu0 0
        %4667 = vmatprep.subr.bf16.mxu0 0
        %4668 = vmatpush1.bf16.msra.mxu0 0
        %4669 = vmatprep.subr.bf16.mxu0 0
        %4670 = vmatpush1.bf16.msra.mxu0 0
        %4671 = vmatprep.subr.bf16.mxu0 0
        %4672 = vmatpush1.bf16.msra.mxu0 0
        %4673 = vmatprep.subr.bf16.mxu0 0
        %4674 = vmatpush1.bf16.msra.mxu0 0
        %4675 = vmatprep.subr.bf16.mxu0 0
        %4676 = vmatpush1.bf16.msra.mxu0 0
        %4677 = vmatprep.mubr.bf16.mxu0 0
        %4678 = vmatmul.mubr.bf16.gmra.mrb[0].mxu0 %v4643
        %v4679 = vpop.f32.mrb[0].mxu0
        %v4680 = vadd.f32 %v4628, %v4679
        %v4681 = vpop.f32.mrb[0].mxu0
        %v4682 = vpop.f32.mrb[0].mxu0
        %v4683 = vadd.f32 %v4628, %v4682
        %v4684 = vpop.f32.mrb[0].mxu0
        %4685 = vdwg.mxu0
        %v4686 = vmul.f32 %v4680, %v4680
        %v4687 = vmul.f32 %v4683, %v4683
        %v4688 = vmul.f32 %v4680, %v4686
        %v4689 = vmul.f32 %v4683, %v4687
        %v4690 = vmul.f32 %v4688, 0.044715
        %v4691 = vmul.f32 %v4689, 0.044715
        %v4692 = vadd.f32 %v4680, %v4690
        %v4693 = vadd.f32 %v4683, %v4691
        %v4694 = vmul.f32 %v4692, 0.7978846
        %v4695 = vmul.f32 %v4693, 0.7978846
        %v4696 = vtanh.pop %v4694
        %v4697 = vtanh.pop %v4695
        %v4698 = vadd.f32 %v4696, 1.0
        %v4699 = vadd.f32 %v4697, 1.0
        %v4700 = vmul.f32 %v4698, 0.5
        %v4701 = vmul.f32 %v4699, 0.5
        %v4702 = vmul.f32 %v4680, %v4700
        %v4703 = vmul.f32 %v4683, %v4701
        %v4704 = vpack.c.bf16 %v4703, %v4702
        %v4706 = vlaneseq
        %v4707 = vshrl.u32 %v4706, 7
        %v4708 = vsub.s32 0, %v4707
        %v4709 = vrot.slane %v1314, %v4708
        %v4719 = vunpack.c.l.b16 %v1306
        %v4720 = vunpack.c.l.b16 %v1307
        %v4721 = vunpack.c.l.b16 %v1308
        %v4722 = vunpack.c.l.b16 %v1309
        %v4723 = vunpack.c.l.b16 %v1310
        %v4724 = vunpack.c.l.b16 %v1311
        %v4725 = vunpack.c.l.b16 %v1312
        %v4726 = vunpack.c.l.b16 %v1313
        %v4727 = vpack.c.b16 %v4720, %v4719
        %v4728 = vpack.c.b16 %v4722, %v4721
        %v4729 = vpack.c.b16 %v4724, %v4723
        %v4730 = vpack.c.b16 %v4726, %v4725
        %v4736 = vsel %vm3535, %v4704, 0
        %4738 = vmatprep.subr.bf16.mxu0 0
        %4739 = vmatpush1.bf16.msra.mxu0 %v4727
        %4740 = vmatprep.subr.bf16.mxu0 0
        %4741 = vmatpush1.bf16.msra.mxu0 %v4728
        %4742 = vmatprep.subr.bf16.mxu0 0
        %4743 = vmatpush1.bf16.msra.mxu0 %v4729
        %4744 = vmatprep.subr.bf16.mxu0 0
        %4745 = vmatpush1.bf16.msra.mxu0 %v4730
        %4746 = vmatprep.subr.bf16.mxu0 0
        %4747 = vmatpush1.bf16.msra.mxu0 0
        %4748 = vmatprep.subr.bf16.mxu0 0
        %4749 = vmatpush1.bf16.msra.mxu0 0
        %4750 = vmatprep.subr.bf16.mxu0 0
        %4751 = vmatpush1.bf16.msra.mxu0 0
        %4752 = vmatprep.subr.bf16.mxu0 0
        %4753 = vmatpush1.bf16.msra.mxu0 0
        %4754 = vmatprep.subr.bf16.mxu0 0
        %4755 = vmatpush1.bf16.msra.mxu0 0
        %4756 = vmatprep.subr.bf16.mxu0 0
        %4757 = vmatpush1.bf16.msra.mxu0 0
        %4758 = vmatprep.subr.bf16.mxu0 0
        %4759 = vmatpush1.bf16.msra.mxu0 0
        %4760 = vmatprep.subr.bf16.mxu0 0
        %4761 = vmatpush1.bf16.msra.mxu0 0
        %4762 = vmatprep.subr.bf16.mxu0 0
        %4763 = vmatpush1.bf16.msra.mxu0 0
        %4764 = vmatprep.subr.bf16.mxu0 0
        %4765 = vmatpush1.bf16.msra.mxu0 0
        %4766 = vmatprep.subr.bf16.mxu0 0
        %4767 = vmatpush1.bf16.msra.mxu0 0
        %4768 = vmatprep.subr.bf16.mxu0 0
        %4769 = vmatpush1.bf16.msra.mxu0 0
        %4770 = vmatprep.mubr.bf16.mxu0 0
        %4771 = vmatmul.mubr.bf16.gmra.mrb[0].mxu0 %v4736
        %v4772 = vpop.f32.mrb[0].mxu0
        %v4773 = vadd.f32 %v4709, %v4772
        %v4774 = vpop.f32.mrb[0].mxu0
        %v4775 = vpop.f32.mrb[0].mxu0
        %v4776 = vadd.f32 %v4709, %v4775
        %v4777 = vpop.f32.mrb[0].mxu0
        %4778 = vdwg.mxu0
        %v4779 = vadd.f32 %v4579, %v4773
        %v4780 = vadd.f32 %v4580, %v4776
        %v4781 = vpack.c.bf16 %v4780, %v4779
        %v4783 = vlaneseq
        %v4784 = vshrl.u32 %v4783, 7
        %v4785 = vsub.s32 0, %v4784
        %v4786 = vrot.slane %v1319, %v4785
        %v4792 = vunpack.c.l.b16 %v1315
        %v4793 = vunpack.c.l.b16 %v1316
        %v4794 = vunpack.c.l.b16 %v1317
        %v4795 = vunpack.c.l.b16 %v1318
        %v4796 = vpack.c.b16 %v4793, %v4792
        %v4797 = vpack.c.b16 %v4795, %v4794
        %v4801 = vsel %vm3328, %v4781, 0
        %4803 = vmatprep.subr.bf16.mxu0 0
        %4804 = vmatpush1.bf16.msra.mxu0 %v4796
        %4805 = vmatprep.subr.bf16.mxu0 0
        %4806 = vmatpush1.bf16.msra.mxu0 %v4797
        %4807 = vmatprep.subr.bf16.mxu0 0
        %4808 = vmatpush1.bf16.msra.mxu0 0
        %4809 = vmatprep.subr.bf16.mxu0 0
        %4810 = vmatpush1.bf16.msra.mxu0 0
        %4811 = vmatprep.subr.bf16.mxu0 0
        %4812 = vmatpush1.bf16.msra.mxu0 0
        %4813 = vmatprep.subr.bf16.mxu0 0
        %4814 = vmatpush1.bf16.msra.mxu0 0
        %4815 = vmatprep.subr.bf16.mxu0 0
        %4816 = vmatpush1.bf16.msra.mxu0 0
        %4817 = vmatprep.subr.bf16.mxu0 0
        %4818 = vmatpush1.bf16.msra.mxu0 0
        %4819 = vmatprep.subr.bf16.mxu0 0
        %4820 = vmatpush1.bf16.msra.mxu0 0
        %4821 = vmatprep.subr.bf16.mxu0 0
        %4822 = vmatpush1.bf16.msra.mxu0 0
        %4823 = vmatprep.subr.bf16.mxu0 0
        %4824 = vmatpush1.bf16.msra.mxu0 0
        %4825 = vmatprep.subr.bf16.mxu0 0
        %4826 = vmatpush1.bf16.msra.mxu0 0
        %4827 = vmatprep.subr.bf16.mxu0 0
        %4828 = vmatpush1.bf16.msra.mxu0 0
        %4829 = vmatprep.subr.bf16.mxu0 0
        %4830 = vmatpush1.bf16.msra.mxu0 0
        %4831 = vmatprep.subr.bf16.mxu0 0
        %4832 = vmatpush1.bf16.msra.mxu0 0
        %4833 = vmatprep.subr.bf16.mxu0 0
        %4834 = vmatpush1.bf16.msra.mxu0 0
        %4835 = vmatprep.mubr.bf16.mxu0 0
        %4836 = vmatmul.mubr.bf16.gmra.mrb[0].mxu0 %v4801
        %v4837 = vpop.f32.mrb[0].mxu0
        %v4838 = vadd.f32 %v4786, %v4837
        %v4839 = vpop.f32.mrb[0].mxu0
        %v4840 = vpop.f32.mrb[0].mxu0
        %v4841 = vadd.f32 %v4786, %v4840
        %v4842 = vpop.f32.mrb[0].mxu0
        %4843 = vdwg.mxu0
        %4844 = vst [vmem:[%s1212] sm:$0xff] %v4838
        %4845 = vst [vmem:[%s1212 + $0x8] sm:$0xff] %v4841
        %s4846 = smul.u32 8, %s96
        %p4847 = scmp.lt.s32.totalorder %s4846, 15
        %s4848 = scalar_select %p4847, %s4846, 15
        %s4849 = smul.addr %s4848, 8
        %s4850 = scalar_lea.vmem %s79, %s4849
        %s4851 = sand.u32 %s954, 1
        %s4852 = scalar_lea.sflag [#allocation3], %s4851
        %s4853 = sand.u32 %s954, 1
        %s4854 = smul.addr %s4853, 16
        %s4855 = scalar_lea.vmem [#allocation2], %s4854
        // Predicated region
        $region177: #{swin_encoder_forward.1} parent=175 // pred_check
          %p4856 = pneg %p938
        $region178: #{swin_encoder_forward.1} parent=175 // pred_check_branch
          %4858 = sbr.rel (%p4856) target = $region180
        $region179: #{swin_encoder_forward.1} parent=175 // pred_region
          %s4859 = smul.u32 8, %s96
        $region180: #{swin_encoder_forward.1} parent=175 // pred_fallthru
          _
        // Predicated region
        $region181: #{swin_encoder_forward.1} parent=175 // pred_check
          %p4860 = pneg %p964
        $region182: #{swin_encoder_forward.1} parent=175 // pred_check_branch
          %4862 = sbr.rel (%p4860) target = $region184
        $region183: #{swin_encoder_forward.1} parent=175 // pred_region
          %s4863 = smul.u32 2, %s96
          %s4865 = ssub.s32 256, 256
          %4866 = vsyncadd %s4852, %s4865
          %s4867 = smul.addr %s4863, 128
          %s4868 = scalar_lea.hbm %s81, %s4867
          %s4869 = sshll.u32 %s4855, 4
          %s4870 = int_to_ptr.vmem [resolvable:$true] %s4869
          %4875 = dma.vmem_to_hbm [thread:$0]  %s4870, 256, %s4868, %s4852, 128, 128, 8
        $region184: #{swin_encoder_forward.1} parent=175 // pred_fallthru
          _
      $region176: #{swin_encoder_forward.1} parent=5 // pred_fallthru
        _
      %p4876 = scmp.le.s32.totalorder 2, %s91
      // Predicated region
      $region185: #{swin_encoder_forward.1} parent=5 // pred_check
        %p4877 = pneg %p4876
      $region186: #{swin_encoder_forward.1} parent=5 // pred_check_branch
        %4879 = sbr.rel (%p4877) target = $region188
      $region187: #{swin_encoder_forward.1} parent=5 // pred_region
        %s4880 = ssub.s32 %s91, 2
        // Predicated region
        $region189: #{swin_encoder_forward.1} parent=187 // pred_check
          %p4881 = pneg %p944
        $region190: #{swin_encoder_forward.1} parent=187 // pred_check_branch
          %4883 = sbr.rel (%p4881) target = $region192
        $region191: #{swin_encoder_forward.1} parent=187 // pred_region
          %s4884 = smul.u32 8, %s97
          %p4885 = scmp.lt.s32.totalorder %s4884, 15
          %s4886 = scalar_select %p4885, %s4884, 15
          %s4887 = smul.addr %s4886, 8
          %s4888 = scalar_lea.vmem %s79, %s4887
        $region192: #{swin_encoder_forward.1} parent=187 // pred_fallthru
          _
        // Predicated region
        $region193: #{swin_encoder_forward.1} parent=187 // pred_check
          %p4889 = pneg %p970
        $region194: #{swin_encoder_forward.1} parent=187 // pred_check_branch
          %4891 = sbr.rel (%p4889) target = $region196
        $region195: #{swin_encoder_forward.1} parent=187 // pred_region
          %s4892 = sand.u32 %s955, 1
          %s4893 = scalar_lea.sflag [#allocation3], %s4892
          %s4894 = sand.u32 %s955, 1
          %s4895 = smul.addr %s4894, 16
          %s4896 = scalar_lea.vmem [#allocation2], %s4895
          %4897 = dma.done %s4893, 256
        $region196: #{swin_encoder_forward.1} parent=187 // pred_fallthru
          _
      $region188: #{swin_encoder_forward.1} parent=5 // pred_fallthru
        _
    $region6: #{swin_encoder_forward.1} parent=1 // loop_footer
      %s95 = sadd.s32 1, %s91
    $region7: #{swin_encoder_forward.1} parent=1 // loop_footer_branch
      %90 = sbr.rel target = $region3
    $region8: #{swin_encoder_forward.1} parent=1 // loop_exit
      _
    %4898 = vsyncpa [#allocation3], 1
    %s4899 = scalar_lea.sflag [#allocation3], 1
    %4900 = vsyncpa %s4899, 1

</llo_original>
